<compile_context>
chip_gen: v5e
topology: v5e:2x2
jax: 0.10.0
libtpu: 0.0.40
codegen_flags: <defaults>
</compile_context>

<pallas_src>
import jax
import jax.numpy as jnp
from jax.experimental import pallas as pl
from jax.experimental.pallas import tpu as pltpu


# ----------------------------------------------------------------------------
# Host-side weight preprocessing.
#
# Fold channel mixing + the D1 (sublane) taps of a 4-D conv into one
# (Co*D1, Ci*D1) matrix per remaining (D2,D3,D4) tap, and stack all taps along
# the output-row axis -> a single (T*Co*D1, Ci*D1) matrix per conv.
# ----------------------------------------------------------------------------
def _conv_tap_matrices(w, padding, d1):
    co, ci, k1, k2, k3, k4 = w.shape
    p1, p2, p3, p4 = padding
    taps, mats = [], []
    for t2 in range(k2):
        for t3 in range(k3):
            for t4 in range(k4):
                g = jnp.zeros((co * d1, ci * d1), jnp.float32)
                for t1 in range(k1):
                    # shift[m1, m1'] = 1  iff  m1' = m1 + (t1 - p1), in range
                    shift = jnp.eye(d1, k=t1 - p1, dtype=jnp.float32)
                    g = g + jnp.kron(w[:, :, t1, t2, t3, t4].astype(jnp.float32),
                                     shift)
                taps.append((t2 - p2, t3 - p3, t4 - p4))
                mats.append(g)
    return taps, jnp.concatenate(mats, axis=0)  # (T*Co*d1, Ci*d1)


def _tap_masks(taps, dims, reps):
    """Per-tap boundary masks, precomputed host-side: (T, reps*D2*D3*D4)."""
    _, d2, d3, d4 = dims
    L = d2 * d3 * d4
    pos = jnp.arange(L)
    i2, i3, i4 = pos // (d3 * d4), (pos // d4) % d3, pos % d4
    rows = []
    for (o2, o3, o4) in taps:
        ok = ((i2 + o2 >= 0) & (i2 + o2 < d2) &
              (i3 + o3 >= 0) & (i3 + o3 < d3) &
              (i4 + o4 >= 0) & (i4 + o4 < d4))
        rows.append(ok.astype(jnp.float32))
    m = jnp.stack(rows)                      # (T, L)
    return jnp.tile(m, (1, reps))            # (T, reps*L)


# ----------------------------------------------------------------------------
# Fused kernel: one grid step = (one batch group, one layer)
# ----------------------------------------------------------------------------
def _make_kernel(taps_g, taps_1, taps_2, dims, W, r, mxu_dtype):
    d1, d2, d3, d4 = dims

    def reduce_taps(y_full, taps, mask_ref):
        # y_full: (T*r, W) f32 matmul result on the UNSHIFTED input.
        # Per tap: roll + mask the 24-row slice; reduce with 4 independent
        # accumulators (tree add) to avoid one long serial VPU chain.
        accs = [None, None, None, None]
        for j, off in enumerate(taps):
            yj = y_full[j * r:(j + 1) * r, :]          # sublane-aligned slice
            s = off[0] * (d3 * d4) + off[1] * d4 + off[2]
            if s != 0:
                yj = pltpu.roll(yj, shift=(-s) % W, axis=1)
            if off != (0, 0, 0):
                yj = yj * mask_ref[j:j + 1, :]         # (1, W) lane mask
            k = j % 4
            accs[k] = yj if accs[k] is None else accs[k] + yj
        live = [a for a in accs if a is not None]
        while len(live) > 1:
            nxt = [live[i] + live[i + 1] for i in range(0, len(live) - 1, 2)]
            if len(live) % 2:
                nxt.append(live[-1])
            live = nxt
        return live[0]

    def kernel(x_ref, bnd_ref, mg_ref, m1_ref, m2_ref,
               gg_ref, bg_ref, g1_ref, b1_ref, g2_ref, b2_ref,
               o_ref, cat_ref, z_ref):
        layer = pl.program_id(1)

        # `out` is carried in the resident output block across the layer axis
        # (same output block index every layer step -> accumulator pattern).
        @pl.when(layer == 0)
        def _():
            cat_ref[0:r, :] = x_ref[0]
            cat_ref[r:2 * r, :] = bnd_ref[0]   # boundary written once per group

        @pl.when(layer > 0)
        def _():
            cat_ref[0:r, :] = o_ref[0]

        cat = cat_ref[...]                     # (2r, W) = [out ; boundary]
        cur = cat[0:r, :]                      # current `out`

        # gather: one (27r, 2r) @ (2r, W) matmul, then roll/mask/sum the taps.
        yg = jnp.dot(gg_ref[0], cat.astype(mxu_dtype),
                     preferred_element_type=jnp.float32)
        t1 = reduce_taps(yg, taps_g, mg_ref) + bg_ref[0]

        # convs1: (9r, r) @ (r, W)
        y1 = jnp.dot(g1_ref[0], t1.astype(mxu_dtype),
                     preferred_element_type=jnp.float32)
        t2 = reduce_taps(y1, taps_1, m1_ref) + b1_ref[0]

        # convs2 + decent, fused along the contraction axis: (3r, 2r) @ (2r, W)
        z_ref[0:r, :] = t2
        z_ref[r:2 * r, :] = cur
        y2 = jnp.dot(g2_ref[0], z_ref[...].astype(mxu_dtype),
                     preferred_element_type=jnp.float32)
        o_ref[0] = reduce_taps(y2, taps_2, m2_ref) + b2_ref[0]

    return kernel


# ----------------------------------------------------------------------------
# Forward pass (whole network = one pallas_call)
# ----------------------------------------------------------------------------
def cnn4d_forward_pallas(f, boundary, params, *, batch_groups=None,
                         mxu_dtype=jnp.bfloat16):
    n, c, d1, d2, d3, d4 = f.shape
    L = d2 * d3 * d4
    layers = len(params)
    r = c * d1                    # rows of the state (24)

    if batch_groups is None:
        batch_groups = min(n, 2)  # feed 2 TCs on v7x; use 1 on v5e/v6e
    assert n % batch_groups == 0
    bpg = n // batch_groups       # batch elements folded into the lane axis
    W = bpg * L

    def expand_bias(b):
        return jnp.repeat(b.astype(jnp.float32), d1).reshape(r, 1)

    gW, gB, w1s, b1s, w2s, b2s = ([] for _ in range(6))
    taps_g = taps_1 = taps_2 = None
    for (gw_, gb_), (c1w_, c1b_), (c2w_, c2b_), (dw_, db_) in params:
        taps_g, gg = _conv_tap_matrices(gw_, (1, 1, 1, 1), d1)    # (27r, 2r)
        taps_1, g1 = _conv_tap_matrices(c1w_, (1, 1, 1, 0), d1)   # (9r, r)
        taps_2, g2 = _conv_tap_matrices(c2w_, (0, 0, 0, 1), d1)   # (3r, r)
        _, gd = _conv_tap_matrices(dw_, (0, 0, 0, 0), d1)         # (r, r)
        # fuse decent into convs2's zero-offset tap along the contraction axis
        g2d = jnp.zeros((len(taps_2) * r, 2 * r), jnp.float32)
        g2d = g2d.at[:, :r].set(g2)
        ctr = taps_2.index((0, 0, 0))
        g2d = g2d.at[ctr * r:(ctr + 1) * r, r:].set(gd)

        gW.append(gg); w1s.append(g1); w2s.append(g2d)
        gB.append(expand_bias(gb_))
        b1s.append(expand_bias(c1b_))
        b2s.append(expand_bias(c2b_) + expand_bias(db_))

    gW = jnp.stack(gW).astype(mxu_dtype)      # (layers, 27r, 2r)
    w1s = jnp.stack(w1s).astype(mxu_dtype)    # (layers,  9r,  r)
    w2s = jnp.stack(w2s).astype(mxu_dtype)    # (layers,  3r, 2r)
    gB, b1s, b2s = map(jnp.stack, (gB, b1s, b2s))   # (layers, r, 1) f32 each

    mg = _tap_masks(taps_g, (d1, d2, d3, d4), bpg)  # (27, W) f32
    m1 = _tap_masks(taps_1, (d1, d2, d3, d4), bpg)  # ( 9, W)
    m2 = _tap_masks(taps_2, (d1, d2, d3, d4), bpg)  # ( 3, W)

    def to_lane_layout(a):       # (n, r, L) -> (groups, r, bpg*L)
        return (a.reshape(batch_groups, bpg, r, L)
                 .transpose(0, 2, 1, 3)
                 .reshape(batch_groups, r, W)
                 .astype(jnp.float32))

    x = to_lane_layout(f.reshape(n, r, L))
    bnd = to_lane_layout(boundary.reshape(n, r, L))

    kernel = _make_kernel(taps_g, taps_1, taps_2, (d1, d2, d3, d4),
                          W, r, mxu_dtype)

    act_spec = pl.BlockSpec((1, r, W), lambda g, l: (g, 0, 0))

    def wspec(m, k):
        return pl.BlockSpec((1, m, k), lambda g, l: (l, 0, 0))

    def bspec():
        return pl.BlockSpec((1, r, 1), lambda g, l: (l, 0, 0))

    def mspec(t):
        return pl.BlockSpec((t, W), lambda g, l: (0, 0))

    out = pl.pallas_call(
        kernel,
        out_shape=jax.ShapeDtypeStruct((batch_groups, r, W), jnp.float32),
        grid_spec=pltpu.PrefetchScalarGridSpec(
            num_scalar_prefetch=0,
            grid=(batch_groups, layers),
            in_specs=[
                act_spec, act_spec,
                mspec(len(taps_g)), mspec(len(taps_1)), mspec(len(taps_2)),
                wspec(gW.shape[1], gW.shape[2]), bspec(),
                wspec(w1s.shape[1], w1s.shape[2]), bspec(),
                wspec(w2s.shape[1], w2s.shape[2]), bspec(),
            ],
            out_specs=act_spec,
            scratch_shapes=[pltpu.VMEM((2 * r, W), jnp.float32),   # [out;bnd]
                            pltpu.VMEM((2 * r, W), jnp.float32)],  # [t2;out]
        ),
        compiler_params=pltpu.CompilerParams(
            dimension_semantics=("parallel", "arbitrary")),
    )(x, bnd, mg, m1, m2, gW, gB, w1s, b1s, w2s, b2s)

    out = (out.reshape(batch_groups, r, bpg, L)
              .transpose(0, 2, 1, 3)
              .reshape(n, c, d1, d2, d3, d4))
    return out


# ----------------------------------------------------------------------------
# Pure-JAX reference (direct 4-D conv) for correctness checking
# ----------------------------------------------------------------------------
def _conv4d_ref(x, w, b, padding):
    n, ci, d1, d2, d3, d4 = x.shape
    co = w.shape[0]
    k1, k2, k3, k4 = w.shape[2:]
    p1, p2, p3, p4 = padding
    xp = jnp.pad(x, ((0, 0), (0, 0), (p1, p1), (p2, p2), (p3, p3), (p4, p4)))
    out = jnp.broadcast_to(b.reshape(1, co, 1, 1, 1, 1),
                           (n, co, d1, d2, d3, d4)).astype(jnp.float32)
    for t1 in range(k1):
        for t2 in range(k2):
            for t3 in range(k3):
                for t4 in range(k4):
                    patch = xp[:, :, t1:t1 + d1, t2:t2 + d2,
                               t3:t3 + d3, t4:t4 + d4]
                    out = out + jnp.einsum(
                        'ncdefg,oc->nodefg', patch, w[:, :, t1, t2, t3, t4],
                        precision=jax.lax.Precision.HIGHEST)
    return out


def _forward_ref(f, boundary, params):
    out = f
    for (gw, gb), (c1w, c1b), (c2w, c2b), (dw, db_) in params:
        t = jnp.concatenate([out, boundary], axis=1)
        t = _conv4d_ref(t, gw, gb, (1, 1, 1, 1))
        t = _conv4d_ref(t, c1w, c1b, (1, 1, 1, 0))
        out = (_conv4d_ref(t, c2w, c2b, (0, 0, 0, 1))
               + _conv4d_ref(out, dw, db_, (0, 0, 0, 0)))
    return out


# ----------------------------------------------------------------------------
# Parameter init (PyTorch-style uniform +/- 1/sqrt(fan_in))
# ----------------------------------------------------------------------------
def init_params(key, layers):
    def mk(k, shape):
        fan_in = shape[1] * shape[2] * shape[3] * shape[4] * shape[5]
        bound = 1.0 / float(fan_in) ** 0.5
        kw, kb = jax.random.split(k)
        w = jax.random.uniform(kw, shape, jnp.float32, -bound, bound)
        b = jax.random.uniform(kb, (shape[0],), jnp.float32, -bound, bound)
        return w, b

    params = []
    for i in range(layers):
        ks = jax.random.split(jax.random.fold_in(key, i), 4)
        gather = mk(ks[0], (3, 6, 3, 3, 3, 3))
        conv1 = mk(ks[1], (3, 3, 3, 3, 3, 1))
        conv2 = mk(ks[2], (3, 3, 1, 1, 1, 3))
        decent = mk(ks[3], (3, 3, 1, 1, 1, 1))
        params.append((gather, conv1, conv2, decent))
    return params


if __name__ == "__main__":
    key = jax.random.PRNGKey(0)
    layers = 2
    N, C, D = 2, 3, 8  # spatial grid 8x8x8x8

    kf, kb, kp = jax.random.split(key, 3)
    f = jax.random.normal(kf, (N, C, D, D, D, D), jnp.float32)
    boundary = jax.random.normal(kb, (N, C, D, D, D, D), jnp.float32)
    params = init_params(kp, layers)

    out = jax.block_until_ready(jax.jit(cnn4d_forward_pallas)(f, boundary, params))
    ref = jax.block_until_ready(jax.jit(_forward_ref)(f, boundary, params))

    assert out.shape == (N, C, D, D, D, D)
    max_err = float(jnp.max(jnp.abs(out - ref)))
    assert jnp.allclose(out, ref, atol=2e-2, rtol=2e-2), (
        f"mismatch vs reference (max abs err {max_err})")

    print("KERNEL_OK")
</pallas_src>

<mosaic_0001>
module attributes {stable_mosaic.version = 11 : i64} {
  func.func @kernel(%arg0: i32, %arg1: i32, %arg2: memref<1x24x512xf32, #tpu.memory_space<vmem>>, %arg3: memref<1x24x512xf32, #tpu.memory_space<vmem>>, %arg4: memref<27x512xf32, #tpu.memory_space<vmem>>, %arg5: memref<9x512xf32, #tpu.memory_space<vmem>>, %arg6: memref<3x512xf32, #tpu.memory_space<vmem>>, %arg7: memref<1x648x48xbf16, #tpu.memory_space<vmem>>, %arg8: memref<1x24x1xf32, #tpu.memory_space<vmem>>, %arg9: memref<1x216x24xbf16, #tpu.memory_space<vmem>>, %arg10: memref<1x24x1xf32, #tpu.memory_space<vmem>>, %arg11: memref<1x72x48xbf16, #tpu.memory_space<vmem>>, %arg12: memref<1x24x1xf32, #tpu.memory_space<vmem>>, %arg13: memref<1x24x512xf32, #tpu.memory_space<vmem>>, %arg14: memref<48x512xf32, #tpu.memory_space<vmem>>, %arg15: memref<48x512xf32, #tpu.memory_space<vmem>>) attributes {dimension_semantics = [#tpu.dimension_semantics<parallel>, #tpu.dimension_semantics<arbitrary>], iteration_bounds = array<i64: 2, 2>, scalar_prefetch = 0 : i64, scratch_operands = 2 : i64, tpu.core_type = #tpu.core_type<tc>, window_params = [{transform_indices = @transform_0, window_bounds = array<i64: 1, 24, 512>}, {transform_indices = @transform_1, window_bounds = array<i64: 1, 24, 512>}, {pipeline_mode = #tpu.pipeline_mode<synchronous>, transform_indices = @transform_2, window_bounds = array<i64: 27, 512>}, {pipeline_mode = #tpu.pipeline_mode<synchronous>, transform_indices = @transform_3, window_bounds = array<i64: 9, 512>}, {pipeline_mode = #tpu.pipeline_mode<synchronous>, transform_indices = @transform_4, window_bounds = array<i64: 3, 512>}, {transform_indices = @transform_5, window_bounds = array<i64: 1, 648, 48>}, {transform_indices = @transform_6, window_bounds = array<i64: 1, 24, 1>}, {transform_indices = @transform_7, window_bounds = array<i64: 1, 216, 24>}, {transform_indices = @transform_8, window_bounds = array<i64: 1, 24, 1>}, {transform_indices = @transform_9, window_bounds = array<i64: 1, 72, 48>}, {transform_indices = @transform_10, window_bounds = array<i64: 1, 24, 1>}, {transform_indices = @transform_11, window_bounds = array<i64: 1, 24, 512>}]} {
    %c0_i32 = arith.constant 0 : i32
    %0 = arith.cmpi eq, %arg1, %c0_i32 : i32
    %1 = arith.extui %0 : i1 to i32
    %c0_i32_0 = arith.constant 0 : i32
    %2 = arith.cmpi ne, %1, %c0_i32_0 : i32
    scf.if %2 {
      %c0_90 = arith.constant 0 : index
      %c0_91 = arith.constant 0 : index
      %c0_92 = arith.constant 0 : index
      %257 = vector.load %arg2[%c0_90, %c0_91, %c0_92] : memref<1x24x512xf32, #tpu.memory_space<vmem>>, vector<1x24x512xf32>
      %258 = vector.shape_cast %257 : vector<1x24x512xf32> to vector<24x512xf32>
      %c0_93 = arith.constant 0 : index
      %c0_94 = arith.constant 0 : index
      %259 = vector.load %arg14[%c0_93, %c0_94] : memref<48x512xf32, #tpu.memory_space<vmem>>, vector<24x512xf32>
      tpu.vector_store %arg14[%c0_93, %c0_94], %258 {strides = array<i32>} : memref<48x512xf32, #tpu.memory_space<vmem>>, vector<24x512xf32>,
      %c0_95 = arith.constant 0 : index
      %c0_96 = arith.constant 0 : index
      %c0_97 = arith.constant 0 : index
      %260 = vector.load %arg3[%c0_95, %c0_96, %c0_97] : memref<1x24x512xf32, #tpu.memory_space<vmem>>, vector<1x24x512xf32>
      %261 = vector.shape_cast %260 : vector<1x24x512xf32> to vector<24x512xf32>
      %c24_98 = arith.constant 24 : index
      %c0_99 = arith.constant 0 : index
      %262 = vector.load %arg14[%c24_98, %c0_99] : memref<48x512xf32, #tpu.memory_space<vmem>>, vector<24x512xf32>
      tpu.vector_store %arg14[%c24_98, %c0_99], %261 {strides = array<i32>} : memref<48x512xf32, #tpu.memory_space<vmem>>, vector<24x512xf32>,
    } else {
    }
    %c0_i32_1 = arith.constant 0 : i32
    %3 = arith.cmpi sgt, %arg1, %c0_i32_1 : i32
    %4 = arith.extui %3 : i1 to i32
    %c0_i32_2 = arith.constant 0 : i32
    %5 = arith.cmpi ne, %4, %c0_i32_2 : i32
    scf.if %5 {
      %c0_90 = arith.constant 0 : index
      %c0_91 = arith.constant 0 : index
      %c0_92 = arith.constant 0 : index
      %257 = vector.load %arg13[%c0_90, %c0_91, %c0_92] : memref<1x24x512xf32, #tpu.memory_space<vmem>>, vector<1x24x512xf32>
      %258 = vector.shape_cast %257 : vector<1x24x512xf32> to vector<24x512xf32>
      %c0_93 = arith.constant 0 : index
      %c0_94 = arith.constant 0 : index
      %259 = vector.load %arg14[%c0_93, %c0_94] : memref<48x512xf32, #tpu.memory_space<vmem>>, vector<24x512xf32>
      tpu.vector_store %arg14[%c0_93, %c0_94], %258 {strides = array<i32>} : memref<48x512xf32, #tpu.memory_space<vmem>>, vector<24x512xf32>,
    } else {
    }
    %c0 = arith.constant 0 : index
    %c0_3 = arith.constant 0 : index
    %6 = vector.load %arg14[%c0, %c0_3] : memref<48x512xf32, #tpu.memory_space<vmem>>, vector<48x512xf32>
    %7 = vector.extract_strided_slice %6 {offsets = [0, 0], sizes = [24, 512], strides = [1, 1]} : vector<48x512xf32> to vector<24x512xf32>
    %c0_4 = arith.constant 0 : index
    %c0_5 = arith.constant 0 : index
    %c0_6 = arith.constant 0 : index
    %8 = vector.load %arg7[%c0_4, %c0_5, %c0_6] : memref<1x648x48xbf16, #tpu.memory_space<vmem>>, vector<1x648x48xbf16>
    %9 = vector.shape_cast %8 : vector<1x648x48xbf16> to vector<648x48xbf16>
    %10 = arith.truncf %6 : vector<48x512xf32> to vector<48x512xbf16>
    %cst = arith.constant dense<0.000000e+00> : vector<648x512xf32>
    %11 = tpu.matmul %9, %10, %cst {dimension_numbers = #tpu.dot_dimension_numbers<[1], [0], [0], [1], [0, 0, 1, 1], [], []>} : vector<648x48xbf16>, vector<48x512xbf16>, vector<648x512xf32> -> vector<648x512xf32>
    %12 = vector.extract_strided_slice %11 {offsets = [0, 0], sizes = [24, 512], strides = [1, 1]} : vector<648x512xf32> to vector<24x512xf32>
    %c73_i32 = arith.constant 73 : i32
    %13 = tpu.dynamic_rotate %12 by %c73_i32 dim 1 : vector<24x512xf32>, i32 -> vector<24x512xf32>
    %c0_7 = arith.constant 0 : index
    %c0_8 = arith.constant 0 : index
    %14 = vector.load %arg4[%c0_7, %c0_8] : memref<27x512xf32, #tpu.memory_space<vmem>>, vector<1x512xf32>
    %15 = vector.broadcast %14 : vector<1x512xf32> to vector<24x512xf32>
    %16 = arith.mulf %13, %15 : vector<24x512xf32>
    %17 = vector.extract_strided_slice %11 {offsets = [24, 0], sizes = [24, 512], strides = [1, 1]} : vector<648x512xf32> to vector<24x512xf32>
    %c72_i32 = arith.constant 72 : i32
    %18 = tpu.dynamic_rotate %17 by %c72_i32 dim 1 : vector<24x512xf32>, i32 -> vector<24x512xf32>
    %c1 = arith.constant 1 : index
    %c0_9 = arith.constant 0 : index
    %19 = vector.load %arg4[%c1, %c0_9] : memref<27x512xf32, #tpu.memory_space<vmem>>, vector<1x512xf32>
    %20 = vector.broadcast %19 : vector<1x512xf32> to vector<24x512xf32>
    %21 = arith.mulf %18, %20 : vector<24x512xf32>
    %22 = vector.extract_strided_slice %11 {offsets = [48, 0], sizes = [24, 512], strides = [1, 1]} : vector<648x512xf32> to vector<24x512xf32>
    %c71_i32 = arith.constant 71 : i32
    %23 = tpu.dynamic_rotate %22 by %c71_i32 dim 1 : vector<24x512xf32>, i32 -> vector<24x512xf32>
    %c2 = arith.constant 2 : index
    %c0_10 = arith.constant 0 : index
    %24 = vector.load %arg4[%c2, %c0_10] : memref<27x512xf32, #tpu.memory_space<vmem>>, vector<1x512xf32>
    %25 = vector.broadcast %24 : vector<1x512xf32> to vector<24x512xf32>
    %26 = arith.mulf %23, %25 : vector<24x512xf32>
    %27 = vector.extract_strided_slice %11 {offsets = [72, 0], sizes = [24, 512], strides = [1, 1]} : vector<648x512xf32> to vector<24x512xf32>
    %c65_i32 = arith.constant 65 : i32
    %28 = tpu.dynamic_rotate %27 by %c65_i32 dim 1 : vector<24x512xf32>, i32 -> vector<24x512xf32>
    %c3 = arith.constant 3 : index
    %c0_11 = arith.constant 0 : index
    %29 = vector.load %arg4[%c3, %c0_11] : memref<27x512xf32, #tpu.memory_space<vmem>>, vector<1x512xf32>
    %30 = vector.broadcast %29 : vector<1x512xf32> to vector<24x512xf32>
    %31 = arith.mulf %28, %30 : vector<24x512xf32>
    %32 = vector.extract_strided_slice %11 {offsets = [96, 0], sizes = [24, 512], strides = [1, 1]} : vector<648x512xf32> to vector<24x512xf32>
    %c64_i32 = arith.constant 64 : i32
    %33 = tpu.dynamic_rotate %32 by %c64_i32 dim 1 : vector<24x512xf32>, i32 -> vector<24x512xf32>
    %c4 = arith.constant 4 : index
    %c0_12 = arith.constant 0 : index
    %34 = vector.load %arg4[%c4, %c0_12] : memref<27x512xf32, #tpu.memory_space<vmem>>, vector<1x512xf32>
    %35 = vector.broadcast %34 : vector<1x512xf32> to vector<24x512xf32>
    %36 = arith.mulf %33, %35 : vector<24x512xf32>
    %37 = arith.addf %16, %36 : vector<24x512xf32>
    %38 = vector.extract_strided_slice %11 {offsets = [120, 0], sizes = [24, 512], strides = [1, 1]} : vector<648x512xf32> to vector<24x512xf32>
    %c63_i32 = arith.constant 63 : i32
    %39 = tpu.dynamic_rotate %38 by %c63_i32 dim 1 : vector<24x512xf32>, i32 -> vector<24x512xf32>
    %c5 = arith.constant 5 : index
    %c0_13 = arith.constant 0 : index
    %40 = vector.load %arg4[%c5, %c0_13] : memref<27x512xf32, #tpu.memory_space<vmem>>, vector<1x512xf32>
    %41 = vector.broadcast %40 : vector<1x512xf32> to vector<24x512xf32>
    %42 = arith.mulf %39, %41 : vector<24x512xf32>
    %43 = arith.addf %21, %42 : vector<24x512xf32>
    %44 = vector.extract_strided_slice %11 {offsets = [144, 0], sizes = [24, 512], strides = [1, 1]} : vector<648x512xf32> to vector<24x512xf32>
    %c57_i32 = arith.constant 57 : i32
    %45 = tpu.dynamic_rotate %44 by %c57_i32 dim 1 : vector<24x512xf32>, i32 -> vector<24x512xf32>
    %c6 = arith.constant 6 : index
    %c0_14 = arith.constant 0 : index
    %46 = vector.load %arg4[%c6, %c0_14] : memref<27x512xf32, #tpu.memory_space<vmem>>, vector<1x512xf32>
    %47 = vector.broadcast %46 : vector<1x512xf32> to vector<24x512xf32>
    %48 = arith.mulf %45, %47 : vector<24x512xf32>
    %49 = arith.addf %26, %48 : vector<24x512xf32>
    %50 = vector.extract_strided_slice %11 {offsets = [168, 0], sizes = [24, 512], strides = [1, 1]} : vector<648x512xf32> to vector<24x512xf32>
    %c56_i32 = arith.constant 56 : i32
    %51 = tpu.dynamic_rotate %50 by %c56_i32 dim 1 : vector<24x512xf32>, i32 -> vector<24x512xf32>
    %c7 = arith.constant 7 : index
    %c0_15 = arith.constant 0 : index
    %52 = vector.load %arg4[%c7, %c0_15] : memref<27x512xf32, #tpu.memory_space<vmem>>, vector<1x512xf32>
    %53 = vector.broadcast %52 : vector<1x512xf32> to vector<24x512xf32>
    %54 = arith.mulf %51, %53 : vector<24x512xf32>
    %55 = arith.addf %31, %54 : vector<24x512xf32>
    %56 = vector.extract_strided_slice %11 {offsets = [192, 0], sizes = [24, 512], strides = [1, 1]} : vector<648x512xf32> to vector<24x512xf32>
    %c55_i32 = arith.constant 55 : i32
    %57 = tpu.dynamic_rotate %56 by %c55_i32 dim 1 : vector<24x512xf32>, i32 -> vector<24x512xf32>
    %c8 = arith.constant 8 : index
    %c0_16 = arith.constant 0 : index
    %58 = vector.load %arg4[%c8, %c0_16] : memref<27x512xf32, #tpu.memory_space<vmem>>, vector<1x512xf32>
    %59 = vector.broadcast %58 : vector<1x512xf32> to vector<24x512xf32>
    %60 = arith.mulf %57, %59 : vector<24x512xf32>
    %61 = arith.addf %37, %60 : vector<24x512xf32>
    %62 = vector.extract_strided_slice %11 {offsets = [216, 0], sizes = [24, 512], strides = [1, 1]} : vector<648x512xf32> to vector<24x512xf32>
    %c9_i32 = arith.constant 9 : i32
    %63 = tpu.dynamic_rotate %62 by %c9_i32 dim 1 : vector<24x512xf32>, i32 -> vector<24x512xf32>
    %c9 = arith.constant 9 : index
    %c0_17 = arith.constant 0 : index
    %64 = vector.load %arg4[%c9, %c0_17] : memref<27x512xf32, #tpu.memory_space<vmem>>, vector<1x512xf32>
    %65 = vector.broadcast %64 : vector<1x512xf32> to vector<24x512xf32>
    %66 = arith.mulf %63, %65 : vector<24x512xf32>
    %67 = arith.addf %43, %66 : vector<24x512xf32>
    %68 = vector.extract_strided_slice %11 {offsets = [240, 0], sizes = [24, 512], strides = [1, 1]} : vector<648x512xf32> to vector<24x512xf32>
    %c8_i32 = arith.constant 8 : i32
    %69 = tpu.dynamic_rotate %68 by %c8_i32 dim 1 : vector<24x512xf32>, i32 -> vector<24x512xf32>
    %c10 = arith.constant 10 : index
    %c0_18 = arith.constant 0 : index
    %70 = vector.load %arg4[%c10, %c0_18] : memref<27x512xf32, #tpu.memory_space<vmem>>, vector<1x512xf32>
    %71 = vector.broadcast %70 : vector<1x512xf32> to vector<24x512xf32>
    %72 = arith.mulf %69, %71 : vector<24x512xf32>
    %73 = arith.addf %49, %72 : vector<24x512xf32>
    %74 = vector.extract_strided_slice %11 {offsets = [264, 0], sizes = [24, 512], strides = [1, 1]} : vector<648x512xf32> to vector<24x512xf32>
    %c7_i32 = arith.constant 7 : i32
    %75 = tpu.dynamic_rotate %74 by %c7_i32 dim 1 : vector<24x512xf32>, i32 -> vector<24x512xf32>
    %c11 = arith.constant 11 : index
    %c0_19 = arith.constant 0 : index
    %76 = vector.load %arg4[%c11, %c0_19] : memref<27x512xf32, #tpu.memory_space<vmem>>, vector<1x512xf32>
    %77 = vector.broadcast %76 : vector<1x512xf32> to vector<24x512xf32>
    %78 = arith.mulf %75, %77 : vector<24x512xf32>
    %79 = arith.addf %55, %78 : vector<24x512xf32>
    %80 = vector.extract_strided_slice %11 {offsets = [288, 0], sizes = [24, 512], strides = [1, 1]} : vector<648x512xf32> to vector<24x512xf32>
    %c1_i32 = arith.constant 1 : i32
    %81 = tpu.dynamic_rotate %80 by %c1_i32 dim 1 : vector<24x512xf32>, i32 -> vector<24x512xf32>
    %c12 = arith.constant 12 : index
    %c0_20 = arith.constant 0 : index
    %82 = vector.load %arg4[%c12, %c0_20] : memref<27x512xf32, #tpu.memory_space<vmem>>, vector<1x512xf32>
    %83 = vector.broadcast %82 : vector<1x512xf32> to vector<24x512xf32>
    %84 = arith.mulf %81, %83 : vector<24x512xf32>
    %85 = arith.addf %61, %84 : vector<24x512xf32>
    %86 = vector.extract_strided_slice %11 {offsets = [312, 0], sizes = [24, 512], strides = [1, 1]} : vector<648x512xf32> to vector<24x512xf32>
    %87 = arith.addf %67, %86 : vector<24x512xf32>
    %88 = vector.extract_strided_slice %11 {offsets = [336, 0], sizes = [24, 512], strides = [1, 1]} : vector<648x512xf32> to vector<24x512xf32>
    %c511_i32 = arith.constant 511 : i32
    %89 = tpu.dynamic_rotate %88 by %c511_i32 dim 1 : vector<24x512xf32>, i32 -> vector<24x512xf32>
    %c14 = arith.constant 14 : index
    %c0_21 = arith.constant 0 : index
    %90 = vector.load %arg4[%c14, %c0_21] : memref<27x512xf32, #tpu.memory_space<vmem>>, vector<1x512xf32>
    %91 = vector.broadcast %90 : vector<1x512xf32> to vector<24x512xf32>
    %92 = arith.mulf %89, %91 : vector<24x512xf32>
    %93 = arith.addf %73, %92 : vector<24x512xf32>
    %94 = vector.extract_strided_slice %11 {offsets = [360, 0], sizes = [24, 512], strides = [1, 1]} : vector<648x512xf32> to vector<24x512xf32>
    %c505_i32 = arith.constant 505 : i32
    %95 = tpu.dynamic_rotate %94 by %c505_i32 dim 1 : vector<24x512xf32>, i32 -> vector<24x512xf32>
    %c15 = arith.constant 15 : index
    %c0_22 = arith.constant 0 : index
    %96 = vector.load %arg4[%c15, %c0_22] : memref<27x512xf32, #tpu.memory_space<vmem>>, vector<1x512xf32>
    %97 = vector.broadcast %96 : vector<1x512xf32> to vector<24x512xf32>
    %98 = arith.mulf %95, %97 : vector<24x512xf32>
    %99 = arith.addf %79, %98 : vector<24x512xf32>
    %100 = vector.extract_strided_slice %11 {offsets = [384, 0], sizes = [24, 512], strides = [1, 1]} : vector<648x512xf32> to vector<24x512xf32>
    %c504_i32 = arith.constant 504 : i32
    %101 = tpu.dynamic_rotate %100 by %c504_i32 dim 1 : vector<24x512xf32>, i32 -> vector<24x512xf32>
    %c16 = arith.constant 16 : index
    %c0_23 = arith.constant 0 : index
    %102 = vector.load %arg4[%c16, %c0_23] : memref<27x512xf32, #tpu.memory_space<vmem>>, vector<1x512xf32>
    %103 = vector.broadcast %102 : vector<1x512xf32> to vector<24x512xf32>
    %104 = arith.mulf %101, %103 : vector<24x512xf32>
    %105 = arith.addf %85, %104 : vector<24x512xf32>
    %106 = vector.extract_strided_slice %11 {offsets = [408, 0], sizes = [24, 512], strides = [1, 1]} : vector<648x512xf32> to vector<24x512xf32>
    %c503_i32 = arith.constant 503 : i32
    %107 = tpu.dynamic_rotate %106 by %c503_i32 dim 1 : vector<24x512xf32>, i32 -> vector<24x512xf32>
    %c17 = arith.constant 17 : index
    %c0_24 = arith.constant 0 : index
    %108 = vector.load %arg4[%c17, %c0_24] : memref<27x512xf32, #tpu.memory_space<vmem>>, vector<1x512xf32>
    %109 = vector.broadcast %108 : vector<1x512xf32> to vector<24x512xf32>
    %110 = arith.mulf %107, %109 : vector<24x512xf32>
    %111 = arith.addf %87, %110 : vector<24x512xf32>
    %112 = vector.extract_strided_slice %11 {offsets = [432, 0], sizes = [24, 512], strides = [1, 1]} : vector<648x512xf32> to vector<24x512xf32>
    %c457_i32 = arith.constant 457 : i32
    %113 = tpu.dynamic_rotate %112 by %c457_i32 dim 1 : vector<24x512xf32>, i32 -> vector<24x512xf32>
    %c18 = arith.constant 18 : index
    %c0_25 = arith.constant 0 : index
    %114 = vector.load %arg4[%c18, %c0_25] : memref<27x512xf32, #tpu.memory_space<vmem>>, vector<1x512xf32>
    %115 = vector.broadcast %114 : vector<1x512xf32> to vector<24x512xf32>
    %116 = arith.mulf %113, %115 : vector<24x512xf32>
    %117 = arith.addf %93, %116 : vector<24x512xf32>
    %118 = vector.extract_strided_slice %11 {offsets = [456, 0], sizes = [24, 512], strides = [1, 1]} : vector<648x512xf32> to vector<24x512xf32>
    %c456_i32 = arith.constant 456 : i32
    %119 = tpu.dynamic_rotate %118 by %c456_i32 dim 1 : vector<24x512xf32>, i32 -> vector<24x512xf32>
    %c19 = arith.constant 19 : index
    %c0_26 = arith.constant 0 : index
    %120 = vector.load %arg4[%c19, %c0_26] : memref<27x512xf32, #tpu.memory_space<vmem>>, vector<1x512xf32>
    %121 = vector.broadcast %120 : vector<1x512xf32> to vector<24x512xf32>
    %122 = arith.mulf %119, %121 : vector<24x512xf32>
    %123 = arith.addf %99, %122 : vector<24x512xf32>
    %124 = vector.extract_strided_slice %11 {offsets = [480, 0], sizes = [24, 512], strides = [1, 1]} : vector<648x512xf32> to vector<24x512xf32>
    %c455_i32 = arith.constant 455 : i32
    %125 = tpu.dynamic_rotate %124 by %c455_i32 dim 1 : vector<24x512xf32>, i32 -> vector<24x512xf32>
    %c20 = arith.constant 20 : index
    %c0_27 = arith.constant 0 : index
    %126 = vector.load %arg4[%c20, %c0_27] : memref<27x512xf32, #tpu.memory_space<vmem>>, vector<1x512xf32>
    %127 = vector.broadcast %126 : vector<1x512xf32> to vector<24x512xf32>
    %128 = arith.mulf %125, %127 : vector<24x512xf32>
    %129 = arith.addf %105, %128 : vector<24x512xf32>
    %130 = vector.extract_strided_slice %11 {offsets = [504, 0], sizes = [24, 512], strides = [1, 1]} : vector<648x512xf32> to vector<24x512xf32>
    %c449_i32 = arith.constant 449 : i32
    %131 = tpu.dynamic_rotate %130 by %c449_i32 dim 1 : vector<24x512xf32>, i32 -> vector<24x512xf32>
    %c21 = arith.constant 21 : index
    %c0_28 = arith.constant 0 : index
    %132 = vector.load %arg4[%c21, %c0_28] : memref<27x512xf32, #tpu.memory_space<vmem>>, vector<1x512xf32>
    %133 = vector.broadcast %132 : vector<1x512xf32> to vector<24x512xf32>
    %134 = arith.mulf %131, %133 : vector<24x512xf32>
    %135 = arith.addf %111, %134 : vector<24x512xf32>
    %136 = vector.extract_strided_slice %11 {offsets = [528, 0], sizes = [24, 512], strides = [1, 1]} : vector<648x512xf32> to vector<24x512xf32>
    %c448_i32 = arith.constant 448 : i32
    %137 = tpu.dynamic_rotate %136 by %c448_i32 dim 1 : vector<24x512xf32>, i32 -> vector<24x512xf32>
    %c22 = arith.constant 22 : index
    %c0_29 = arith.constant 0 : index
    %138 = vector.load %arg4[%c22, %c0_29] : memref<27x512xf32, #tpu.memory_space<vmem>>, vector<1x512xf32>
    %139 = vector.broadcast %138 : vector<1x512xf32> to vector<24x512xf32>
    %140 = arith.mulf %137, %139 : vector<24x512xf32>
    %141 = arith.addf %117, %140 : vector<24x512xf32>
    %142 = vector.extract_strided_slice %11 {offsets = [552, 0], sizes = [24, 512], strides = [1, 1]} : vector<648x512xf32> to vector<24x512xf32>
    %c447_i32 = arith.constant 447 : i32
    %143 = tpu.dynamic_rotate %142 by %c447_i32 dim 1 : vector<24x512xf32>, i32 -> vector<24x512xf32>
    %c23 = arith.constant 23 : index
    %c0_30 = arith.constant 0 : index
    %144 = vector.load %arg4[%c23, %c0_30] : memref<27x512xf32, #tpu.memory_space<vmem>>, vector<1x512xf32>
    %145 = vector.broadcast %144 : vector<1x512xf32> to vector<24x512xf32>
    %146 = arith.mulf %143, %145 : vector<24x512xf32>
    %147 = arith.addf %123, %146 : vector<24x512xf32>
    %148 = vector.extract_strided_slice %11 {offsets = [576, 0], sizes = [24, 512], strides = [1, 1]} : vector<648x512xf32> to vector<24x512xf32>
    %c441_i32 = arith.constant 441 : i32
    %149 = tpu.dynamic_rotate %148 by %c441_i32 dim 1 : vector<24x512xf32>, i32 -> vector<24x512xf32>
    %c24 = arith.constant 24 : index
    %c0_31 = arith.constant 0 : index
    %150 = vector.load %arg4[%c24, %c0_31] : memref<27x512xf32, #tpu.memory_space<vmem>>, vector<1x512xf32>
    %151 = vector.broadcast %150 : vector<1x512xf32> to vector<24x512xf32>
    %152 = arith.mulf %149, %151 : vector<24x512xf32>
    %153 = arith.addf %129, %152 : vector<24x512xf32>
    %154 = vector.extract_strided_slice %11 {offsets = [600, 0], sizes = [24, 512], strides = [1, 1]} : vector<648x512xf32> to vector<24x512xf32>
    %c440_i32 = arith.constant 440 : i32
    %155 = tpu.dynamic_rotate %154 by %c440_i32 dim 1 : vector<24x512xf32>, i32 -> vector<24x512xf32>
    %c25 = arith.constant 25 : index
    %c0_32 = arith.constant 0 : index
    %156 = vector.load %arg4[%c25, %c0_32] : memref<27x512xf32, #tpu.memory_space<vmem>>, vector<1x512xf32>
    %157 = vector.broadcast %156 : vector<1x512xf32> to vector<24x512xf32>
    %158 = arith.mulf %155, %157 : vector<24x512xf32>
    %159 = arith.addf %135, %158 : vector<24x512xf32>
    %160 = vector.extract_strided_slice %11 {offsets = [624, 0], sizes = [24, 512], strides = [1, 1]} : vector<648x512xf32> to vector<24x512xf32>
    %c439_i32 = arith.constant 439 : i32
    %161 = tpu.dynamic_rotate %160 by %c439_i32 dim 1 : vector<24x512xf32>, i32 -> vector<24x512xf32>
    %c26 = arith.constant 26 : index
    %c0_33 = arith.constant 0 : index
    %162 = vector.load %arg4[%c26, %c0_33] : memref<27x512xf32, #tpu.memory_space<vmem>>, vector<1x512xf32>
    %163 = vector.broadcast %162 : vector<1x512xf32> to vector<24x512xf32>
    %164 = arith.mulf %161, %163 : vector<24x512xf32>
    %165 = arith.addf %141, %164 : vector<24x512xf32>
    %166 = arith.addf %153, %159 : vector<24x512xf32>
    %167 = arith.addf %165, %147 : vector<24x512xf32>
    %168 = arith.addf %166, %167 : vector<24x512xf32>
    %c0_34 = arith.constant 0 : index
    %c0_35 = arith.constant 0 : index
    %c0_36 = arith.constant 0 : index
    %169 = vector.load %arg8[%c0_34, %c0_35, %c0_36] : memref<1x24x1xf32, #tpu.memory_space<vmem>>, vector<1x24x1xf32>
    %170 = vector.shape_cast %169 : vector<1x24x1xf32> to vector<24x1xf32>
    %171 = vector.broadcast %170 : vector<24x1xf32> to vector<24x512xf32>
    %172 = arith.addf %168, %171 : vector<24x512xf32>
    %c0_37 = arith.constant 0 : index
    %c0_38 = arith.constant 0 : index
    %c0_39 = arith.constant 0 : index
    %173 = vector.load %arg9[%c0_37, %c0_38, %c0_39] : memref<1x216x24xbf16, #tpu.memory_space<vmem>>, vector<1x216x24xbf16>
    %174 = vector.shape_cast %173 : vector<1x216x24xbf16> to vector<216x24xbf16>
    %175 = arith.truncf %172 : vector<24x512xf32> to vector<24x512xbf16>
    %cst_40 = arith.constant dense<0.000000e+00> : vector<216x512xf32>
    %176 = tpu.matmul %174, %175, %cst_40 {dimension_numbers = #tpu.dot_dimension_numbers<[1], [0], [0], [1], [0, 0, 1, 1], [], []>} : vector<216x24xbf16>, vector<24x512xbf16>, vector<216x512xf32> -> vector<216x512xf32>
    %177 = vector.extract_strided_slice %176 {offsets = [0, 0], sizes = [24, 512], strides = [1, 1]} : vector<216x512xf32> to vector<24x512xf32>
    %c72_i32_41 = arith.constant 72 : i32
    %178 = tpu.dynamic_rotate %177 by %c72_i32_41 dim 1 : vector<24x512xf32>, i32 -> vector<24x512xf32>
    %c0_42 = arith.constant 0 : index
    %c0_43 = arith.constant 0 : index
    %179 = vector.load %arg5[%c0_42, %c0_43] : memref<9x512xf32, #tpu.memory_space<vmem>>, vector<1x512xf32>
    %180 = vector.broadcast %179 : vector<1x512xf32> to vector<24x512xf32>
    %181 = arith.mulf %178, %180 : vector<24x512xf32>
    %182 = vector.extract_strided_slice %176 {offsets = [24, 0], sizes = [24, 512], strides = [1, 1]} : vector<216x512xf32> to vector<24x512xf32>
    %c64_i32_44 = arith.constant 64 : i32
    %183 = tpu.dynamic_rotate %182 by %c64_i32_44 dim 1 : vector<24x512xf32>, i32 -> vector<24x512xf32>
    %c1_45 = arith.constant 1 : index
    %c0_46 = arith.constant 0 : index
    %184 = vector.load %arg5[%c1_45, %c0_46] : memref<9x512xf32, #tpu.memory_space<vmem>>, vector<1x512xf32>
    %185 = vector.broadcast %184 : vector<1x512xf32> to vector<24x512xf32>
    %186 = arith.mulf %183, %185 : vector<24x512xf32>
    %187 = vector.extract_strided_slice %176 {offsets = [48, 0], sizes = [24, 512], strides = [1, 1]} : vector<216x512xf32> to vector<24x512xf32>
    %c56_i32_47 = arith.constant 56 : i32
    %188 = tpu.dynamic_rotate %187 by %c56_i32_47 dim 1 : vector<24x512xf32>, i32 -> vector<24x512xf32>
    %c2_48 = arith.constant 2 : index
    %c0_49 = arith.constant 0 : index
    %189 = vector.load %arg5[%c2_48, %c0_49] : memref<9x512xf32, #tpu.memory_space<vmem>>, vector<1x512xf32>
    %190 = vector.broadcast %189 : vector<1x512xf32> to vector<24x512xf32>
    %191 = arith.mulf %188, %190 : vector<24x512xf32>
    %192 = vector.extract_strided_slice %176 {offsets = [72, 0], sizes = [24, 512], strides = [1, 1]} : vector<216x512xf32> to vector<24x512xf32>
    %c8_i32_50 = arith.constant 8 : i32
    %193 = tpu.dynamic_rotate %192 by %c8_i32_50 dim 1 : vector<24x512xf32>, i32 -> vector<24x512xf32>
    %c3_51 = arith.constant 3 : index
    %c0_52 = arith.constant 0 : index
    %194 = vector.load %arg5[%c3_51, %c0_52] : memref<9x512xf32, #tpu.memory_space<vmem>>, vector<1x512xf32>
    %195 = vector.broadcast %194 : vector<1x512xf32> to vector<24x512xf32>
    %196 = arith.mulf %193, %195 : vector<24x512xf32>
    %197 = vector.extract_strided_slice %176 {offsets = [96, 0], sizes = [24, 512], strides = [1, 1]} : vector<216x512xf32> to vector<24x512xf32>
    %198 = arith.addf %181, %197 : vector<24x512xf32>
    %199 = vector.extract_strided_slice %176 {offsets = [120, 0], sizes = [24, 512], strides = [1, 1]} : vector<216x512xf32> to vector<24x512xf32>
    %c504_i32_53 = arith.constant 504 : i32
    %200 = tpu.dynamic_rotate %199 by %c504_i32_53 dim 1 : vector<24x512xf32>, i32 -> vector<24x512xf32>
    %c5_54 = arith.constant 5 : index
    %c0_55 = arith.constant 0 : index
    %201 = vector.load %arg5[%c5_54, %c0_55] : memref<9x512xf32, #tpu.memory_space<vmem>>, vector<1x512xf32>
    %202 = vector.broadcast %201 : vector<1x512xf32> to vector<24x512xf32>
    %203 = arith.mulf %200, %202 : vector<24x512xf32>
    %204 = arith.addf %186, %203 : vector<24x512xf32>
    %205 = vector.extract_strided_slice %176 {offsets = [144, 0], sizes = [24, 512], strides = [1, 1]} : vector<216x512xf32> to vector<24x512xf32>
    %c456_i32_56 = arith.constant 456 : i32
    %206 = tpu.dynamic_rotate %205 by %c456_i32_56 dim 1 : vector<24x512xf32>, i32 -> vector<24x512xf32>
    %c6_57 = arith.constant 6 : index
    %c0_58 = arith.constant 0 : index
    %207 = vector.load %arg5[%c6_57, %c0_58] : memref<9x512xf32, #tpu.memory_space<vmem>>, vector<1x512xf32>
    %208 = vector.broadcast %207 : vector<1x512xf32> to vector<24x512xf32>
    %209 = arith.mulf %206, %208 : vector<24x512xf32>
    %210 = arith.addf %191, %209 : vector<24x512xf32>
    %211 = vector.extract_strided_slice %176 {offsets = [168, 0], sizes = [24, 512], strides = [1, 1]} : vector<216x512xf32> to vector<24x512xf32>
    %c448_i32_59 = arith.constant 448 : i32
    %212 = tpu.dynamic_rotate %211 by %c448_i32_59 dim 1 : vector<24x512xf32>, i32 -> vector<24x512xf32>
    %c7_60 = arith.constant 7 : index
    %c0_61 = arith.constant 0 : index
    %213 = vector.load %arg5[%c7_60, %c0_61] : memref<9x512xf32, #tpu.memory_space<vmem>>, vector<1x512xf32>
    %214 = vector.broadcast %213 : vector<1x512xf32> to vector<24x512xf32>
    %215 = arith.mulf %212, %214 : vector<24x512xf32>
    %216 = arith.addf %196, %215 : vector<24x512xf32>
    %217 = vector.extract_strided_slice %176 {offsets = [192, 0], sizes = [24, 512], strides = [1, 1]} : vector<216x512xf32> to vector<24x512xf32>
    %c440_i32_62 = arith.constant 440 : i32
    %218 = tpu.dynamic_rotate %217 by %c440_i32_62 dim 1 : vector<24x512xf32>, i32 -> vector<24x512xf32>
    %c8_63 = arith.constant 8 : index
    %c0_64 = arith.constant 0 : index
    %219 = vector.load %arg5[%c8_63, %c0_64] : memref<9x512xf32, #tpu.memory_space<vmem>>, vector<1x512xf32>
    %220 = vector.broadcast %219 : vector<1x512xf32> to vector<24x512xf32>
    %221 = arith.mulf %218, %220 : vector<24x512xf32>
    %222 = arith.addf %198, %221 : vector<24x512xf32>
    %223 = arith.addf %222, %204 : vector<24x512xf32>
    %224 = arith.addf %210, %216 : vector<24x512xf32>
    %225 = arith.addf %223, %224 : vector<24x512xf32>
    %c0_65 = arith.constant 0 : index
    %c0_66 = arith.constant 0 : index
    %c0_67 = arith.constant 0 : index
    %226 = vector.load %arg10[%c0_65, %c0_66, %c0_67] : memref<1x24x1xf32, #tpu.memory_space<vmem>>, vector<1x24x1xf32>
    %227 = vector.shape_cast %226 : vector<1x24x1xf32> to vector<24x1xf32>
    %228 = vector.broadcast %227 : vector<24x1xf32> to vector<24x512xf32>
    %229 = arith.addf %225, %228 : vector<24x512xf32>
    %c0_68 = arith.constant 0 : index
    %c0_69 = arith.constant 0 : index
    %230 = vector.load %arg15[%c0_68, %c0_69] : memref<48x512xf32, #tpu.memory_space<vmem>>, vector<24x512xf32>
    tpu.vector_store %arg15[%c0_68, %c0_69], %229 {strides = array<i32>} : memref<48x512xf32, #tpu.memory_space<vmem>>, vector<24x512xf32>,
    %c24_70 = arith.constant 24 : index
    %c0_71 = arith.constant 0 : index
    %231 = vector.load %arg15[%c24_70, %c0_71] : memref<48x512xf32, #tpu.memory_space<vmem>>, vector<24x512xf32>
    tpu.vector_store %arg15[%c24_70, %c0_71], %7 {strides = array<i32>} : memref<48x512xf32, #tpu.memory_space<vmem>>, vector<24x512xf32>,
    %c0_72 = arith.constant 0 : index
    %c0_73 = arith.constant 0 : index
    %c0_74 = arith.constant 0 : index
    %232 = vector.load %arg11[%c0_72, %c0_73, %c0_74] : memref<1x72x48xbf16, #tpu.memory_space<vmem>>, vector<1x72x48xbf16>
    %233 = vector.shape_cast %232 : vector<1x72x48xbf16> to vector<72x48xbf16>
    %c0_75 = arith.constant 0 : index
    %c0_76 = arith.constant 0 : index
    %234 = vector.load %arg15[%c0_75, %c0_76] : memref<48x512xf32, #tpu.memory_space<vmem>>, vector<48x512xf32>
    %235 = arith.truncf %234 : vector<48x512xf32> to vector<48x512xbf16>
    %cst_77 = arith.constant dense<0.000000e+00> : vector<72x512xf32>
    %236 = tpu.matmul %233, %235, %cst_77 {dimension_numbers = #tpu.dot_dimension_numbers<[1], [0], [0], [1], [0, 0, 1, 1], [], []>} : vector<72x48xbf16>, vector<48x512xbf16>, vector<72x512xf32> -> vector<72x512xf32>
    %237 = vector.extract_strided_slice %236 {offsets = [0, 0], sizes = [24, 512], strides = [1, 1]} : vector<72x512xf32> to vector<24x512xf32>
    %c1_i32_78 = arith.constant 1 : i32
    %238 = tpu.dynamic_rotate %237 by %c1_i32_78 dim 1 : vector<24x512xf32>, i32 -> vector<24x512xf32>
    %c0_79 = arith.constant 0 : index
    %c0_80 = arith.constant 0 : index
    %239 = vector.load %arg6[%c0_79, %c0_80] : memref<3x512xf32, #tpu.memory_space<vmem>>, vector<1x512xf32>
    %240 = vector.broadcast %239 : vector<1x512xf32> to vector<24x512xf32>
    %241 = arith.mulf %238, %240 : vector<24x512xf32>
    %242 = vector.extract_strided_slice %236 {offsets = [24, 0], sizes = [24, 512], strides = [1, 1]} : vector<72x512xf32> to vector<24x512xf32>
    %243 = vector.extract_strided_slice %236 {offsets = [48, 0], sizes = [24, 512], strides = [1, 1]} : vector<72x512xf32> to vector<24x512xf32>
    %c511_i32_81 = arith.constant 511 : i32
    %244 = tpu.dynamic_rotate %243 by %c511_i32_81 dim 1 : vector<24x512xf32>, i32 -> vector<24x512xf32>
    %c2_82 = arith.constant 2 : index
    %c0_83 = arith.constant 0 : index
    %245 = vector.load %arg6[%c2_82, %c0_83] : memref<3x512xf32, #tpu.memory_space<vmem>>, vector<1x512xf32>
    %246 = vector.broadcast %245 : vector<1x512xf32> to vector<24x512xf32>
    %247 = arith.mulf %244, %246 : vector<24x512xf32>
    %248 = arith.addf %241, %242 : vector<24x512xf32>
    %249 = arith.addf %248, %247 : vector<24x512xf32>
    %c0_84 = arith.constant 0 : index
    %c0_85 = arith.constant 0 : index
    %c0_86 = arith.constant 0 : index
    %250 = vector.load %arg12[%c0_84, %c0_85, %c0_86] : memref<1x24x1xf32, #tpu.memory_space<vmem>>, vector<1x24x1xf32>
    %251 = vector.shape_cast %250 : vector<1x24x1xf32> to vector<24x1xf32>
    %252 = vector.broadcast %251 : vector<24x1xf32> to vector<24x512xf32>
    %253 = arith.addf %249, %252 : vector<24x512xf32>
    %c0_87 = arith.constant 0 : index
    %c0_88 = arith.constant 0 : index
    %c0_89 = arith.constant 0 : index
    %254 = vector.load %arg13[%c0_87, %c0_88, %c0_89] : memref<1x24x512xf32, #tpu.memory_space<vmem>>, vector<1x24x512xf32>
    %255 = vector.shape_cast %254 : vector<1x24x512xf32> to vector<24x512xf32>
    %256 = vector.shape_cast %253 : vector<24x512xf32> to vector<1x24x512xf32>
    tpu.vector_store %arg13[%c0_87, %c0_88, %c0_89], %256 {strides = array<i32>} : memref<1x24x512xf32, #tpu.memory_space<vmem>>, vector<1x24x512xf32>,
    return
  }
  func.func @transform_0(%arg0: i32, %arg1: i32) -> (i32, i32, i32) {
    %c0_i32 = arith.constant 0 : i32
    %c0_i32_0 = arith.constant 0 : i32
    %c0_i32_1 = arith.constant 0 : i32
    return %arg0, %c0_i32, %c0_i32_0 : i32, i32, i32
  }
  func.func @transform_1(%arg0: i32, %arg1: i32) -> (i32, i32, i32) {
    %c0_i32 = arith.constant 0 : i32
    %c0_i32_0 = arith.constant 0 : i32
    %c0_i32_1 = arith.constant 0 : i32
    return %arg0, %c0_i32, %c0_i32_0 : i32, i32, i32
  }
  func.func @transform_2(%arg0: i32, %arg1: i32) -> (i32, i32) {
    %c0_i32 = arith.constant 0 : i32
    %c0_i32_0 = arith.constant 0 : i32
    %c0_i32_1 = arith.constant 0 : i32
    return %c0_i32, %c0_i32_0 : i32, i32
  }
  func.func @transform_3(%arg0: i32, %arg1: i32) -> (i32, i32) {
    %c0_i32 = arith.constant 0 : i32
    %c0_i32_0 = arith.constant 0 : i32
    %c0_i32_1 = arith.constant 0 : i32
    return %c0_i32, %c0_i32_0 : i32, i32
  }
  func.func @transform_4(%arg0: i32, %arg1: i32) -> (i32, i32) {
    %c0_i32 = arith.constant 0 : i32
    %c0_i32_0 = arith.constant 0 : i32
    %c0_i32_1 = arith.constant 0 : i32
    return %c0_i32, %c0_i32_0 : i32, i32
  }
  func.func @transform_5(%arg0: i32, %arg1: i32) -> (i32, i32, i32) {
    %c0_i32 = arith.constant 0 : i32
    %c0_i32_0 = arith.constant 0 : i32
    %c0_i32_1 = arith.constant 0 : i32
    return %arg1, %c0_i32, %c0_i32_0 : i32, i32, i32
  }
  func.func @transform_6(%arg0: i32, %arg1: i32) -> (i32, i32, i32) {
    %c0_i32 = arith.constant 0 : i32
    %c0_i32_0 = arith.constant 0 : i32
    %c0_i32_1 = arith.constant 0 : i32
    return %arg1, %c0_i32, %c0_i32_0 : i32, i32, i32
  }
  func.func @transform_7(%arg0: i32, %arg1: i32) -> (i32, i32, i32) {
    %c0_i32 = arith.constant 0 : i32
    %c0_i32_0 = arith.constant 0 : i32
    %c0_i32_1 = arith.constant 0 : i32
    return %arg1, %c0_i32, %c0_i32_0 : i32, i32, i32
  }
  func.func @transform_8(%arg0: i32, %arg1: i32) -> (i32, i32, i32) {
    %c0_i32 = arith.constant 0 : i32
    %c0_i32_0 = arith.constant 0 : i32
    %c0_i32_1 = arith.constant 0 : i32
    return %arg1, %c0_i32, %c0_i32_0 : i32, i32, i32
  }
  func.func @transform_9(%arg0: i32, %arg1: i32) -> (i32, i32, i32) {
    %c0_i32 = arith.constant 0 : i32
    %c0_i32_0 = arith.constant 0 : i32
    %c0_i32_1 = arith.constant 0 : i32
    return %arg1, %c0_i32, %c0_i32_0 : i32, i32, i32
  }
  func.func @transform_10(%arg0: i32, %arg1: i32) -> (i32, i32, i32) {
    %c0_i32 = arith.constant 0 : i32
    %c0_i32_0 = arith.constant 0 : i32
    %c0_i32_1 = arith.constant 0 : i32
    return %arg1, %c0_i32, %c0_i32_0 : i32, i32, i32
  }
  func.func @transform_11(%arg0: i32, %arg1: i32) -> (i32, i32, i32) {
    %c0_i32 = arith.constant 0 : i32
    %c0_i32_0 = arith.constant 0 : i32
    %c0_i32_1 = arith.constant 0 : i32
    return %arg0, %c0_i32, %c0_i32_0 : i32, i32, i32
  }
}

</mosaic_0001>

<llo_original>
// kernel: cnn4d_forward_pallas.1
$region0: #{cnn4d_forward_pallas.1}
  #allocation0 [shape = 'u32[]', space=smem, size = 0x4, offset = 0x4, fixed_abs, tag = 'smem constant byte address 0x4 - core index']
  #allocation1 [shape = 'u32[72,128]{1,0:T(1,128)}', space=vmem, size = 0x9000, scoped, tag = 'internal scratch']
  #allocation2 [shape = 'f32[48,512]{1,0:T(8,128)}', space=vmem, size = 0x18000, scoped, tag = 'scratch operand']
  #allocation3 [shape = 'f32[48,512]{1,0:T(8,128)}', space=vmem, size = 0x18000, scoped, tag = 'scratch operand']
  %s0 = inlined_call_operand.vmem [shape: f32[2,24,512], index: 0, kind: input, shape index: {}]
  %s1 = inlined_call_operand.vmem [shape: f32[2,24,512], index: 1, kind: input, shape index: {}]
  %s2 = inlined_call_operand.vmem [shape: f32[27,512], index: 2, kind: input, shape index: {}]
  %s3 = inlined_call_operand.vmem [shape: f32[9,512], index: 3, kind: input, shape index: {}]
  %s4 = inlined_call_operand.vmem [shape: f32[3,512], index: 4, kind: input, shape index: {}]
  %s5 = inlined_call_operand.vmem [shape: bf16[2,648,48], index: 5, kind: input, shape index: {}]
  %s6 = inlined_call_operand.vmem [shape: f32[2,24,1], index: 6, kind: input, shape index: {}]
  %s7 = inlined_call_operand.vmem [shape: bf16[2,216,24], index: 7, kind: input, shape index: {}]
  %s8 = inlined_call_operand.vmem [shape: f32[2,24,1], index: 8, kind: input, shape index: {}]
  %s9 = inlined_call_operand.vmem [shape: bf16[2,72,48], index: 9, kind: input, shape index: {}]
  %s10 = inlined_call_operand.vmem [shape: f32[2,24,1], index: 10, kind: input, shape index: {}]
  %s11 = inlined_call_operand.vmem [shape: f32[2,24,512], index: 11, kind: output, shape index: {}]
  %s12 = sld [smem:[#allocation0]]
  $region85: #{cnn4d_forward_pallas.1} parent=0
    _
  %s14 = ssub.s32 1, %s12
  %s15 = scalar_select 0, %s14, %s12
  loop: start=0, step=1, limit=6
  $region2: #{cnn4d_forward_pallas.1} parent=0 // loop_pre_header
    _
  $region3: #{cnn4d_forward_pallas.1} parent=0 // loop_header
    %s17 = sphi 0, %s21
    %p18 = scmp.ge.s32.totalorder %s17, 6
    %s24 = sphi 0, %s36
    %s25 = sphi 0, %s32
    %s26 = sphi 0, %s24
    %s27 = sphi 0, %s25
    %s28 = sphi 0, %s26
    %s29 = sphi 0, %s27
    %s39 = sphi 0, %s41
    %s42 = sphi 0, %s39
    %s43 = sphi 0, %s42
    %s59 = sphi 0, %s43
    %s65 = sphi 0, %s67
    %s68 = sphi 0, %s65
    %s69 = sphi 0, %s68
    %s85 = sphi 0, %s69
    %s89 = sphi 0, %s89
    %s91 = sphi 0, %s89
    %s92 = sphi 0, %s91
    %s106 = sphi 0, %s92
    %s110 = sphi 0, %s110
    %s112 = sphi 0, %s110
    %s113 = sphi 0, %s112
    %s127 = sphi 0, %s113
    %s131 = sphi 0, %s131
    %s133 = sphi 0, %s131
    %s134 = sphi 0, %s133
    %s148 = sphi 0, %s134
    %s154 = sphi 0, %s156
    %s157 = sphi 0, %s154
    %s158 = sphi 0, %s157
    %s174 = sphi 0, %s158
    %s180 = sphi 0, %s182
    %s183 = sphi 0, %s180
    %s184 = sphi 0, %s183
    %s200 = sphi 0, %s184
    %s206 = sphi 0, %s208
    %s209 = sphi 0, %s206
    %s210 = sphi 0, %s209
    %s226 = sphi 0, %s210
    %s232 = sphi 0, %s234
    %s235 = sphi 0, %s232
    %s236 = sphi 0, %s235
    %s252 = sphi 0, %s236
    %s258 = sphi 0, %s260
    %s261 = sphi 0, %s258
    %s262 = sphi 0, %s261
    %s278 = sphi 0, %s262
    %s284 = sphi 0, %s286
    %s287 = sphi 0, %s284
    %s288 = sphi 0, %s287
    %s304 = sphi 0, %s288
    %s310 = sphi 0, %s312
    %s313 = sphi 0, %s310
    %s314 = sphi 0, %s313
    %s330 = sphi 0, %s314
  $region4: #{cnn4d_forward_pallas.1} parent=0 // loop_header_branch
    %20 = sbr.rel (%p18) target = $region8
  $region5: #{cnn4d_forward_pallas.1} parent=0 // loop_body
    %s22 = ssub.s32 %s17, 1
    %s23 = ssub.s32 %s17, 2
    %s30 = sadd.s32 1, %s25
    %p31 = scmp.ge.s32.totalorder %s30, 2
    %s32 = scalar_select %p31, 0, %s30
    %s33 = sadd.s32 1, %s24
    %s34 = scalar_select %p31, %s33, %s24
    %p35 = scmp.ge.s32.totalorder %s34, 2
    %s36 = scalar_select %p35, 0, %s34
    %s37 = ssub.s32 %s24, %s36
    %p38 = scmp.eq.s32.totalorder %s37, 0
    %s40 = sadd.s32 %s39, 1
    %s41 = scalar_select %p38, %s39, %s40
    %p44 = pneg %p38
    %p45 = scmp.eq.s32.totalorder %s17, 3
    %p46 = por %p44, %p45
    %p47 = scmp.ne.s32.totalorder %s39, %s42
    %p48 = scmp.eq.s32.totalorder %s17, 0
    %p49 = por %p47, %p48
    %p50 = scmp.ne.s32.totalorder %s39, %s42
    %p51 = scmp.eq.s32.totalorder %s22, 3
    %p52 = por %p50, %p51
    %p53 = scmp.ne.s32.totalorder %s42, %s43
    %p54 = scmp.eq.s32.totalorder %s22, 0
    %p55 = por %p53, %p54
    %p56 = scmp.ne.s32.totalorder %s42, %s43
    %p57 = scmp.eq.s32.totalorder %s23, 3
    %p58 = por %p56, %p57
    %p60 = scmp.ne.s32.totalorder %s43, %s59
    %p61 = scmp.eq.s32.totalorder %s23, 0
    %p62 = por %p60, %p61
    %s63 = ssub.s32 %s24, %s36
    %p64 = scmp.eq.s32.totalorder %s63, 0
    %s66 = sadd.s32 %s65, 1
    %s67 = scalar_select %p64, %s65, %s66
    %p70 = pneg %p64
    %p71 = scmp.eq.s32.totalorder %s17, 3
    %p72 = por %p70, %p71
    %p73 = scmp.ne.s32.totalorder %s65, %s68
    %p74 = scmp.eq.s32.totalorder %s17, 0
    %p75 = por %p73, %p74
    %p76 = scmp.ne.s32.totalorder %s65, %s68
    %p77 = scmp.eq.s32.totalorder %s22, 3
    %p78 = por %p76, %p77
    %p79 = scmp.ne.s32.totalorder %s68, %s69
    %p80 = scmp.eq.s32.totalorder %s22, 0
    %p81 = por %p79, %p80
    %p82 = scmp.ne.s32.totalorder %s68, %s69
    %p83 = scmp.eq.s32.totalorder %s23, 3
    %p84 = por %p82, %p83
    %p86 = scmp.ne.s32.totalorder %s69, %s85
    %p87 = scmp.eq.s32.totalorder %s23, 0
    %p88 = por %p86, %p87
    %s90 = sadd.s32 %s89, 1
    %p93 = scmp.eq.s32.totalorder %s17, 3
    %p94 = scmp.ne.s32.totalorder %s89, %s91
    %p95 = scmp.eq.s32.totalorder %s17, 0
    %p96 = por %p94, %p95
    %p97 = scmp.ne.s32.totalorder %s89, %s91
    %p98 = scmp.eq.s32.totalorder %s22, 3
    %p99 = por %p97, %p98
    %p100 = scmp.ne.s32.totalorder %s91, %s92
    %p101 = scmp.eq.s32.totalorder %s22, 0
    %p102 = por %p100, %p101
    %p103 = scmp.ne.s32.totalorder %s91, %s92
    %p104 = scmp.eq.s32.totalorder %s23, 3
    %p105 = por %p103, %p104
    %p107 = scmp.ne.s32.totalorder %s92, %s106
    %p108 = scmp.eq.s32.totalorder %s23, 0
    %p109 = por %p107, %p108
    %s111 = sadd.s32 %s110, 1
    %p114 = scmp.eq.s32.totalorder %s17, 3
    %p115 = scmp.ne.s32.totalorder %s110, %s112
    %p116 = scmp.eq.s32.totalorder %s17, 0
    %p117 = por %p115, %p116
    %p118 = scmp.ne.s32.totalorder %s110, %s112
    %p119 = scmp.eq.s32.totalorder %s22, 3
    %p120 = por %p118, %p119
    %p121 = scmp.ne.s32.totalorder %s112, %s113
    %p122 = scmp.eq.s32.totalorder %s22, 0
    %p123 = por %p121, %p122
    %p124 = scmp.ne.s32.totalorder %s112, %s113
    %p125 = scmp.eq.s32.totalorder %s23, 3
    %p126 = por %p124, %p125
    %p128 = scmp.ne.s32.totalorder %s113, %s127
    %p129 = scmp.eq.s32.totalorder %s23, 0
    %p130 = por %p128, %p129
    %s132 = sadd.s32 %s131, 1
    %p135 = scmp.eq.s32.totalorder %s17, 3
    %p136 = scmp.ne.s32.totalorder %s131, %s133
    %p137 = scmp.eq.s32.totalorder %s17, 0
    %p138 = por %p136, %p137
    %p139 = scmp.ne.s32.totalorder %s131, %s133
    %p140 = scmp.eq.s32.totalorder %s22, 3
    %p141 = por %p139, %p140
    %p142 = scmp.ne.s32.totalorder %s133, %s134
    %p143 = scmp.eq.s32.totalorder %s22, 0
    %p144 = por %p142, %p143
    %p145 = scmp.ne.s32.totalorder %s133, %s134
    %p146 = scmp.eq.s32.totalorder %s23, 3
    %p147 = por %p145, %p146
    %p149 = scmp.ne.s32.totalorder %s134, %s148
    %p150 = scmp.eq.s32.totalorder %s23, 0
    %p151 = por %p149, %p150
    %s152 = ssub.s32 %s25, %s32
    %p153 = scmp.eq.s32.totalorder %s152, 0
    %s155 = sadd.s32 %s154, 1
    %s156 = scalar_select %p153, %s154, %s155
    %p159 = pneg %p153
    %p160 = scmp.eq.s32.totalorder %s17, 3
    %p161 = por %p159, %p160
    %p162 = scmp.ne.s32.totalorder %s154, %s157
    %p163 = scmp.eq.s32.totalorder %s17, 0
    %p164 = por %p162, %p163
    %p165 = scmp.ne.s32.totalorder %s154, %s157
    %p166 = scmp.eq.s32.totalorder %s22, 3
    %p167 = por %p165, %p166
    %p168 = scmp.ne.s32.totalorder %s157, %s158
    %p169 = scmp.eq.s32.totalorder %s22, 0
    %p170 = por %p168, %p169
    %p171 = scmp.ne.s32.totalorder %s157, %s158
    %p172 = scmp.eq.s32.totalorder %s23, 3
    %p173 = por %p171, %p172
    %p175 = scmp.ne.s32.totalorder %s158, %s174
    %p176 = scmp.eq.s32.totalorder %s23, 0
    %p177 = por %p175, %p176
    %s178 = ssub.s32 %s25, %s32
    %p179 = scmp.eq.s32.totalorder %s178, 0
    %s181 = sadd.s32 %s180, 1
    %s182 = scalar_select %p179, %s180, %s181
    %p185 = pneg %p179
    %p186 = scmp.eq.s32.totalorder %s17, 3
    %p187 = por %p185, %p186
    %p188 = scmp.ne.s32.totalorder %s180, %s183
    %p189 = scmp.eq.s32.totalorder %s17, 0
    %p190 = por %p188, %p189
    %p191 = scmp.ne.s32.totalorder %s180, %s183
    %p192 = scmp.eq.s32.totalorder %s22, 3
    %p193 = por %p191, %p192
    %p194 = scmp.ne.s32.totalorder %s183, %s184
    %p195 = scmp.eq.s32.totalorder %s22, 0
    %p196 = por %p194, %p195
    %p197 = scmp.ne.s32.totalorder %s183, %s184
    %p198 = scmp.eq.s32.totalorder %s23, 3
    %p199 = por %p197, %p198
    %p201 = scmp.ne.s32.totalorder %s184, %s200
    %p202 = scmp.eq.s32.totalorder %s23, 0
    %p203 = por %p201, %p202
    %s204 = ssub.s32 %s25, %s32
    %p205 = scmp.eq.s32.totalorder %s204, 0
    %s207 = sadd.s32 %s206, 1
    %s208 = scalar_select %p205, %s206, %s207
    %p211 = pneg %p205
    %p212 = scmp.eq.s32.totalorder %s17, 3
    %p213 = por %p211, %p212
    %p214 = scmp.ne.s32.totalorder %s206, %s209
    %p215 = scmp.eq.s32.totalorder %s17, 0
    %p216 = por %p214, %p215
    %p217 = scmp.ne.s32.totalorder %s206, %s209
    %p218 = scmp.eq.s32.totalorder %s22, 3
    %p219 = por %p217, %p218
    %p220 = scmp.ne.s32.totalorder %s209, %s210
    %p221 = scmp.eq.s32.totalorder %s22, 0
    %p222 = por %p220, %p221
    %p223 = scmp.ne.s32.totalorder %s209, %s210
    %p224 = scmp.eq.s32.totalorder %s23, 3
    %p225 = por %p223, %p224
    %p227 = scmp.ne.s32.totalorder %s210, %s226
    %p228 = scmp.eq.s32.totalorder %s23, 0
    %p229 = por %p227, %p228
    %s230 = ssub.s32 %s25, %s32
    %p231 = scmp.eq.s32.totalorder %s230, 0
    %s233 = sadd.s32 %s232, 1
    %s234 = scalar_select %p231, %s232, %s233
    %p237 = pneg %p231
    %p238 = scmp.eq.s32.totalorder %s17, 3
    %p239 = por %p237, %p238
    %p240 = scmp.ne.s32.totalorder %s232, %s235
    %p241 = scmp.eq.s32.totalorder %s17, 0
    %p242 = por %p240, %p241
    %p243 = scmp.ne.s32.totalorder %s232, %s235
    %p244 = scmp.eq.s32.totalorder %s22, 3
    %p245 = por %p243, %p244
    %p246 = scmp.ne.s32.totalorder %s235, %s236
    %p247 = scmp.eq.s32.totalorder %s22, 0
    %p248 = por %p246, %p247
    %p249 = scmp.ne.s32.totalorder %s235, %s236
    %p250 = scmp.eq.s32.totalorder %s23, 3
    %p251 = por %p249, %p250
    %p253 = scmp.ne.s32.totalorder %s236, %s252
    %p254 = scmp.eq.s32.totalorder %s23, 0
    %p255 = por %p253, %p254
    %s256 = ssub.s32 %s25, %s32
    %p257 = scmp.eq.s32.totalorder %s256, 0
    %s259 = sadd.s32 %s258, 1
    %s260 = scalar_select %p257, %s258, %s259
    %p263 = pneg %p257
    %p264 = scmp.eq.s32.totalorder %s17, 3
    %p265 = por %p263, %p264
    %p266 = scmp.ne.s32.totalorder %s258, %s261
    %p267 = scmp.eq.s32.totalorder %s17, 0
    %p268 = por %p266, %p267
    %p269 = scmp.ne.s32.totalorder %s258, %s261
    %p270 = scmp.eq.s32.totalorder %s22, 3
    %p271 = por %p269, %p270
    %p272 = scmp.ne.s32.totalorder %s261, %s262
    %p273 = scmp.eq.s32.totalorder %s22, 0
    %p274 = por %p272, %p273
    %p275 = scmp.ne.s32.totalorder %s261, %s262
    %p276 = scmp.eq.s32.totalorder %s23, 3
    %p277 = por %p275, %p276
    %p279 = scmp.ne.s32.totalorder %s262, %s278
    %p280 = scmp.eq.s32.totalorder %s23, 0
    %p281 = por %p279, %p280
    %s282 = ssub.s32 %s25, %s32
    %p283 = scmp.eq.s32.totalorder %s282, 0
    %s285 = sadd.s32 %s284, 1
    %s286 = scalar_select %p283, %s284, %s285
    %p289 = pneg %p283
    %p290 = scmp.eq.s32.totalorder %s17, 3
    %p291 = por %p289, %p290
    %p292 = scmp.ne.s32.totalorder %s284, %s287
    %p293 = scmp.eq.s32.totalorder %s17, 0
    %p294 = por %p292, %p293
    %p295 = scmp.ne.s32.totalorder %s284, %s287
    %p296 = scmp.eq.s32.totalorder %s22, 3
    %p297 = por %p295, %p296
    %p298 = scmp.ne.s32.totalorder %s287, %s288
    %p299 = scmp.eq.s32.totalorder %s22, 0
    %p300 = por %p298, %p299
    %p301 = scmp.ne.s32.totalorder %s287, %s288
    %p302 = scmp.eq.s32.totalorder %s23, 3
    %p303 = por %p301, %p302
    %p305 = scmp.ne.s32.totalorder %s288, %s304
    %p306 = scmp.eq.s32.totalorder %s23, 0
    %p307 = por %p305, %p306
    %s308 = ssub.s32 %s24, %s36
    %p309 = scmp.eq.s32.totalorder %s308, 0
    %s311 = sadd.s32 %s310, 1
    %s312 = scalar_select %p309, %s310, %s311
    %p315 = pneg %p309
    %p316 = scmp.eq.s32.totalorder %s17, 3
    %p317 = por %p315, %p316
    %p318 = scmp.ne.s32.totalorder %s310, %s313
    %p319 = scmp.eq.s32.totalorder %s17, 0
    %p320 = por %p318, %p319
    %p321 = scmp.ne.s32.totalorder %s310, %s313
    %p322 = scmp.eq.s32.totalorder %s22, 3
    %p323 = por %p321, %p322
    %p324 = scmp.ne.s32.totalorder %s313, %s314
    %p325 = scmp.eq.s32.totalorder %s22, 0
    %p326 = por %p324, %p325
    %p327 = scmp.ne.s32.totalorder %s313, %s314
    %p328 = scmp.eq.s32.totalorder %s23, 3
    %p329 = por %p327, %p328
    %p331 = scmp.ne.s32.totalorder %s314, %s330
    %p332 = scmp.eq.s32.totalorder %s23, 0
    %p333 = por %p331, %p332
    %p334 = scmp.le.s32.totalorder 1, %s17
    %p335 = scmp.lt.s32.totalorder %s17, 5
    %p336 = pnand %p334, %p335
    %p337 = pneg %p336
    // Predicated region
    $region9: #{cnn4d_forward_pallas.1} parent=5 // pred_check
      _
    $region10: #{cnn4d_forward_pallas.1} parent=5 // pred_check_branch
      %339 = sbr.rel (%p336) target = $region12
    $region11: #{cnn4d_forward_pallas.1} parent=5 // pred_region
      %s340 = ssub.s32 %s17, 1
      // Predicated region
      $region13: #{cnn4d_forward_pallas.1} parent=11 // pred_check
        %p341 = pneg %p102
      $region14: #{cnn4d_forward_pallas.1} parent=11 // pred_check_branch
        %343 = sbr.rel (%p341) target = $region16
      $region15: #{cnn4d_forward_pallas.1} parent=11 // pred_region
        _
      $region16: #{cnn4d_forward_pallas.1} parent=11 // pred_fallthru
        _
      // Predicated region
      $region17: #{cnn4d_forward_pallas.1} parent=11 // pred_check
        %p344 = pneg %p123
      $region18: #{cnn4d_forward_pallas.1} parent=11 // pred_check_branch
        %346 = sbr.rel (%p344) target = $region20
      $region19: #{cnn4d_forward_pallas.1} parent=11 // pred_region
        _
      $region20: #{cnn4d_forward_pallas.1} parent=11 // pred_fallthru
        _
      // Predicated region
      $region21: #{cnn4d_forward_pallas.1} parent=11 // pred_check
        %p347 = pneg %p144
      $region22: #{cnn4d_forward_pallas.1} parent=11 // pred_check_branch
        %349 = sbr.rel (%p347) target = $region24
      $region23: #{cnn4d_forward_pallas.1} parent=11 // pred_region
        _
      $region24: #{cnn4d_forward_pallas.1} parent=11 // pred_fallthru
        _
    $region12: #{cnn4d_forward_pallas.1} parent=5 // pred_fallthru
      _
    %p350 = scmp.lt.s32.totalorder %s17, 4
    // Predicated region
    $region25: #{cnn4d_forward_pallas.1} parent=5 // pred_check
      %p351 = pneg %p350
    $region26: #{cnn4d_forward_pallas.1} parent=5 // pred_check_branch
      %353 = sbr.rel (%p351) target = $region28
    $region27: #{cnn4d_forward_pallas.1} parent=5 // pred_region
      // Predicated region
      $region29: #{cnn4d_forward_pallas.1} parent=27 // pred_check
        %p354 = pneg %p49
      $region30: #{cnn4d_forward_pallas.1} parent=27 // pred_check_branch
        %356 = sbr.rel (%p354) target = $region32
      $region31: #{cnn4d_forward_pallas.1} parent=27 // pred_region
        %p357 = scmp.lt.s32.totalorder %s24, 1
        %s358 = scalar_select %p357, %s24, 1
        %s359 = smul.addr %s358, 12
        %s360 = smul.addr %s359, 8
        %s361 = scalar_lea.vmem %s0, %s360
      $region32: #{cnn4d_forward_pallas.1} parent=27 // pred_fallthru
        _
      // Predicated region
      $region33: #{cnn4d_forward_pallas.1} parent=27 // pred_check
        %p362 = pneg %p75
      $region34: #{cnn4d_forward_pallas.1} parent=27 // pred_check_branch
        %364 = sbr.rel (%p362) target = $region36
      $region35: #{cnn4d_forward_pallas.1} parent=27 // pred_region
        %p365 = scmp.lt.s32.totalorder %s24, 1
        %s366 = scalar_select %p365, %s24, 1
        %s367 = smul.addr %s366, 12
        %s368 = smul.addr %s367, 8
        %s369 = scalar_lea.vmem %s1, %s368
      $region36: #{cnn4d_forward_pallas.1} parent=27 // pred_fallthru
        _
      // Predicated region
      $region37: #{cnn4d_forward_pallas.1} parent=27 // pred_check
        %p370 = pneg %p164
      $region38: #{cnn4d_forward_pallas.1} parent=27 // pred_check_branch
        %372 = sbr.rel (%p370) target = $region40
      $region39: #{cnn4d_forward_pallas.1} parent=27 // pred_region
        %p373 = scmp.lt.s32.totalorder %s25, 1
        %s374 = scalar_select %p373, %s25, 1
        %s375 = smul.addr %s374, 81
        %s376 = smul.addr %s375, 4
        %s377 = scalar_lea.vmem %s5, %s376
      $region40: #{cnn4d_forward_pallas.1} parent=27 // pred_fallthru
        _
      // Predicated region
      $region41: #{cnn4d_forward_pallas.1} parent=27 // pred_check
        %p378 = pneg %p190
      $region42: #{cnn4d_forward_pallas.1} parent=27 // pred_check_branch
        %380 = sbr.rel (%p378) target = $region44
      $region43: #{cnn4d_forward_pallas.1} parent=27 // pred_region
        %p381 = scmp.lt.s32.totalorder %s25, 1
        %s382 = scalar_select %p381, %s25, 1
        %s383 = smul.addr %s382, 3
        %s384 = smul.addr %s383, 8
        %s385 = scalar_lea.vmem %s6, %s384
      $region44: #{cnn4d_forward_pallas.1} parent=27 // pred_fallthru
        _
      // Predicated region
      $region45: #{cnn4d_forward_pallas.1} parent=27 // pred_check
        %p386 = pneg %p216
      $region46: #{cnn4d_forward_pallas.1} parent=27 // pred_check_branch
        %388 = sbr.rel (%p386) target = $region48
      $region47: #{cnn4d_forward_pallas.1} parent=27 // pred_region
        %p389 = scmp.lt.s32.totalorder %s25, 1
        %s390 = scalar_select %p389, %s25, 1
        %s391 = smul.addr %s390, 27
        %s392 = smul.addr %s391, 4
        %s393 = scalar_lea.vmem %s7, %s392
      $region48: #{cnn4d_forward_pallas.1} parent=27 // pred_fallthru
        _
      // Predicated region
      $region49: #{cnn4d_forward_pallas.1} parent=27 // pred_check
        %p394 = pneg %p242
      $region50: #{cnn4d_forward_pallas.1} parent=27 // pred_check_branch
        %396 = sbr.rel (%p394) target = $region52
      $region51: #{cnn4d_forward_pallas.1} parent=27 // pred_region
        %p397 = scmp.lt.s32.totalorder %s25, 1
        %s398 = scalar_select %p397, %s25, 1
        %s399 = smul.addr %s398, 3
        %s400 = smul.addr %s399, 8
        %s401 = scalar_lea.vmem %s8, %s400
      $region52: #{cnn4d_forward_pallas.1} parent=27 // pred_fallthru
        _
      // Predicated region
      $region53: #{cnn4d_forward_pallas.1} parent=27 // pred_check
        %p402 = pneg %p268
      $region54: #{cnn4d_forward_pallas.1} parent=27 // pred_check_branch
        %404 = sbr.rel (%p402) target = $region56
      $region55: #{cnn4d_forward_pallas.1} parent=27 // pred_region
        %p405 = scmp.lt.s32.totalorder %s25, 1
        %s406 = scalar_select %p405, %s25, 1
        %s407 = smul.addr %s406, 9
        %s408 = smul.addr %s407, 4
        %s409 = scalar_lea.vmem %s9, %s408
      $region56: #{cnn4d_forward_pallas.1} parent=27 // pred_fallthru
        _
      // Predicated region
      $region57: #{cnn4d_forward_pallas.1} parent=27 // pred_check
        %p410 = pneg %p294
      $region58: #{cnn4d_forward_pallas.1} parent=27 // pred_check_branch
        %412 = sbr.rel (%p410) target = $region60
      $region59: #{cnn4d_forward_pallas.1} parent=27 // pred_region
        %p413 = scmp.lt.s32.totalorder %s25, 1
        %s414 = scalar_select %p413, %s25, 1
        %s415 = smul.addr %s414, 3
        %s416 = smul.addr %s415, 8
        %s417 = scalar_lea.vmem %s10, %s416
      $region60: #{cnn4d_forward_pallas.1} parent=27 // pred_fallthru
        _
    $region28: #{cnn4d_forward_pallas.1} parent=5 // pred_fallthru
      _
    %p418 = scmp.le.s32.totalorder 1, %s17
    %p419 = scmp.lt.s32.totalorder %s17, 5
    %p420 = pnand %p418, %p419
    %p421 = pneg %p420
    // Predicated region
    $region61: #{cnn4d_forward_pallas.1} parent=5 // pred_check
      _
    $region62: #{cnn4d_forward_pallas.1} parent=5 // pred_check_branch
      %423 = sbr.rel (%p420) target = $region64
    $region63: #{cnn4d_forward_pallas.1} parent=5 // pred_region
      %s424 = ssub.s32 %s17, 1
      %p425 = scmp.lt.s32.totalorder %s26, 1
      %s426 = scalar_select %p425, %s26, 1
      %s427 = smul.addr %s426, 12
      %s428 = smul.addr %s427, 8
      %s429 = scalar_lea.vmem %s0, %s428
      %p430 = pneg %p55
      %p431 = pneg %p52
      %p432 = scmp.lt.s32.totalorder %s26, 1
      %s433 = scalar_select %p432, %s26, 1
      %s434 = smul.addr %s433, 12
      %s435 = smul.addr %s434, 8
      %s436 = scalar_lea.vmem %s1, %s435
      %p437 = pneg %p81
      %p438 = pneg %p78
      %p439 = pneg %p102
      %p440 = pneg %p99
      %p441 = pneg %p123
      %p442 = pneg %p120
      %p443 = pneg %p144
      %p444 = pneg %p141
      %p445 = scmp.lt.s32.totalorder %s27, 1
      %s446 = scalar_select %p445, %s27, 1
      %s447 = smul.addr %s446, 81
      %s448 = smul.addr %s447, 4
      %s449 = scalar_lea.vmem %s5, %s448
      %p450 = pneg %p170
      %p451 = pneg %p167
      %p452 = scmp.lt.s32.totalorder %s27, 1
      %s453 = scalar_select %p452, %s27, 1
      %s454 = smul.addr %s453, 3
      %s455 = smul.addr %s454, 8
      %s456 = scalar_lea.vmem %s6, %s455
      %p457 = pneg %p196
      %p458 = pneg %p193
      %p459 = scmp.lt.s32.totalorder %s27, 1
      %s460 = scalar_select %p459, %s27, 1
      %s461 = smul.addr %s460, 27
      %s462 = smul.addr %s461, 4
      %s463 = scalar_lea.vmem %s7, %s462
      %p464 = pneg %p222
      %p465 = pneg %p219
      %p466 = scmp.lt.s32.totalorder %s27, 1
      %s467 = scalar_select %p466, %s27, 1
      %s468 = smul.addr %s467, 3
      %s469 = smul.addr %s468, 8
      %s470 = scalar_lea.vmem %s8, %s469
      %p471 = pneg %p248
      %p472 = pneg %p245
      %p473 = scmp.lt.s32.totalorder %s27, 1
      %s474 = scalar_select %p473, %s27, 1
      %s475 = smul.addr %s474, 9
      %s476 = smul.addr %s475, 4
      %s477 = scalar_lea.vmem %s9, %s476
      %p478 = pneg %p274
      %p479 = pneg %p271
      %p480 = scmp.lt.s32.totalorder %s27, 1
      %s481 = scalar_select %p480, %s27, 1
      %s482 = smul.addr %s481, 3
      %s483 = smul.addr %s482, 8
      %s484 = scalar_lea.vmem %s10, %s483
      %p485 = pneg %p300
      %p486 = pneg %p297
      %p487 = pneg %p326
      %p488 = pneg %p323
      %p489 = scmp.lt.s32.totalorder %s26, 1
      %s490 = scalar_select %p489, %s26, 1
      %s491 = smul.addr %s490, 12
      %s492 = smul.addr %s491, 8
      %s493 = scalar_lea.vmem %s11, %s492
      %p494 = scmp.lt.s32.totalorder %s26, 1
      %s495 = scalar_select %p494, %s26, 1
      %s496 = smul.addr %s495, 12
      %s497 = smul.addr %s496, 8
      %s498 = scalar_lea.vmem %s0, %s497
      %p499 = scmp.lt.s32.totalorder %s26, 1
      %s500 = scalar_select %p499, %s26, 1
      %s501 = smul.addr %s500, 12
      %s502 = smul.addr %s501, 8
      %s503 = scalar_lea.vmem %s1, %s502
      %p504 = scmp.lt.s32.totalorder %s27, 1
      %s505 = scalar_select %p504, %s27, 1
      %s506 = smul.addr %s505, 81
      %s507 = smul.addr %s506, 4
      %s508 = scalar_lea.vmem %s5, %s507
      %p509 = scmp.lt.s32.totalorder %s27, 1
      %s510 = scalar_select %p509, %s27, 1
      %s511 = smul.addr %s510, 3
      %s512 = smul.addr %s511, 8
      %s513 = scalar_lea.vmem %s6, %s512
      %p514 = scmp.lt.s32.totalorder %s27, 1
      %s515 = scalar_select %p514, %s27, 1
      %s516 = smul.addr %s515, 27
      %s517 = smul.addr %s516, 4
      %s518 = scalar_lea.vmem %s7, %s517
      %p519 = scmp.lt.s32.totalorder %s27, 1
      %s520 = scalar_select %p519, %s27, 1
      %s521 = smul.addr %s520, 3
      %s522 = smul.addr %s521, 8
      %s523 = scalar_lea.vmem %s8, %s522
      %p524 = scmp.lt.s32.totalorder %s27, 1
      %s525 = scalar_select %p524, %s27, 1
      %s526 = smul.addr %s525, 9
      %s527 = smul.addr %s526, 4
      %s528 = scalar_lea.vmem %s9, %s527
      %p529 = scmp.lt.s32.totalorder %s27, 1
      %s530 = scalar_select %p529, %s27, 1
      %s531 = smul.addr %s530, 3
      %s532 = smul.addr %s531, 8
      %s533 = scalar_lea.vmem %s10, %s532
      %p534 = scmp.lt.s32.totalorder %s26, 1
      %s535 = scalar_select %p534, %s26, 1
      %s536 = smul.addr %s535, 12
      %s537 = smul.addr %s536, 8
      %s538 = scalar_lea.vmem %s11, %s537
      %p540 = scmp.eq.s32.totalorder %s27, 0
      // Predicated region
      $region65: #{cnn4d_forward_pallas.1} parent=63 // pred_check
        %p541 = pneg %p540
      $region66: #{cnn4d_forward_pallas.1} parent=63 // pred_check_branch
        %543 = sbr.rel (%p541) target = $region68
      $region67: #{cnn4d_forward_pallas.1} parent=63 // pred_region
        %v544 = vld [vmem:[%s498] sm:$0xff]
        %v545 = vld [vmem:[%s498 + $0x8] sm:$0xff]
        %v546 = vld [vmem:[%s498 + $0x10] sm:$0xff]
        %v547 = vld [vmem:[%s498 + $0x18] sm:$0xff]
        %v548 = vld [vmem:[%s498 + $0x20] sm:$0xff]
        %v549 = vld [vmem:[%s498 + $0x28] sm:$0xff]
        %v550 = vld [vmem:[%s498 + $0x30] sm:$0xff]
        %v551 = vld [vmem:[%s498 + $0x38] sm:$0xff]
        %v552 = vld [vmem:[%s498 + $0x40] sm:$0xff]
        %v553 = vld [vmem:[%s498 + $0x48] sm:$0xff]
        %v554 = vld [vmem:[%s498 + $0x50] sm:$0xff]
        %v555 = vld [vmem:[%s498 + $0x58] sm:$0xff]
        %556 = vst [vmem:[#allocation2] sm:$0xff] %v544
        %557 = vst [vmem:[#allocation2 + $0x8] sm:$0xff] %v545
        %558 = vst [vmem:[#allocation2 + $0x10] sm:$0xff] %v546
        %559 = vst [vmem:[#allocation2 + $0x18] sm:$0xff] %v547
        %560 = vst [vmem:[#allocation2 + $0x20] sm:$0xff] %v548
        %561 = vst [vmem:[#allocation2 + $0x28] sm:$0xff] %v549
        %562 = vst [vmem:[#allocation2 + $0x30] sm:$0xff] %v550
        %563 = vst [vmem:[#allocation2 + $0x38] sm:$0xff] %v551
        %564 = vst [vmem:[#allocation2 + $0x40] sm:$0xff] %v552
        %565 = vst [vmem:[#allocation2 + $0x48] sm:$0xff] %v553
        %566 = vst [vmem:[#allocation2 + $0x50] sm:$0xff] %v554
        %567 = vst [vmem:[#allocation2 + $0x58] sm:$0xff] %v555
        %v568 = vld [vmem:[%s503] sm:$0xff]
        %v569 = vld [vmem:[%s503 + $0x8] sm:$0xff]
        %v570 = vld [vmem:[%s503 + $0x10] sm:$0xff]
        %v571 = vld [vmem:[%s503 + $0x18] sm:$0xff]
        %v572 = vld [vmem:[%s503 + $0x20] sm:$0xff]
        %v573 = vld [vmem:[%s503 + $0x28] sm:$0xff]
        %v574 = vld [vmem:[%s503 + $0x30] sm:$0xff]
        %v575 = vld [vmem:[%s503 + $0x38] sm:$0xff]
        %v576 = vld [vmem:[%s503 + $0x40] sm:$0xff]
        %v577 = vld [vmem:[%s503 + $0x48] sm:$0xff]
        %v578 = vld [vmem:[%s503 + $0x50] sm:$0xff]
        %v579 = vld [vmem:[%s503 + $0x58] sm:$0xff]
        %580 = vst [vmem:[#allocation2 + $0x60] sm:$0xff] %v568
        %581 = vst [vmem:[#allocation2 + $0x68] sm:$0xff] %v569
        %582 = vst [vmem:[#allocation2 + $0x70] sm:$0xff] %v570
        %583 = vst [vmem:[#allocation2 + $0x78] sm:$0xff] %v571
        %584 = vst [vmem:[#allocation2 + $0x80] sm:$0xff] %v572
        %585 = vst [vmem:[#allocation2 + $0x88] sm:$0xff] %v573
        %586 = vst [vmem:[#allocation2 + $0x90] sm:$0xff] %v574
        %587 = vst [vmem:[#allocation2 + $0x98] sm:$0xff] %v575
        %588 = vst [vmem:[#allocation2 + $0xa0] sm:$0xff] %v576
        %589 = vst [vmem:[#allocation2 + $0xa8] sm:$0xff] %v577
        %590 = vst [vmem:[#allocation2 + $0xb0] sm:$0xff] %v578
        %591 = vst [vmem:[#allocation2 + $0xb8] sm:$0xff] %v579
      $region68: #{cnn4d_forward_pallas.1} parent=63 // pred_fallthru
        _
      %p592 = scmp.gt.s32.totalorder %s27, 0
      // Predicated region
      $region69: #{cnn4d_forward_pallas.1} parent=63 // pred_check
        %p593 = pneg %p592
      $region70: #{cnn4d_forward_pallas.1} parent=63 // pred_check_branch
        %595 = sbr.rel (%p593) target = $region72
      $region71: #{cnn4d_forward_pallas.1} parent=63 // pred_region
        %v596 = vld [vmem:[%s538] sm:$0xff]
        %v597 = vld [vmem:[%s538 + $0x8] sm:$0xff]
        %v598 = vld [vmem:[%s538 + $0x10] sm:$0xff]
        %v599 = vld [vmem:[%s538 + $0x18] sm:$0xff]
        %v600 = vld [vmem:[%s538 + $0x20] sm:$0xff]
        %v601 = vld [vmem:[%s538 + $0x28] sm:$0xff]
        %v602 = vld [vmem:[%s538 + $0x30] sm:$0xff]
        %v603 = vld [vmem:[%s538 + $0x38] sm:$0xff]
        %v604 = vld [vmem:[%s538 + $0x40] sm:$0xff]
        %v605 = vld [vmem:[%s538 + $0x48] sm:$0xff]
        %v606 = vld [vmem:[%s538 + $0x50] sm:$0xff]
        %v607 = vld [vmem:[%s538 + $0x58] sm:$0xff]
        %608 = vst [vmem:[#allocation2] sm:$0xff] %v596
        %609 = vst [vmem:[#allocation2 + $0x8] sm:$0xff] %v597
        %610 = vst [vmem:[#allocation2 + $0x10] sm:$0xff] %v598
        %611 = vst [vmem:[#allocation2 + $0x18] sm:$0xff] %v599
        %612 = vst [vmem:[#allocation2 + $0x20] sm:$0xff] %v600
        %613 = vst [vmem:[#allocation2 + $0x28] sm:$0xff] %v601
        %614 = vst [vmem:[#allocation2 + $0x30] sm:$0xff] %v602
        %615 = vst [vmem:[#allocation2 + $0x38] sm:$0xff] %v603
        %616 = vst [vmem:[#allocation2 + $0x40] sm:$0xff] %v604
        %617 = vst [vmem:[#allocation2 + $0x48] sm:$0xff] %v605
        %618 = vst [vmem:[#allocation2 + $0x50] sm:$0xff] %v606
        %619 = vst [vmem:[#allocation2 + $0x58] sm:$0xff] %v607
      $region72: #{cnn4d_forward_pallas.1} parent=63 // pred_fallthru
        _
      %v620 = vld [vmem:[#allocation2] sm:$0xff]
      %v621 = vld [vmem:[#allocation2 + $0x8] sm:$0xff]
      %v622 = vld [vmem:[#allocation2 + $0x10] sm:$0xff]
      %v623 = vld [vmem:[#allocation2 + $0x18] sm:$0xff]
      %v624 = vld [vmem:[#allocation2 + $0x20] sm:$0xff]
      %v625 = vld [vmem:[#allocation2 + $0x28] sm:$0xff]
      %v626 = vld [vmem:[#allocation2 + $0x30] sm:$0xff]
      %v627 = vld [vmem:[#allocation2 + $0x38] sm:$0xff]
      %v628 = vld [vmem:[#allocation2 + $0x40] sm:$0xff]
      %v629 = vld [vmem:[#allocation2 + $0x48] sm:$0xff]
      %v630 = vld [vmem:[#allocation2 + $0x50] sm:$0xff]
      %v631 = vld [vmem:[#allocation2 + $0x58] sm:$0xff]
      %v632 = vld [vmem:[#allocation2 + $0x60] sm:$0xff]
      %v633 = vld [vmem:[#allocation2 + $0x68] sm:$0xff]
      %v634 = vld [vmem:[#allocation2 + $0x70] sm:$0xff]
      %v635 = vld [vmem:[#allocation2 + $0x78] sm:$0xff]
      %v636 = vld [vmem:[#allocation2 + $0x80] sm:$0xff]
      %v637 = vld [vmem:[#allocation2 + $0x88] sm:$0xff]
      %v638 = vld [vmem:[#allocation2 + $0x90] sm:$0xff]
      %v639 = vld [vmem:[#allocation2 + $0x98] sm:$0xff]
      %v640 = vld [vmem:[#allocation2 + $0xa0] sm:$0xff]
      %v641 = vld [vmem:[#allocation2 + $0xa8] sm:$0xff]
      %v642 = vld [vmem:[#allocation2 + $0xb0] sm:$0xff]
      %v643 = vld [vmem:[#allocation2 + $0xb8] sm:$0xff]
      %v644 = vld [vmem:[%s508] sm:$0xf]
      %v645 = vld [vmem:[%s508 + $0x4] sm:$0xf]
      %v646 = vld [vmem:[%s508 + $0x8] sm:$0xf]
      %v647 = vld [vmem:[%s508 + $0xc] sm:$0xf]
      %v648 = vld [vmem:[%s508 + $0x10] sm:$0xf]
      %v649 = vld [vmem:[%s508 + $0x14] sm:$0xf]
      %v650 = vld [vmem:[%s508 + $0x18] sm:$0xf]
      %v651 = vld [vmem:[%s508 + $0x1c] sm:$0xf]
      %v652 = vld [vmem:[%s508 + $0x20] sm:$0xf]
      %v653 = vld [vmem:[%s508 + $0x24] sm:$0xf]
      %v654 = vld [vmem:[%s508 + $0x28] sm:$0xf]
      %v655 = vld [vmem:[%s508 + $0x2c] sm:$0xf]
      %v656 = vld [vmem:[%s508 + $0x30] sm:$0xf]
      %v657 = vld [vmem:[%s508 + $0x34] sm:$0xf]
      %v658 = vld [vmem:[%s508 + $0x38] sm:$0xf]
      %v659 = vld [vmem:[%s508 + $0x3c] sm:$0xf]
      %v660 = vld [vmem:[%s508 + $0x40] sm:$0xf]
      %v661 = vld [vmem:[%s508 + $0x44] sm:$0xf]
      %v662 = vld [vmem:[%s508 + $0x48] sm:$0xf]
      %v663 = vld [vmem:[%s508 + $0x4c] sm:$0xf]
      %v664 = vld [vmem:[%s508 + $0x50] sm:$0xf]
      %v665 = vld [vmem:[%s508 + $0x54] sm:$0xf]
      %v666 = vld [vmem:[%s508 + $0x58] sm:$0xf]
      %v667 = vld [vmem:[%s508 + $0x5c] sm:$0xf]
      %v668 = vld [vmem:[%s508 + $0x60] sm:$0xf]
      %v669 = vld [vmem:[%s508 + $0x64] sm:$0xf]
      %v670 = vld [vmem:[%s508 + $0x68] sm:$0xf]
      %v671 = vld [vmem:[%s508 + $0x6c] sm:$0xf]
      %v672 = vld [vmem:[%s508 + $0x70] sm:$0xf]
      %v673 = vld [vmem:[%s508 + $0x74] sm:$0xf]
      %v674 = vld [vmem:[%s508 + $0x78] sm:$0xf]
      %v675 = vld [vmem:[%s508 + $0x7c] sm:$0xf]
      %v676 = vld [vmem:[%s508 + $0x80] sm:$0xf]
      %v677 = vld [vmem:[%s508 + $0x84] sm:$0xf]
      %v678 = vld [vmem:[%s508 + $0x88] sm:$0xf]
      %v679 = vld [vmem:[%s508 + $0x8c] sm:$0xf]
      %v680 = vld [vmem:[%s508 + $0x90] sm:$0xf]
      %v681 = vld [vmem:[%s508 + $0x94] sm:$0xf]
      %v682 = vld [vmem:[%s508 + $0x98] sm:$0xf]
      %v683 = vld [vmem:[%s508 + $0x9c] sm:$0xf]
      %v684 = vld [vmem:[%s508 + $0xa0] sm:$0xf]
      %v685 = vld [vmem:[%s508 + $0xa4] sm:$0xf]
      %v686 = vld [vmem:[%s508 + $0xa8] sm:$0xf]
      %v687 = vld [vmem:[%s508 + $0xac] sm:$0xf]
      %v688 = vld [vmem:[%s508 + $0xb0] sm:$0xf]
      %v689 = vld [vmem:[%s508 + $0xb4] sm:$0xf]
      %v690 = vld [vmem:[%s508 + $0xb8] sm:$0xf]
      %v691 = vld [vmem:[%s508 + $0xbc] sm:$0xf]
      %v692 = vld [vmem:[%s508 + $0xc0] sm:$0xf]
      %v693 = vld [vmem:[%s508 + $0xc4] sm:$0xf]
      %v694 = vld [vmem:[%s508 + $0xc8] sm:$0xf]
      %v695 = vld [vmem:[%s508 + $0xcc] sm:$0xf]
      %v696 = vld [vmem:[%s508 + $0xd0] sm:$0xf]
      %v697 = vld [vmem:[%s508 + $0xd4] sm:$0xf]
      %v698 = vld [vmem:[%s508 + $0xd8] sm:$0xf]
      %v699 = vld [vmem:[%s508 + $0xdc] sm:$0xf]
      %v700 = vld [vmem:[%s508 + $0xe0] sm:$0xf]
      %v701 = vld [vmem:[%s508 + $0xe4] sm:$0xf]
      %v702 = vld [vmem:[%s508 + $0xe8] sm:$0xf]
      %v703 = vld [vmem:[%s508 + $0xec] sm:$0xf]
      %v704 = vld [vmem:[%s508 + $0xf0] sm:$0xf]
      %v705 = vld [vmem:[%s508 + $0xf4] sm:$0xf]
      %v706 = vld [vmem:[%s508 + $0xf8] sm:$0xf]
      %v707 = vld [vmem:[%s508 + $0xfc] sm:$0xf]
      %v708 = vld [vmem:[%s508 + $0x100] sm:$0xf]
      %v709 = vld [vmem:[%s508 + $0x104] sm:$0xf]
      %v710 = vld [vmem:[%s508 + $0x108] sm:$0xf]
      %v711 = vld [vmem:[%s508 + $0x10c] sm:$0xf]
      %v712 = vld [vmem:[%s508 + $0x110] sm:$0xf]
      %v713 = vld [vmem:[%s508 + $0x114] sm:$0xf]
      %v714 = vld [vmem:[%s508 + $0x118] sm:$0xf]
      %v715 = vld [vmem:[%s508 + $0x11c] sm:$0xf]
      %v716 = vld [vmem:[%s508 + $0x120] sm:$0xf]
      %v717 = vld [vmem:[%s508 + $0x124] sm:$0xf]
      %v718 = vld [vmem:[%s508 + $0x128] sm:$0xf]
      %v719 = vld [vmem:[%s508 + $0x12c] sm:$0xf]
      %v720 = vld [vmem:[%s508 + $0x130] sm:$0xf]
      %v721 = vld [vmem:[%s508 + $0x134] sm:$0xf]
      %v722 = vld [vmem:[%s508 + $0x138] sm:$0xf]
      %v723 = vld [vmem:[%s508 + $0x13c] sm:$0xf]
      %v724 = vld [vmem:[%s508 + $0x140] sm:$0xf]
      %v725 = vpack.c.bf16 %v624, %v620
      %v726 = vpack.c.bf16 %v625, %v621
      %v727 = vpack.c.bf16 %v626, %v622
      %v728 = vpack.c.bf16 %v627, %v623
      %v729 = vpack.c.bf16 %v632, %v628
      %v730 = vpack.c.bf16 %v633, %v629
      %v731 = vpack.c.bf16 %v634, %v630
      %v732 = vpack.c.bf16 %v635, %v631
      %v733 = vpack.c.bf16 %v640, %v636
      %v734 = vpack.c.bf16 %v641, %v637
      %v735 = vpack.c.bf16 %v642, %v638
      %v736 = vpack.c.bf16 %v643, %v639
      %v818 = vunpack.c.l.b16 %v644
      %v819 = vunpack.c.l.b16 %v645
      %v820 = vunpack.c.l.b16 %v646
      %v821 = vunpack.c.l.b16 %v647
      %v822 = vunpack.c.l.b16 %v648
      %v823 = vunpack.c.l.b16 %v649
      %v824 = vunpack.c.l.b16 %v650
      %v825 = vunpack.c.l.b16 %v651
      %v826 = vunpack.c.l.b16 %v652
      %v827 = vunpack.c.l.b16 %v653
      %v828 = vunpack.c.l.b16 %v654
      %v829 = vunpack.c.l.b16 %v655
      %v830 = vunpack.c.l.b16 %v656
      %v831 = vunpack.c.l.b16 %v657
      %v832 = vunpack.c.l.b16 %v658
      %v833 = vunpack.c.l.b16 %v659
      %v834 = vunpack.c.l.b16 %v660
      %v835 = vunpack.c.l.b16 %v661
      %v836 = vunpack.c.l.b16 %v662
      %v837 = vunpack.c.l.b16 %v663
      %v838 = vunpack.c.l.b16 %v664
      %v839 = vunpack.c.l.b16 %v665
      %v840 = vunpack.c.l.b16 %v666
      %v841 = vunpack.c.l.b16 %v667
      %v842 = vunpack.c.l.b16 %v668
      %v843 = vunpack.c.l.b16 %v669
      %v844 = vunpack.c.l.b16 %v670
      %v845 = vunpack.c.l.b16 %v671
      %v846 = vunpack.c.l.b16 %v672
      %v847 = vunpack.c.l.b16 %v673
      %v848 = vunpack.c.l.b16 %v674
      %v849 = vunpack.c.l.b16 %v675
      %v850 = vunpack.c.l.b16 %v676
      %v851 = vunpack.c.l.b16 %v677
      %v852 = vunpack.c.l.b16 %v678
      %v853 = vunpack.c.l.b16 %v679
      %v854 = vunpack.c.l.b16 %v680
      %v855 = vunpack.c.l.b16 %v681
      %v856 = vunpack.c.l.b16 %v682
      %v857 = vunpack.c.l.b16 %v683
      %v858 = vunpack.c.l.b16 %v684
      %v859 = vunpack.c.l.b16 %v685
      %v860 = vunpack.c.l.b16 %v686
      %v861 = vunpack.c.l.b16 %v687
      %v862 = vunpack.c.l.b16 %v688
      %v863 = vunpack.c.l.b16 %v689
      %v864 = vunpack.c.l.b16 %v690
      %v865 = vunpack.c.l.b16 %v691
      %v866 = vunpack.c.l.b16 %v692
      %v867 = vunpack.c.l.b16 %v693
      %v868 = vunpack.c.l.b16 %v694
      %v869 = vunpack.c.l.b16 %v695
      %v870 = vunpack.c.l.b16 %v696
      %v871 = vunpack.c.l.b16 %v697
      %v872 = vunpack.c.l.b16 %v698
      %v873 = vunpack.c.l.b16 %v699
      %v874 = vunpack.c.l.b16 %v700
      %v875 = vunpack.c.l.b16 %v701
      %v876 = vunpack.c.l.b16 %v702
      %v877 = vunpack.c.l.b16 %v703
      %v878 = vunpack.c.l.b16 %v704
      %v879 = vunpack.c.l.b16 %v705
      %v880 = vunpack.c.l.b16 %v706
      %v881 = vunpack.c.l.b16 %v707
      %v882 = vunpack.c.l.b16 %v708
      %v883 = vunpack.c.l.b16 %v709
      %v884 = vunpack.c.l.b16 %v710
      %v885 = vunpack.c.l.b16 %v711
      %v886 = vunpack.c.l.b16 %v712
      %v887 = vunpack.c.l.b16 %v713
      %v888 = vunpack.c.l.b16 %v714
      %v889 = vunpack.c.l.b16 %v715
      %v890 = vunpack.c.l.b16 %v716
      %v891 = vunpack.c.l.b16 %v717
      %v892 = vunpack.c.l.b16 %v718
      %v893 = vunpack.c.l.b16 %v719
      %v894 = vunpack.c.l.b16 %v720
      %v895 = vunpack.c.l.b16 %v721
      %v896 = vunpack.c.l.b16 %v722
      %v897 = vunpack.c.l.b16 %v723
      %v898 = vunpack.c.l.b16 %v724
      %v899 = vpack.c.b16 %v819, %v818
      %v900 = vpack.c.b16 %v821, %v820
      %v901 = vpack.c.b16 %v823, %v822
      %v902 = vpack.c.b16 %v825, %v824
      %v903 = vpack.c.b16 %v827, %v826
      %v904 = vpack.c.b16 %v829, %v828
      %v905 = vpack.c.b16 %v831, %v830
      %v906 = vpack.c.b16 %v833, %v832
      %v907 = vpack.c.b16 %v835, %v834
      %v908 = vpack.c.b16 %v837, %v836
      %v909 = vpack.c.b16 %v839, %v838
      %v910 = vpack.c.b16 %v841, %v840
      %v911 = vpack.c.b16 %v843, %v842
      %v912 = vpack.c.b16 %v845, %v844
      %v913 = vpack.c.b16 %v847, %v846
      %v914 = vpack.c.b16 %v849, %v848
      %v915 = vpack.c.b16 %v851, %v850
      %v916 = vpack.c.b16 %v853, %v852
      %v917 = vpack.c.b16 %v855, %v854
      %v918 = vpack.c.b16 %v857, %v856
      %v919 = vpack.c.b16 %v859, %v858
      %v920 = vpack.c.b16 %v861, %v860
      %v921 = vpack.c.b16 %v863, %v862
      %v922 = vpack.c.b16 %v865, %v864
      %v923 = vpack.c.b16 %v867, %v866
      %v924 = vpack.c.b16 %v869, %v868
      %v925 = vpack.c.b16 %v871, %v870
      %v926 = vpack.c.b16 %v873, %v872
      %v927 = vpack.c.b16 %v875, %v874
      %v928 = vpack.c.b16 %v877, %v876
      %v929 = vpack.c.b16 %v879, %v878
      %v930 = vpack.c.b16 %v881, %v880
      %v931 = vpack.c.b16 %v883, %v882
      %v932 = vpack.c.b16 %v885, %v884
      %v933 = vpack.c.b16 %v887, %v886
      %v934 = vpack.c.b16 %v889, %v888
      %v935 = vpack.c.b16 %v891, %v890
      %v936 = vpack.c.b16 %v893, %v892
      %v937 = vpack.c.b16 %v895, %v894
      %v938 = vpack.c.b16 %v897, %v896
      %v939 = vpack.c.b16 %v898, %v898
      %vm940 = vcmask 392192
      %v942 = vsel %vm940, %v899, 0
      %v945 = vsel %vm940, %v900, 0
      %v948 = vsel %vm940, %v901, 0
      %v951 = vsel %vm940, %v902, 0
      %v954 = vsel %vm940, %v903, 0
      %v957 = vsel %vm940, %v904, 0
      %v960 = vsel %vm940, %v905, 0
      %v963 = vsel %vm940, %v906, 0
      %v966 = vsel %vm940, %v907, 0
      %v969 = vsel %vm940, %v908, 0
      %v972 = vsel %vm940, %v909, 0
      %v975 = vsel %vm940, %v910, 0
      %v978 = vsel %vm940, %v911, 0
      %v981 = vsel %vm940, %v912, 0
      %v984 = vsel %vm940, %v913, 0
      %v987 = vsel %vm940, %v914, 0
      %v990 = vsel %vm940, %v915, 0
      %v993 = vsel %vm940, %v916, 0
      %v996 = vsel %vm940, %v917, 0
      %v999 = vsel %vm940, %v918, 0
      %v1002 = vsel %vm940, %v919, 0
      %v1005 = vsel %vm940, %v920, 0
      %v1008 = vsel %vm940, %v921, 0
      %v1011 = vsel %vm940, %v922, 0
      %v1014 = vsel %vm940, %v923, 0
      %v1017 = vsel %vm940, %v924, 0
      %v1020 = vsel %vm940, %v925, 0
      %v1023 = vsel %vm940, %v926, 0
      %v1026 = vsel %vm940, %v927, 0
      %v1029 = vsel %vm940, %v928, 0
      %v1032 = vsel %vm940, %v929, 0
      %v1035 = vsel %vm940, %v930, 0
      %v1038 = vsel %vm940, %v931, 0
      %v1041 = vsel %vm940, %v932, 0
      %v1044 = vsel %vm940, %v933, 0
      %v1047 = vsel %vm940, %v934, 0
      %v1050 = vsel %vm940, %v935, 0
      %v1053 = vsel %vm940, %v936, 0
      %v1056 = vsel %vm940, %v937, 0
      %v1059 = vsel %vm940, %v938, 0
      %v1062 = vsel %vm940, %v939, 0
      %1064 = vmatpush.bf16.msra.mxu0 0
      %1065 = vmatpush.bf16.msra.mxu0 0
      %1066 = vmatpush.bf16.msra.mxu0 0
      %1067 = vmatpush.bf16.msra.mxu0 0
      %1068 = vmatpush.bf16.msra.mxu0 0
      %1069 = vmatpush.bf16.msra.mxu0 %v733
      %1070 = vmatpush.bf16.msra.mxu0 %v729
      %1071 = vmatpush.bf16.msra.mxu0 %v725
      %1072 = vmatmul.bf16.gmra.mxu0 %v942
      %v1073 = vpop.f32.mrf.mxu0
      %v1074 = vadd.f32 0.0, %v1073
      %v1075 = vpop.f32.mrf.mxu0
      %v1076 = vadd.f32 0.0, %v1075
      %1077 = vmatmul.bf16.gmra.mxu0 %v945
      %v1078 = vpop.f32.mrf.mxu0
      %v1079 = vadd.f32 0.0, %v1078
      %v1080 = vpop.f32.mrf.mxu0
      %v1081 = vadd.f32 0.0, %v1080
      %1082 = vmatmul.bf16.gmra.mxu0 %v948
      %v1083 = vpop.f32.mrf.mxu0
      %v1084 = vadd.f32 0.0, %v1083
      %v1085 = vpop.f32.mrf.mxu0
      %v1086 = vadd.f32 0.0, %v1085
      %1087 = vmatmul.bf16.gmra.mxu0 %v951
      %v1088 = vpop.f32.mrf.mxu0
      %v1089 = vadd.f32 0.0, %v1088
      %v1090 = vpop.f32.mrf.mxu0
      %v1091 = vadd.f32 0.0, %v1090
      %1092 = vmatmul.bf16.gmra.mxu0 %v954
      %v1093 = vpop.f32.mrf.mxu0
      %v1094 = vadd.f32 0.0, %v1093
      %v1095 = vpop.f32.mrf.mxu0
      %v1096 = vadd.f32 0.0, %v1095
      %1097 = vmatmul.bf16.gmra.mxu0 %v957
      %v1098 = vpop.f32.mrf.mxu0
      %v1099 = vadd.f32 0.0, %v1098
      %v1100 = vpop.f32.mrf.mxu0
      %v1101 = vadd.f32 0.0, %v1100
      %1102 = vmatmul.bf16.gmra.mxu0 %v960
      %v1103 = vpop.f32.mrf.mxu0
      %v1104 = vadd.f32 0.0, %v1103
      %v1105 = vpop.f32.mrf.mxu0
      %v1106 = vadd.f32 0.0, %v1105
      %1107 = vmatmul.bf16.gmra.mxu0 %v963
      %v1108 = vpop.f32.mrf.mxu0
      %v1109 = vadd.f32 0.0, %v1108
      %v1110 = vpop.f32.mrf.mxu0
      %v1111 = vadd.f32 0.0, %v1110
      %1112 = vmatmul.bf16.gmra.mxu0 %v966
      %v1113 = vpop.f32.mrf.mxu0
      %v1114 = vadd.f32 0.0, %v1113
      %v1115 = vpop.f32.mrf.mxu0
      %v1116 = vadd.f32 0.0, %v1115
      %1117 = vmatmul.bf16.gmra.mxu0 %v969
      %v1118 = vpop.f32.mrf.mxu0
      %v1119 = vadd.f32 0.0, %v1118
      %v1120 = vpop.f32.mrf.mxu0
      %v1121 = vadd.f32 0.0, %v1120
      %1122 = vmatmul.bf16.gmra.mxu0 %v972
      %v1123 = vpop.f32.mrf.mxu0
      %v1124 = vadd.f32 0.0, %v1123
      %v1125 = vpop.f32.mrf.mxu0
      %v1126 = vadd.f32 0.0, %v1125
      %1127 = vmatmul.bf16.gmra.mxu0 %v975
      %v1128 = vpop.f32.mrf.mxu0
      %v1129 = vadd.f32 0.0, %v1128
      %v1130 = vpop.f32.mrf.mxu0
      %v1131 = vadd.f32 0.0, %v1130
      %1132 = vmatmul.bf16.gmra.mxu0 %v978
      %v1133 = vpop.f32.mrf.mxu0
      %v1134 = vadd.f32 0.0, %v1133
      %v1135 = vpop.f32.mrf.mxu0
      %v1136 = vadd.f32 0.0, %v1135
      %1137 = vmatmul.bf16.gmra.mxu0 %v981
      %v1138 = vpop.f32.mrf.mxu0
      %v1139 = vadd.f32 0.0, %v1138
      %v1140 = vpop.f32.mrf.mxu0
      %v1141 = vadd.f32 0.0, %v1140
      %1142 = vmatmul.bf16.gmra.mxu0 %v984
      %v1143 = vpop.f32.mrf.mxu0
      %v1144 = vadd.f32 0.0, %v1143
      %v1145 = vpop.f32.mrf.mxu0
      %v1146 = vadd.f32 0.0, %v1145
      %1147 = vmatmul.bf16.gmra.mxu0 %v987
      %v1148 = vpop.f32.mrf.mxu0
      %v1149 = vadd.f32 0.0, %v1148
      %v1150 = vpop.f32.mrf.mxu0
      %v1151 = vadd.f32 0.0, %v1150
      %1152 = vmatmul.bf16.gmra.mxu0 %v990
      %v1153 = vpop.f32.mrf.mxu0
      %v1154 = vadd.f32 0.0, %v1153
      %v1155 = vpop.f32.mrf.mxu0
      %v1156 = vadd.f32 0.0, %v1155
      %1157 = vmatmul.bf16.gmra.mxu0 %v993
      %v1158 = vpop.f32.mrf.mxu0
      %v1159 = vadd.f32 0.0, %v1158
      %v1160 = vpop.f32.mrf.mxu0
      %v1161 = vadd.f32 0.0, %v1160
      %1162 = vmatmul.bf16.gmra.mxu0 %v996
      %v1163 = vpop.f32.mrf.mxu0
      %v1164 = vadd.f32 0.0, %v1163
      %v1165 = vpop.f32.mrf.mxu0
      %v1166 = vadd.f32 0.0, %v1165
      %1167 = vmatmul.bf16.gmra.mxu0 %v999
      %v1168 = vpop.f32.mrf.mxu0
      %v1169 = vadd.f32 0.0, %v1168
      %v1170 = vpop.f32.mrf.mxu0
      %v1171 = vadd.f32 0.0, %v1170
      %1172 = vmatmul.bf16.gmra.mxu0 %v1002
      %v1173 = vpop.f32.mrf.mxu0
      %v1174 = vadd.f32 0.0, %v1173
      %v1175 = vpop.f32.mrf.mxu0
      %v1176 = vadd.f32 0.0, %v1175
      %1177 = vmatmul.bf16.gmra.mxu0 %v1005
      %v1178 = vpop.f32.mrf.mxu0
      %v1179 = vadd.f32 0.0, %v1178
      %v1180 = vpop.f32.mrf.mxu0
      %v1181 = vadd.f32 0.0, %v1180
      %1182 = vmatmul.bf16.gmra.mxu0 %v1008
      %v1183 = vpop.f32.mrf.mxu0
      %v1184 = vadd.f32 0.0, %v1183
      %v1185 = vpop.f32.mrf.mxu0
      %v1186 = vadd.f32 0.0, %v1185
      %1187 = vmatmul.bf16.gmra.mxu0 %v1011
      %v1188 = vpop.f32.mrf.mxu0
      %v1189 = vadd.f32 0.0, %v1188
      %v1190 = vpop.f32.mrf.mxu0
      %v1191 = vadd.f32 0.0, %v1190
      %1192 = vmatmul.bf16.gmra.mxu0 %v1014
      %v1193 = vpop.f32.mrf.mxu0
      %v1194 = vadd.f32 0.0, %v1193
      %v1195 = vpop.f32.mrf.mxu0
      %v1196 = vadd.f32 0.0, %v1195
      %1197 = vmatmul.bf16.gmra.mxu0 %v1017
      %v1198 = vpop.f32.mrf.mxu0
      %v1199 = vadd.f32 0.0, %v1198
      %v1200 = vpop.f32.mrf.mxu0
      %v1201 = vadd.f32 0.0, %v1200
      %1202 = vmatmul.bf16.gmra.mxu0 %v1020
      %v1203 = vpop.f32.mrf.mxu0
      %v1204 = vadd.f32 0.0, %v1203
      %v1205 = vpop.f32.mrf.mxu0
      %v1206 = vadd.f32 0.0, %v1205
      %1207 = vmatmul.bf16.gmra.mxu0 %v1023
      %v1208 = vpop.f32.mrf.mxu0
      %v1209 = vadd.f32 0.0, %v1208
      %v1210 = vpop.f32.mrf.mxu0
      %v1211 = vadd.f32 0.0, %v1210
      %1212 = vmatmul.bf16.gmra.mxu0 %v1026
      %v1213 = vpop.f32.mrf.mxu0
      %v1214 = vadd.f32 0.0, %v1213
      %v1215 = vpop.f32.mrf.mxu0
      %v1216 = vadd.f32 0.0, %v1215
      %1217 = vmatmul.bf16.gmra.mxu0 %v1029
      %v1218 = vpop.f32.mrf.mxu0
      %v1219 = vadd.f32 0.0, %v1218
      %v1220 = vpop.f32.mrf.mxu0
      %v1221 = vadd.f32 0.0, %v1220
      %1222 = vmatmul.bf16.gmra.mxu0 %v1032
      %v1223 = vpop.f32.mrf.mxu0
      %v1224 = vadd.f32 0.0, %v1223
      %v1225 = vpop.f32.mrf.mxu0
      %v1226 = vadd.f32 0.0, %v1225
      %1227 = vmatmul.bf16.gmra.mxu0 %v1035
      %v1228 = vpop.f32.mrf.mxu0
      %v1229 = vadd.f32 0.0, %v1228
      %v1230 = vpop.f32.mrf.mxu0
      %v1231 = vadd.f32 0.0, %v1230
      %1232 = vmatmul.bf16.gmra.mxu0 %v1038
      %v1233 = vpop.f32.mrf.mxu0
      %v1234 = vadd.f32 0.0, %v1233
      %v1235 = vpop.f32.mrf.mxu0
      %v1236 = vadd.f32 0.0, %v1235
      %1237 = vmatmul.bf16.gmra.mxu0 %v1041
      %v1238 = vpop.f32.mrf.mxu0
      %v1239 = vadd.f32 0.0, %v1238
      %v1240 = vpop.f32.mrf.mxu0
      %v1241 = vadd.f32 0.0, %v1240
      %1242 = vmatmul.bf16.gmra.mxu0 %v1044
      %v1243 = vpop.f32.mrf.mxu0
      %v1244 = vadd.f32 0.0, %v1243
      %v1245 = vpop.f32.mrf.mxu0
      %v1246 = vadd.f32 0.0, %v1245
      %1247 = vmatmul.bf16.gmra.mxu0 %v1047
      %v1248 = vpop.f32.mrf.mxu0
      %v1249 = vadd.f32 0.0, %v1248
      %v1250 = vpop.f32.mrf.mxu0
      %v1251 = vadd.f32 0.0, %v1250
      %1252 = vmatmul.bf16.gmra.mxu0 %v1050
      %v1253 = vpop.f32.mrf.mxu0
      %v1254 = vadd.f32 0.0, %v1253
      %v1255 = vpop.f32.mrf.mxu0
      %v1256 = vadd.f32 0.0, %v1255
      %1257 = vmatmul.bf16.gmra.mxu0 %v1053
      %v1258 = vpop.f32.mrf.mxu0
      %v1259 = vadd.f32 0.0, %v1258
      %v1260 = vpop.f32.mrf.mxu0
      %v1261 = vadd.f32 0.0, %v1260
      %1262 = vmatmul.bf16.gmra.mxu0 %v1056
      %v1263 = vpop.f32.mrf.mxu0
      %v1264 = vadd.f32 0.0, %v1263
      %v1265 = vpop.f32.mrf.mxu0
      %v1266 = vadd.f32 0.0, %v1265
      %1267 = vmatmul.bf16.gmra.mxu0 %v1059
      %v1268 = vpop.f32.mrf.mxu0
      %v1269 = vadd.f32 0.0, %v1268
      %v1270 = vpop.f32.mrf.mxu0
      %v1271 = vadd.f32 0.0, %v1270
      %1272 = vmatmul.bf16.gmra.mxu0 %v1062
      %v1273 = vpop.f32.mrf.mxu0
      %v1274 = vadd.f32 0.0, %v1273
      %v1275 = vpop.f32.mrf.mxu0
      %1276 = vdwg.mxu0
      %1277 = vmatpush.bf16.msra.mxu0 0
      %1278 = vmatpush.bf16.msra.mxu0 0
      %1279 = vmatpush.bf16.msra.mxu0 0
      %1280 = vmatpush.bf16.msra.mxu0 0
      %1281 = vmatpush.bf16.msra.mxu0 0
      %1282 = vmatpush.bf16.msra.mxu0 %v734
      %1283 = vmatpush.bf16.msra.mxu0 %v730
      %1284 = vmatpush.bf16.msra.mxu0 %v726
      %1285 = vmatmul.bf16.gmra.mxu0 %v942
      %v1286 = vpop.f32.mrf.mxu0
      %v1287 = vadd.f32 0.0, %v1286
      %v1288 = vpop.f32.mrf.mxu0
      %v1289 = vadd.f32 0.0, %v1288
      %1290 = vmatmul.bf16.gmra.mxu0 %v945
      %v1291 = vpop.f32.mrf.mxu0
      %v1292 = vadd.f32 0.0, %v1291
      %v1293 = vpop.f32.mrf.mxu0
      %v1294 = vadd.f32 0.0, %v1293
      %1295 = vmatmul.bf16.gmra.mxu0 %v948
      %v1296 = vpop.f32.mrf.mxu0
      %v1297 = vadd.f32 0.0, %v1296
      %v1298 = vpop.f32.mrf.mxu0
      %v1299 = vadd.f32 0.0, %v1298
      %1300 = vmatmul.bf16.gmra.mxu0 %v951
      %v1301 = vpop.f32.mrf.mxu0
      %v1302 = vadd.f32 0.0, %v1301
      %v1303 = vpop.f32.mrf.mxu0
      %v1304 = vadd.f32 0.0, %v1303
      %1305 = vmatmul.bf16.gmra.mxu0 %v954
      %v1306 = vpop.f32.mrf.mxu0
      %v1307 = vadd.f32 0.0, %v1306
      %v1308 = vpop.f32.mrf.mxu0
      %v1309 = vadd.f32 0.0, %v1308
      %1310 = vmatmul.bf16.gmra.mxu0 %v957
      %v1311 = vpop.f32.mrf.mxu0
      %v1312 = vadd.f32 0.0, %v1311
      %v1313 = vpop.f32.mrf.mxu0
      %v1314 = vadd.f32 0.0, %v1313
      %1315 = vmatmul.bf16.gmra.mxu0 %v960
      %v1316 = vpop.f32.mrf.mxu0
      %v1317 = vadd.f32 0.0, %v1316
      %v1318 = vpop.f32.mrf.mxu0
      %v1319 = vadd.f32 0.0, %v1318
      %1320 = vmatmul.bf16.gmra.mxu0 %v963
      %v1321 = vpop.f32.mrf.mxu0
      %v1322 = vadd.f32 0.0, %v1321
      %v1323 = vpop.f32.mrf.mxu0
      %v1324 = vadd.f32 0.0, %v1323
      %1325 = vmatmul.bf16.gmra.mxu0 %v966
      %v1326 = vpop.f32.mrf.mxu0
      %v1327 = vadd.f32 0.0, %v1326
      %v1328 = vpop.f32.mrf.mxu0
      %v1329 = vadd.f32 0.0, %v1328
      %1330 = vmatmul.bf16.gmra.mxu0 %v969
      %v1331 = vpop.f32.mrf.mxu0
      %v1332 = vadd.f32 0.0, %v1331
      %v1333 = vpop.f32.mrf.mxu0
      %v1334 = vadd.f32 0.0, %v1333
      %1335 = vmatmul.bf16.gmra.mxu0 %v972
      %v1336 = vpop.f32.mrf.mxu0
      %v1337 = vadd.f32 0.0, %v1336
      %v1338 = vpop.f32.mrf.mxu0
      %v1339 = vadd.f32 0.0, %v1338
      %1340 = vmatmul.bf16.gmra.mxu0 %v975
      %v1341 = vpop.f32.mrf.mxu0
      %v1342 = vadd.f32 0.0, %v1341
      %v1343 = vpop.f32.mrf.mxu0
      %v1344 = vadd.f32 0.0, %v1343
      %1345 = vmatmul.bf16.gmra.mxu0 %v978
      %v1346 = vpop.f32.mrf.mxu0
      %v1347 = vadd.f32 0.0, %v1346
      %v1348 = vpop.f32.mrf.mxu0
      %v1349 = vadd.f32 0.0, %v1348
      %1350 = vmatmul.bf16.gmra.mxu0 %v981
      %v1351 = vpop.f32.mrf.mxu0
      %v1352 = vadd.f32 0.0, %v1351
      %v1353 = vpop.f32.mrf.mxu0
      %v1354 = vadd.f32 0.0, %v1353
      %1355 = vmatmul.bf16.gmra.mxu0 %v984
      %v1356 = vpop.f32.mrf.mxu0
      %v1357 = vadd.f32 0.0, %v1356
      %v1358 = vpop.f32.mrf.mxu0
      %v1359 = vadd.f32 0.0, %v1358
      %1360 = vmatmul.bf16.gmra.mxu0 %v987
      %v1361 = vpop.f32.mrf.mxu0
      %v1362 = vadd.f32 0.0, %v1361
      %v1363 = vpop.f32.mrf.mxu0
      %v1364 = vadd.f32 0.0, %v1363
      %1365 = vmatmul.bf16.gmra.mxu0 %v990
      %v1366 = vpop.f32.mrf.mxu0
      %v1367 = vadd.f32 0.0, %v1366
      %v1368 = vpop.f32.mrf.mxu0
      %v1369 = vadd.f32 0.0, %v1368
      %1370 = vmatmul.bf16.gmra.mxu0 %v993
      %v1371 = vpop.f32.mrf.mxu0
      %v1372 = vadd.f32 0.0, %v1371
      %v1373 = vpop.f32.mrf.mxu0
      %v1374 = vadd.f32 0.0, %v1373
      %1375 = vmatmul.bf16.gmra.mxu0 %v996
      %v1376 = vpop.f32.mrf.mxu0
      %v1377 = vadd.f32 0.0, %v1376
      %v1378 = vpop.f32.mrf.mxu0
      %v1379 = vadd.f32 0.0, %v1378
      %1380 = vmatmul.bf16.gmra.mxu0 %v999
      %v1381 = vpop.f32.mrf.mxu0
      %v1382 = vadd.f32 0.0, %v1381
      %v1383 = vpop.f32.mrf.mxu0
      %v1384 = vadd.f32 0.0, %v1383
      %1385 = vmatmul.bf16.gmra.mxu0 %v1002
      %v1386 = vpop.f32.mrf.mxu0
      %v1387 = vadd.f32 0.0, %v1386
      %v1388 = vpop.f32.mrf.mxu0
      %v1389 = vadd.f32 0.0, %v1388
      %1390 = vmatmul.bf16.gmra.mxu0 %v1005
      %v1391 = vpop.f32.mrf.mxu0
      %v1392 = vadd.f32 0.0, %v1391
      %v1393 = vpop.f32.mrf.mxu0
      %v1394 = vadd.f32 0.0, %v1393
      %1395 = vmatmul.bf16.gmra.mxu0 %v1008
      %v1396 = vpop.f32.mrf.mxu0
      %v1397 = vadd.f32 0.0, %v1396
      %v1398 = vpop.f32.mrf.mxu0
      %v1399 = vadd.f32 0.0, %v1398
      %1400 = vmatmul.bf16.gmra.mxu0 %v1011
      %v1401 = vpop.f32.mrf.mxu0
      %v1402 = vadd.f32 0.0, %v1401
      %v1403 = vpop.f32.mrf.mxu0
      %v1404 = vadd.f32 0.0, %v1403
      %1405 = vmatmul.bf16.gmra.mxu0 %v1014
      %v1406 = vpop.f32.mrf.mxu0
      %v1407 = vadd.f32 0.0, %v1406
      %v1408 = vpop.f32.mrf.mxu0
      %v1409 = vadd.f32 0.0, %v1408
      %1410 = vmatmul.bf16.gmra.mxu0 %v1017
      %v1411 = vpop.f32.mrf.mxu0
      %v1412 = vadd.f32 0.0, %v1411
      %v1413 = vpop.f32.mrf.mxu0
      %v1414 = vadd.f32 0.0, %v1413
      %1415 = vmatmul.bf16.gmra.mxu0 %v1020
      %v1416 = vpop.f32.mrf.mxu0
      %v1417 = vadd.f32 0.0, %v1416
      %v1418 = vpop.f32.mrf.mxu0
      %v1419 = vadd.f32 0.0, %v1418
      %1420 = vmatmul.bf16.gmra.mxu0 %v1023
      %v1421 = vpop.f32.mrf.mxu0
      %v1422 = vadd.f32 0.0, %v1421
      %v1423 = vpop.f32.mrf.mxu0
      %v1424 = vadd.f32 0.0, %v1423
      %1425 = vmatmul.bf16.gmra.mxu0 %v1026
      %v1426 = vpop.f32.mrf.mxu0
      %v1427 = vadd.f32 0.0, %v1426
      %v1428 = vpop.f32.mrf.mxu0
      %v1429 = vadd.f32 0.0, %v1428
      %1430 = vmatmul.bf16.gmra.mxu0 %v1029
      %v1431 = vpop.f32.mrf.mxu0
      %v1432 = vadd.f32 0.0, %v1431
      %v1433 = vpop.f32.mrf.mxu0
      %v1434 = vadd.f32 0.0, %v1433
      %1435 = vmatmul.bf16.gmra.mxu0 %v1032
      %v1436 = vpop.f32.mrf.mxu0
      %v1437 = vadd.f32 0.0, %v1436
      %v1438 = vpop.f32.mrf.mxu0
      %v1439 = vadd.f32 0.0, %v1438
      %1440 = vmatmul.bf16.gmra.mxu0 %v1035
      %v1441 = vpop.f32.mrf.mxu0
      %v1442 = vadd.f32 0.0, %v1441
      %v1443 = vpop.f32.mrf.mxu0
      %v1444 = vadd.f32 0.0, %v1443
      %1445 = vmatmul.bf16.gmra.mxu0 %v1038
      %v1446 = vpop.f32.mrf.mxu0
      %v1447 = vadd.f32 0.0, %v1446
      %v1448 = vpop.f32.mrf.mxu0
      %v1449 = vadd.f32 0.0, %v1448
      %1450 = vmatmul.bf16.gmra.mxu0 %v1041
      %v1451 = vpop.f32.mrf.mxu0
      %v1452 = vadd.f32 0.0, %v1451
      %v1453 = vpop.f32.mrf.mxu0
      %v1454 = vadd.f32 0.0, %v1453
      %1455 = vmatmul.bf16.gmra.mxu0 %v1044
      %v1456 = vpop.f32.mrf.mxu0
      %v1457 = vadd.f32 0.0, %v1456
      %v1458 = vpop.f32.mrf.mxu0
      %v1459 = vadd.f32 0.0, %v1458
      %1460 = vmatmul.bf16.gmra.mxu0 %v1047
      %v1461 = vpop.f32.mrf.mxu0
      %v1462 = vadd.f32 0.0, %v1461
      %v1463 = vpop.f32.mrf.mxu0
      %v1464 = vadd.f32 0.0, %v1463
      %1465 = vmatmul.bf16.gmra.mxu0 %v1050
      %v1466 = vpop.f32.mrf.mxu0
      %v1467 = vadd.f32 0.0, %v1466
      %v1468 = vpop.f32.mrf.mxu0
      %v1469 = vadd.f32 0.0, %v1468
      %1470 = vmatmul.bf16.gmra.mxu0 %v1053
      %v1471 = vpop.f32.mrf.mxu0
      %v1472 = vadd.f32 0.0, %v1471
      %v1473 = vpop.f32.mrf.mxu0
      %v1474 = vadd.f32 0.0, %v1473
      %1475 = vmatmul.bf16.gmra.mxu0 %v1056
      %v1476 = vpop.f32.mrf.mxu0
      %v1477 = vadd.f32 0.0, %v1476
      %v1478 = vpop.f32.mrf.mxu0
      %v1479 = vadd.f32 0.0, %v1478
      %1480 = vmatmul.bf16.gmra.mxu0 %v1059
      %v1481 = vpop.f32.mrf.mxu0
      %v1482 = vadd.f32 0.0, %v1481
      %v1483 = vpop.f32.mrf.mxu0
      %v1484 = vadd.f32 0.0, %v1483
      %1485 = vmatmul.bf16.gmra.mxu0 %v1062
      %v1486 = vpop.f32.mrf.mxu0
      %v1487 = vadd.f32 0.0, %v1486
      %v1488 = vpop.f32.mrf.mxu0
      %1489 = vdwg.mxu0
      %1490 = vmatpush.bf16.msra.mxu0 0
      %1491 = vmatpush.bf16.msra.mxu0 0
      %1492 = vmatpush.bf16.msra.mxu0 0
      %1493 = vmatpush.bf16.msra.mxu0 0
      %1494 = vmatpush.bf16.msra.mxu0 0
      %1495 = vmatpush.bf16.msra.mxu0 %v735
      %1496 = vmatpush.bf16.msra.mxu0 %v731
      %1497 = vmatpush.bf16.msra.mxu0 %v727
      %1498 = vmatmul.bf16.gmra.mxu0 %v942
      %v1499 = vpop.f32.mrf.mxu0
      %v1500 = vadd.f32 0.0, %v1499
      %v1501 = vpop.f32.mrf.mxu0
      %v1502 = vadd.f32 0.0, %v1501
      %1503 = vmatmul.bf16.gmra.mxu0 %v945
      %v1504 = vpop.f32.mrf.mxu0
      %v1505 = vadd.f32 0.0, %v1504
      %v1506 = vpop.f32.mrf.mxu0
      %v1507 = vadd.f32 0.0, %v1506
      %1508 = vmatmul.bf16.gmra.mxu0 %v948
      %v1509 = vpop.f32.mrf.mxu0
      %v1510 = vadd.f32 0.0, %v1509
      %v1511 = vpop.f32.mrf.mxu0
      %v1512 = vadd.f32 0.0, %v1511
      %1513 = vmatmul.bf16.gmra.mxu0 %v951
      %v1514 = vpop.f32.mrf.mxu0
      %v1515 = vadd.f32 0.0, %v1514
      %v1516 = vpop.f32.mrf.mxu0
      %v1517 = vadd.f32 0.0, %v1516
      %1518 = vmatmul.bf16.gmra.mxu0 %v954
      %v1519 = vpop.f32.mrf.mxu0
      %v1520 = vadd.f32 0.0, %v1519
      %v1521 = vpop.f32.mrf.mxu0
      %v1522 = vadd.f32 0.0, %v1521
      %1523 = vmatmul.bf16.gmra.mxu0 %v957
      %v1524 = vpop.f32.mrf.mxu0
      %v1525 = vadd.f32 0.0, %v1524
      %v1526 = vpop.f32.mrf.mxu0
      %v1527 = vadd.f32 0.0, %v1526
      %1528 = vmatmul.bf16.gmra.mxu0 %v960
      %v1529 = vpop.f32.mrf.mxu0
      %v1530 = vadd.f32 0.0, %v1529
      %v1531 = vpop.f32.mrf.mxu0
      %v1532 = vadd.f32 0.0, %v1531
      %1533 = vmatmul.bf16.gmra.mxu0 %v963
      %v1534 = vpop.f32.mrf.mxu0
      %v1535 = vadd.f32 0.0, %v1534
      %v1536 = vpop.f32.mrf.mxu0
      %v1537 = vadd.f32 0.0, %v1536
      %1538 = vmatmul.bf16.gmra.mxu0 %v966
      %v1539 = vpop.f32.mrf.mxu0
      %v1540 = vadd.f32 0.0, %v1539
      %v1541 = vpop.f32.mrf.mxu0
      %v1542 = vadd.f32 0.0, %v1541
      %1543 = vmatmul.bf16.gmra.mxu0 %v969
      %v1544 = vpop.f32.mrf.mxu0
      %v1545 = vadd.f32 0.0, %v1544
      %v1546 = vpop.f32.mrf.mxu0
      %v1547 = vadd.f32 0.0, %v1546
      %1548 = vmatmul.bf16.gmra.mxu0 %v972
      %v1549 = vpop.f32.mrf.mxu0
      %v1550 = vadd.f32 0.0, %v1549
      %v1551 = vpop.f32.mrf.mxu0
      %v1552 = vadd.f32 0.0, %v1551
      %1553 = vmatmul.bf16.gmra.mxu0 %v975
      %v1554 = vpop.f32.mrf.mxu0
      %v1555 = vadd.f32 0.0, %v1554
      %v1556 = vpop.f32.mrf.mxu0
      %v1557 = vadd.f32 0.0, %v1556
      %1558 = vmatmul.bf16.gmra.mxu0 %v978
      %v1559 = vpop.f32.mrf.mxu0
      %v1560 = vadd.f32 0.0, %v1559
      %v1561 = vpop.f32.mrf.mxu0
      %v1562 = vadd.f32 0.0, %v1561
      %1563 = vmatmul.bf16.gmra.mxu0 %v981
      %v1564 = vpop.f32.mrf.mxu0
      %v1565 = vadd.f32 0.0, %v1564
      %v1566 = vpop.f32.mrf.mxu0
      %v1567 = vadd.f32 0.0, %v1566
      %1568 = vmatmul.bf16.gmra.mxu0 %v984
      %v1569 = vpop.f32.mrf.mxu0
      %v1570 = vadd.f32 0.0, %v1569
      %v1571 = vpop.f32.mrf.mxu0
      %v1572 = vadd.f32 0.0, %v1571
      %1573 = vmatmul.bf16.gmra.mxu0 %v987
      %v1574 = vpop.f32.mrf.mxu0
      %v1575 = vadd.f32 0.0, %v1574
      %v1576 = vpop.f32.mrf.mxu0
      %v1577 = vadd.f32 0.0, %v1576
      %1578 = vmatmul.bf16.gmra.mxu0 %v990
      %v1579 = vpop.f32.mrf.mxu0
      %v1580 = vadd.f32 0.0, %v1579
      %v1581 = vpop.f32.mrf.mxu0
      %v1582 = vadd.f32 0.0, %v1581
      %1583 = vmatmul.bf16.gmra.mxu0 %v993
      %v1584 = vpop.f32.mrf.mxu0
      %v1585 = vadd.f32 0.0, %v1584
      %v1586 = vpop.f32.mrf.mxu0
      %v1587 = vadd.f32 0.0, %v1586
      %1588 = vmatmul.bf16.gmra.mxu0 %v996
      %v1589 = vpop.f32.mrf.mxu0
      %v1590 = vadd.f32 0.0, %v1589
      %v1591 = vpop.f32.mrf.mxu0
      %v1592 = vadd.f32 0.0, %v1591
      %1593 = vmatmul.bf16.gmra.mxu0 %v999
      %v1594 = vpop.f32.mrf.mxu0
      %v1595 = vadd.f32 0.0, %v1594
      %v1596 = vpop.f32.mrf.mxu0
      %v1597 = vadd.f32 0.0, %v1596
      %1598 = vmatmul.bf16.gmra.mxu0 %v1002
      %v1599 = vpop.f32.mrf.mxu0
      %v1600 = vadd.f32 0.0, %v1599
      %v1601 = vpop.f32.mrf.mxu0
      %v1602 = vadd.f32 0.0, %v1601
      %1603 = vmatmul.bf16.gmra.mxu0 %v1005
      %v1604 = vpop.f32.mrf.mxu0
      %v1605 = vadd.f32 0.0, %v1604
      %v1606 = vpop.f32.mrf.mxu0
      %v1607 = vadd.f32 0.0, %v1606
      %1608 = vmatmul.bf16.gmra.mxu0 %v1008
      %v1609 = vpop.f32.mrf.mxu0
      %v1610 = vadd.f32 0.0, %v1609
      %v1611 = vpop.f32.mrf.mxu0
      %v1612 = vadd.f32 0.0, %v1611
      %1613 = vmatmul.bf16.gmra.mxu0 %v1011
      %v1614 = vpop.f32.mrf.mxu0
      %v1615 = vadd.f32 0.0, %v1614
      %v1616 = vpop.f32.mrf.mxu0
      %v1617 = vadd.f32 0.0, %v1616
      %1618 = vmatmul.bf16.gmra.mxu0 %v1014
      %v1619 = vpop.f32.mrf.mxu0
      %v1620 = vadd.f32 0.0, %v1619
      %v1621 = vpop.f32.mrf.mxu0
      %v1622 = vadd.f32 0.0, %v1621
      %1623 = vmatmul.bf16.gmra.mxu0 %v1017
      %v1624 = vpop.f32.mrf.mxu0
      %v1625 = vadd.f32 0.0, %v1624
      %v1626 = vpop.f32.mrf.mxu0
      %v1627 = vadd.f32 0.0, %v1626
      %1628 = vmatmul.bf16.gmra.mxu0 %v1020
      %v1629 = vpop.f32.mrf.mxu0
      %v1630 = vadd.f32 0.0, %v1629
      %v1631 = vpop.f32.mrf.mxu0
      %v1632 = vadd.f32 0.0, %v1631
      %1633 = vmatmul.bf16.gmra.mxu0 %v1023
      %v1634 = vpop.f32.mrf.mxu0
      %v1635 = vadd.f32 0.0, %v1634
      %v1636 = vpop.f32.mrf.mxu0
      %v1637 = vadd.f32 0.0, %v1636
      %1638 = vmatmul.bf16.gmra.mxu0 %v1026
      %v1639 = vpop.f32.mrf.mxu0
      %v1640 = vadd.f32 0.0, %v1639
      %v1641 = vpop.f32.mrf.mxu0
      %v1642 = vadd.f32 0.0, %v1641
      %1643 = vmatmul.bf16.gmra.mxu0 %v1029
      %v1644 = vpop.f32.mrf.mxu0
      %v1645 = vadd.f32 0.0, %v1644
      %v1646 = vpop.f32.mrf.mxu0
      %v1647 = vadd.f32 0.0, %v1646
      %1648 = vmatmul.bf16.gmra.mxu0 %v1032
      %v1649 = vpop.f32.mrf.mxu0
      %v1650 = vadd.f32 0.0, %v1649
      %v1651 = vpop.f32.mrf.mxu0
      %v1652 = vadd.f32 0.0, %v1651
      %1653 = vmatmul.bf16.gmra.mxu0 %v1035
      %v1654 = vpop.f32.mrf.mxu0
      %v1655 = vadd.f32 0.0, %v1654
      %v1656 = vpop.f32.mrf.mxu0
      %v1657 = vadd.f32 0.0, %v1656
      %1658 = vmatmul.bf16.gmra.mxu0 %v1038
      %v1659 = vpop.f32.mrf.mxu0
      %v1660 = vadd.f32 0.0, %v1659
      %v1661 = vpop.f32.mrf.mxu0
      %v1662 = vadd.f32 0.0, %v1661
      %1663 = vmatmul.bf16.gmra.mxu0 %v1041
      %v1664 = vpop.f32.mrf.mxu0
      %v1665 = vadd.f32 0.0, %v1664
      %v1666 = vpop.f32.mrf.mxu0
      %v1667 = vadd.f32 0.0, %v1666
      %1668 = vmatmul.bf16.gmra.mxu0 %v1044
      %v1669 = vpop.f32.mrf.mxu0
      %v1670 = vadd.f32 0.0, %v1669
      %v1671 = vpop.f32.mrf.mxu0
      %v1672 = vadd.f32 0.0, %v1671
      %1673 = vmatmul.bf16.gmra.mxu0 %v1047
      %v1674 = vpop.f32.mrf.mxu0
      %v1675 = vadd.f32 0.0, %v1674
      %v1676 = vpop.f32.mrf.mxu0
      %v1677 = vadd.f32 0.0, %v1676
      %1678 = vmatmul.bf16.gmra.mxu0 %v1050
      %v1679 = vpop.f32.mrf.mxu0
      %v1680 = vadd.f32 0.0, %v1679
      %v1681 = vpop.f32.mrf.mxu0
      %v1682 = vadd.f32 0.0, %v1681
      %1683 = vmatmul.bf16.gmra.mxu0 %v1053
      %v1684 = vpop.f32.mrf.mxu0
      %v1685 = vadd.f32 0.0, %v1684
      %v1686 = vpop.f32.mrf.mxu0
      %v1687 = vadd.f32 0.0, %v1686
      %1688 = vmatmul.bf16.gmra.mxu0 %v1056
      %v1689 = vpop.f32.mrf.mxu0
      %v1690 = vadd.f32 0.0, %v1689
      %v1691 = vpop.f32.mrf.mxu0
      %v1692 = vadd.f32 0.0, %v1691
      %1693 = vmatmul.bf16.gmra.mxu0 %v1059
      %v1694 = vpop.f32.mrf.mxu0
      %v1695 = vadd.f32 0.0, %v1694
      %v1696 = vpop.f32.mrf.mxu0
      %v1697 = vadd.f32 0.0, %v1696
      %1698 = vmatmul.bf16.gmra.mxu0 %v1062
      %v1699 = vpop.f32.mrf.mxu0
      %v1700 = vadd.f32 0.0, %v1699
      %v1701 = vpop.f32.mrf.mxu0
      %1702 = vdwg.mxu0
      %1703 = vmatpush.bf16.msra.mxu0 0
      %1704 = vmatpush.bf16.msra.mxu0 0
      %1705 = vmatpush.bf16.msra.mxu0 0
      %1706 = vmatpush.bf16.msra.mxu0 0
      %1707 = vmatpush.bf16.msra.mxu0 0
      %1708 = vmatpush.bf16.msra.mxu0 %v736
      %1709 = vmatpush.bf16.msra.mxu0 %v732
      %1710 = vmatpush.bf16.msra.mxu0 %v728
      %1711 = vmatmul.bf16.gmra.mxu0 %v942
      %v1712 = vpop.f32.mrf.mxu0
      %v1713 = vadd.f32 0.0, %v1712
      %v1714 = vpop.f32.mrf.mxu0
      %v1715 = vadd.f32 0.0, %v1714
      %1716 = vmatmul.bf16.gmra.mxu0 %v945
      %v1717 = vpop.f32.mrf.mxu0
      %v1718 = vadd.f32 0.0, %v1717
      %v1719 = vpop.f32.mrf.mxu0
      %v1720 = vadd.f32 0.0, %v1719
      %1721 = vmatmul.bf16.gmra.mxu0 %v948
      %v1722 = vpop.f32.mrf.mxu0
      %v1723 = vadd.f32 0.0, %v1722
      %v1724 = vpop.f32.mrf.mxu0
      %v1725 = vadd.f32 0.0, %v1724
      %1726 = vmatmul.bf16.gmra.mxu0 %v951
      %v1727 = vpop.f32.mrf.mxu0
      %v1728 = vadd.f32 0.0, %v1727
      %v1729 = vpop.f32.mrf.mxu0
      %v1730 = vadd.f32 0.0, %v1729
      %1731 = vmatmul.bf16.gmra.mxu0 %v954
      %v1732 = vpop.f32.mrf.mxu0
      %v1733 = vadd.f32 0.0, %v1732
      %v1734 = vpop.f32.mrf.mxu0
      %v1735 = vadd.f32 0.0, %v1734
      %1736 = vmatmul.bf16.gmra.mxu0 %v957
      %v1737 = vpop.f32.mrf.mxu0
      %v1738 = vadd.f32 0.0, %v1737
      %v1739 = vpop.f32.mrf.mxu0
      %v1740 = vadd.f32 0.0, %v1739
      %1741 = vmatmul.bf16.gmra.mxu0 %v960
      %v1742 = vpop.f32.mrf.mxu0
      %v1743 = vadd.f32 0.0, %v1742
      %v1744 = vpop.f32.mrf.mxu0
      %v1745 = vadd.f32 0.0, %v1744
      %1746 = vmatmul.bf16.gmra.mxu0 %v963
      %v1747 = vpop.f32.mrf.mxu0
      %v1748 = vadd.f32 0.0, %v1747
      %v1749 = vpop.f32.mrf.mxu0
      %v1750 = vadd.f32 0.0, %v1749
      %1751 = vmatmul.bf16.gmra.mxu0 %v966
      %v1752 = vpop.f32.mrf.mxu0
      %v1753 = vadd.f32 0.0, %v1752
      %v1754 = vpop.f32.mrf.mxu0
      %v1755 = vadd.f32 0.0, %v1754
      %1756 = vmatmul.bf16.gmra.mxu0 %v969
      %v1757 = vpop.f32.mrf.mxu0
      %v1758 = vadd.f32 0.0, %v1757
      %v1759 = vpop.f32.mrf.mxu0
      %v1760 = vadd.f32 0.0, %v1759
      %1761 = vmatmul.bf16.gmra.mxu0 %v972
      %v1762 = vpop.f32.mrf.mxu0
      %v1763 = vadd.f32 0.0, %v1762
      %v1764 = vpop.f32.mrf.mxu0
      %v1765 = vadd.f32 0.0, %v1764
      %1766 = vmatmul.bf16.gmra.mxu0 %v975
      %v1767 = vpop.f32.mrf.mxu0
      %v1768 = vadd.f32 0.0, %v1767
      %v1769 = vpop.f32.mrf.mxu0
      %v1770 = vadd.f32 0.0, %v1769
      %1771 = vmatmul.bf16.gmra.mxu0 %v978
      %v1772 = vpop.f32.mrf.mxu0
      %v1773 = vadd.f32 0.0, %v1772
      %v1774 = vpop.f32.mrf.mxu0
      %v1775 = vadd.f32 0.0, %v1774
      %1776 = vmatmul.bf16.gmra.mxu0 %v981
      %v1777 = vpop.f32.mrf.mxu0
      %v1778 = vadd.f32 0.0, %v1777
      %v1779 = vpop.f32.mrf.mxu0
      %v1780 = vadd.f32 0.0, %v1779
      %1781 = vmatmul.bf16.gmra.mxu0 %v984
      %v1782 = vpop.f32.mrf.mxu0
      %v1783 = vadd.f32 0.0, %v1782
      %v1784 = vpop.f32.mrf.mxu0
      %v1785 = vadd.f32 0.0, %v1784
      %1786 = vmatmul.bf16.gmra.mxu0 %v987
      %v1787 = vpop.f32.mrf.mxu0
      %v1788 = vadd.f32 0.0, %v1787
      %v1789 = vpop.f32.mrf.mxu0
      %v1790 = vadd.f32 0.0, %v1789
      %1791 = vmatmul.bf16.gmra.mxu0 %v990
      %v1792 = vpop.f32.mrf.mxu0
      %v1793 = vadd.f32 0.0, %v1792
      %v1794 = vpop.f32.mrf.mxu0
      %v1795 = vadd.f32 0.0, %v1794
      %1796 = vmatmul.bf16.gmra.mxu0 %v993
      %v1797 = vpop.f32.mrf.mxu0
      %v1798 = vadd.f32 0.0, %v1797
      %v1799 = vpop.f32.mrf.mxu0
      %v1800 = vadd.f32 0.0, %v1799
      %1801 = vmatmul.bf16.gmra.mxu0 %v996
      %v1802 = vpop.f32.mrf.mxu0
      %v1803 = vadd.f32 0.0, %v1802
      %v1804 = vpop.f32.mrf.mxu0
      %v1805 = vadd.f32 0.0, %v1804
      %1806 = vmatmul.bf16.gmra.mxu0 %v999
      %v1807 = vpop.f32.mrf.mxu0
      %v1808 = vadd.f32 0.0, %v1807
      %v1809 = vpop.f32.mrf.mxu0
      %v1810 = vadd.f32 0.0, %v1809
      %1811 = vmatmul.bf16.gmra.mxu0 %v1002
      %v1812 = vpop.f32.mrf.mxu0
      %v1813 = vadd.f32 0.0, %v1812
      %v1814 = vpop.f32.mrf.mxu0
      %v1815 = vadd.f32 0.0, %v1814
      %1816 = vmatmul.bf16.gmra.mxu0 %v1005
      %v1817 = vpop.f32.mrf.mxu0
      %v1818 = vadd.f32 0.0, %v1817
      %v1819 = vpop.f32.mrf.mxu0
      %v1820 = vadd.f32 0.0, %v1819
      %1821 = vmatmul.bf16.gmra.mxu0 %v1008
      %v1822 = vpop.f32.mrf.mxu0
      %v1823 = vadd.f32 0.0, %v1822
      %v1824 = vpop.f32.mrf.mxu0
      %v1825 = vadd.f32 0.0, %v1824
      %1826 = vmatmul.bf16.gmra.mxu0 %v1011
      %v1827 = vpop.f32.mrf.mxu0
      %v1828 = vadd.f32 0.0, %v1827
      %v1829 = vpop.f32.mrf.mxu0
      %v1830 = vadd.f32 0.0, %v1829
      %1831 = vmatmul.bf16.gmra.mxu0 %v1014
      %v1832 = vpop.f32.mrf.mxu0
      %v1833 = vadd.f32 0.0, %v1832
      %v1834 = vpop.f32.mrf.mxu0
      %v1835 = vadd.f32 0.0, %v1834
      %1836 = vmatmul.bf16.gmra.mxu0 %v1017
      %v1837 = vpop.f32.mrf.mxu0
      %v1838 = vadd.f32 0.0, %v1837
      %v1839 = vpop.f32.mrf.mxu0
      %v1840 = vadd.f32 0.0, %v1839
      %1841 = vmatmul.bf16.gmra.mxu0 %v1020
      %v1842 = vpop.f32.mrf.mxu0
      %v1843 = vadd.f32 0.0, %v1842
      %v1844 = vpop.f32.mrf.mxu0
      %v1845 = vadd.f32 0.0, %v1844
      %1846 = vmatmul.bf16.gmra.mxu0 %v1023
      %v1847 = vpop.f32.mrf.mxu0
      %v1848 = vadd.f32 0.0, %v1847
      %v1849 = vpop.f32.mrf.mxu0
      %v1850 = vadd.f32 0.0, %v1849
      %1851 = vmatmul.bf16.gmra.mxu0 %v1026
      %v1852 = vpop.f32.mrf.mxu0
      %v1853 = vadd.f32 0.0, %v1852
      %v1854 = vpop.f32.mrf.mxu0
      %v1855 = vadd.f32 0.0, %v1854
      %1856 = vmatmul.bf16.gmra.mxu0 %v1029
      %v1857 = vpop.f32.mrf.mxu0
      %v1858 = vadd.f32 0.0, %v1857
      %v1859 = vpop.f32.mrf.mxu0
      %v1860 = vadd.f32 0.0, %v1859
      %1861 = vmatmul.bf16.gmra.mxu0 %v1032
      %v1862 = vpop.f32.mrf.mxu0
      %v1863 = vadd.f32 0.0, %v1862
      %v1864 = vpop.f32.mrf.mxu0
      %v1865 = vadd.f32 0.0, %v1864
      %1866 = vmatmul.bf16.gmra.mxu0 %v1035
      %v1867 = vpop.f32.mrf.mxu0
      %v1868 = vadd.f32 0.0, %v1867
      %v1869 = vpop.f32.mrf.mxu0
      %v1870 = vadd.f32 0.0, %v1869
      %1871 = vmatmul.bf16.gmra.mxu0 %v1038
      %v1872 = vpop.f32.mrf.mxu0
      %v1873 = vadd.f32 0.0, %v1872
      %v1874 = vpop.f32.mrf.mxu0
      %v1875 = vadd.f32 0.0, %v1874
      %1876 = vmatmul.bf16.gmra.mxu0 %v1041
      %v1877 = vpop.f32.mrf.mxu0
      %v1878 = vadd.f32 0.0, %v1877
      %v1879 = vpop.f32.mrf.mxu0
      %v1880 = vadd.f32 0.0, %v1879
      %1881 = vmatmul.bf16.gmra.mxu0 %v1044
      %v1882 = vpop.f32.mrf.mxu0
      %v1883 = vadd.f32 0.0, %v1882
      %v1884 = vpop.f32.mrf.mxu0
      %v1885 = vadd.f32 0.0, %v1884
      %1886 = vmatmul.bf16.gmra.mxu0 %v1047
      %v1887 = vpop.f32.mrf.mxu0
      %v1888 = vadd.f32 0.0, %v1887
      %v1889 = vpop.f32.mrf.mxu0
      %v1890 = vadd.f32 0.0, %v1889
      %1891 = vmatmul.bf16.gmra.mxu0 %v1050
      %v1892 = vpop.f32.mrf.mxu0
      %v1893 = vadd.f32 0.0, %v1892
      %v1894 = vpop.f32.mrf.mxu0
      %v1895 = vadd.f32 0.0, %v1894
      %1896 = vmatmul.bf16.gmra.mxu0 %v1053
      %v1897 = vpop.f32.mrf.mxu0
      %v1898 = vadd.f32 0.0, %v1897
      %v1899 = vpop.f32.mrf.mxu0
      %v1900 = vadd.f32 0.0, %v1899
      %1901 = vmatmul.bf16.gmra.mxu0 %v1056
      %v1902 = vpop.f32.mrf.mxu0
      %v1903 = vadd.f32 0.0, %v1902
      %v1904 = vpop.f32.mrf.mxu0
      %v1905 = vadd.f32 0.0, %v1904
      %1906 = vmatmul.bf16.gmra.mxu0 %v1059
      %v1907 = vpop.f32.mrf.mxu0
      %v1908 = vadd.f32 0.0, %v1907
      %v1909 = vpop.f32.mrf.mxu0
      %v1910 = vadd.f32 0.0, %v1909
      %1911 = vmatmul.bf16.gmra.mxu0 %v1062
      %v1912 = vpop.f32.mrf.mxu0
      %v1913 = vadd.f32 0.0, %v1912
      %v1914 = vpop.f32.mrf.mxu0
      %1915 = vdwg.mxu0
      %1916 = vrot.lane.b32.xlu0 %v1074, 73
      %v1917 = vpop.permute.xlu0 %1916
      %1918 = vrot.lane.b32.xlu0 %v1076, 73
      %v1919 = vpop.permute.xlu0 %1918
      %1920 = vrot.lane.b32.xlu0 %v1079, 73
      %v1921 = vpop.permute.xlu0 %1920
      %1922 = vrot.lane.b32.xlu0 %v1287, 73
      %v1923 = vpop.permute.xlu0 %1922
      %1924 = vrot.lane.b32.xlu0 %v1289, 73
      %v1925 = vpop.permute.xlu0 %1924
      %1926 = vrot.lane.b32.xlu0 %v1292, 73
      %v1927 = vpop.permute.xlu0 %1926
      %1928 = vrot.lane.b32.xlu0 %v1500, 73
      %v1929 = vpop.permute.xlu0 %1928
      %1930 = vrot.lane.b32.xlu0 %v1502, 73
      %v1931 = vpop.permute.xlu0 %1930
      %1932 = vrot.lane.b32.xlu0 %v1505, 73
      %v1933 = vpop.permute.xlu0 %1932
      %1934 = vrot.lane.b32.xlu0 %v1713, 73
      %v1935 = vpop.permute.xlu0 %1934
      %1936 = vrot.lane.b32.xlu0 %v1715, 73
      %v1937 = vpop.permute.xlu0 %1936
      %1938 = vrot.lane.b32.xlu0 %v1718, 73
      %v1939 = vpop.permute.xlu0 %1938
      %v1940 = vlaneseq
      %v1941 = vand.u32 %v1940, 127
      %vm1942 = vcmp.lt.s32.totalorder %v1941, 73
      %v1943 = vsel %vm1942, %v1929, %v1935
      %v1944 = vsel %vm1942, %v1931, %v1937
      %v1945 = vsel %vm1942, %v1933, %v1939
      %v1946 = vsel %vm1942, %v1923, %v1929
      %v1947 = vsel %vm1942, %v1925, %v1931
      %v1948 = vsel %vm1942, %v1927, %v1933
      %v1949 = vsel %vm1942, %v1917, %v1923
      %v1950 = vsel %vm1942, %v1919, %v1925
      %v1951 = vsel %vm1942, %v1921, %v1927
      %v1952 = vsel %vm1942, %v1935, %v1917
      %v1953 = vsel %vm1942, %v1937, %v1919
      %v1954 = vsel %vm1942, %v1939, %v1921
      %v1955 = vld [vmem:[%s2] ss:$8 sm:$0xf]
      %v1957 = vperm.slane %v1955, 0
      %v1958 = vperm.slane %v1955, 1
      %v1959 = vperm.slane %v1955, 2
      %v1960 = vperm.slane %v1955, 3
      %v1965 = vmul.f32 %v1952, %v1957
      %v1966 = vmul.f32 %v1949, %v1958
      %v1967 = vmul.f32 %v1946, %v1959
      %v1968 = vmul.f32 %v1943, %v1960
      %v1969 = vmul.f32 %v1953, %v1957
      %v1970 = vmul.f32 %v1950, %v1958
      %v1971 = vmul.f32 %v1947, %v1959
      %v1972 = vmul.f32 %v1944, %v1960
      %v1973 = vmul.f32 %v1954, %v1957
      %v1974 = vmul.f32 %v1951, %v1958
      %v1975 = vmul.f32 %v1948, %v1959
      %v1976 = vmul.f32 %v1945, %v1960
      %1977 = vrot.lane.b32.xlu0 %v1081, 72
      %v1978 = vpop.permute.xlu0 %1977
      %1979 = vrot.lane.b32.xlu0 %v1084, 72
      %v1980 = vpop.permute.xlu0 %1979
      %1981 = vrot.lane.b32.xlu0 %v1086, 72
      %v1982 = vpop.permute.xlu0 %1981
      %1983 = vrot.lane.b32.xlu0 %v1294, 72
      %v1984 = vpop.permute.xlu0 %1983
      %1985 = vrot.lane.b32.xlu0 %v1297, 72
      %v1986 = vpop.permute.xlu0 %1985
      %1987 = vrot.lane.b32.xlu0 %v1299, 72
      %v1988 = vpop.permute.xlu0 %1987
      %1989 = vrot.lane.b32.xlu0 %v1507, 72
      %v1990 = vpop.permute.xlu0 %1989
      %1991 = vrot.lane.b32.xlu0 %v1510, 72
      %v1992 = vpop.permute.xlu0 %1991
      %1993 = vrot.lane.b32.xlu0 %v1512, 72
      %v1994 = vpop.permute.xlu0 %1993
      %1995 = vrot.lane.b32.xlu0 %v1720, 72
      %v1996 = vpop.permute.xlu0 %1995
      %1997 = vrot.lane.b32.xlu0 %v1723, 72
      %v1998 = vpop.permute.xlu0 %1997
      %1999 = vrot.lane.b32.xlu0 %v1725, 72
      %v2000 = vpop.permute.xlu0 %1999
      %vm2001 = vcmp.lt.s32.totalorder %v1941, 72
      %v2002 = vsel %vm2001, %v1990, %v1996
      %v2003 = vsel %vm2001, %v1992, %v1998
      %v2004 = vsel %vm2001, %v1994, %v2000
      %v2005 = vsel %vm2001, %v1984, %v1990
      %v2006 = vsel %vm2001, %v1986, %v1992
      %v2007 = vsel %vm2001, %v1988, %v1994
      %v2008 = vsel %vm2001, %v1978, %v1984
      %v2009 = vsel %vm2001, %v1980, %v1986
      %v2010 = vsel %vm2001, %v1982, %v1988
      %v2011 = vsel %vm2001, %v1996, %v1978
      %v2012 = vsel %vm2001, %v1998, %v1980
      %v2013 = vsel %vm2001, %v2000, %v1982
      %s2014 = scalar_lea.vmem %s2, 1
      %v2015 = vld [vmem:[%s2014] ss:$8 sm:$0xf]
      %v2017 = vperm.slane %v2015, 0
      %v2018 = vperm.slane %v2015, 1
      %v2019 = vperm.slane %v2015, 2
      %v2020 = vperm.slane %v2015, 3
      %v2025 = vmul.f32 %v2011, %v2017
      %v2026 = vmul.f32 %v2008, %v2018
      %v2027 = vmul.f32 %v2005, %v2019
      %v2028 = vmul.f32 %v2002, %v2020
      %v2029 = vmul.f32 %v2012, %v2017
      %v2030 = vmul.f32 %v2009, %v2018
      %v2031 = vmul.f32 %v2006, %v2019
      %v2032 = vmul.f32 %v2003, %v2020
      %v2033 = vmul.f32 %v2013, %v2017
      %v2034 = vmul.f32 %v2010, %v2018
      %v2035 = vmul.f32 %v2007, %v2019
      %v2036 = vmul.f32 %v2004, %v2020
      %2037 = vrot.lane.b32.xlu0 %v1089, 71
      %v2038 = vpop.permute.xlu0 %2037
      %2039 = vrot.lane.b32.xlu0 %v1091, 71
      %v2040 = vpop.permute.xlu0 %2039
      %2041 = vrot.lane.b32.xlu0 %v1094, 71
      %v2042 = vpop.permute.xlu0 %2041
      %2043 = vrot.lane.b32.xlu0 %v1302, 71
      %v2044 = vpop.permute.xlu0 %2043
      %2045 = vrot.lane.b32.xlu0 %v1304, 71
      %v2046 = vpop.permute.xlu0 %2045
      %2047 = vrot.lane.b32.xlu0 %v1307, 71
      %v2048 = vpop.permute.xlu0 %2047
      %2049 = vrot.lane.b32.xlu0 %v1515, 71
      %v2050 = vpop.permute.xlu0 %2049
      %2051 = vrot.lane.b32.xlu0 %v1517, 71
      %v2052 = vpop.permute.xlu0 %2051
      %2053 = vrot.lane.b32.xlu0 %v1520, 71
      %v2054 = vpop.permute.xlu0 %2053
      %2055 = vrot.lane.b32.xlu0 %v1728, 71
      %v2056 = vpop.permute.xlu0 %2055
      %2057 = vrot.lane.b32.xlu0 %v1730, 71
      %v2058 = vpop.permute.xlu0 %2057
      %2059 = vrot.lane.b32.xlu0 %v1733, 71
      %v2060 = vpop.permute.xlu0 %2059
      %vm2061 = vcmp.lt.s32.totalorder %v1941, 71
      %v2062 = vsel %vm2061, %v2050, %v2056
      %v2063 = vsel %vm2061, %v2052, %v2058
      %v2064 = vsel %vm2061, %v2054, %v2060
      %v2065 = vsel %vm2061, %v2044, %v2050
      %v2066 = vsel %vm2061, %v2046, %v2052
      %v2067 = vsel %vm2061, %v2048, %v2054
      %v2068 = vsel %vm2061, %v2038, %v2044
      %v2069 = vsel %vm2061, %v2040, %v2046
      %v2070 = vsel %vm2061, %v2042, %v2048
      %v2071 = vsel %vm2061, %v2056, %v2038
      %v2072 = vsel %vm2061, %v2058, %v2040
      %v2073 = vsel %vm2061, %v2060, %v2042
      %s2074 = scalar_lea.vmem %s2, 2
      %v2075 = vld [vmem:[%s2074] ss:$8 sm:$0xf]
      %v2077 = vperm.slane %v2075, 0
      %v2078 = vperm.slane %v2075, 1
      %v2079 = vperm.slane %v2075, 2
      %v2080 = vperm.slane %v2075, 3
      %v2085 = vmul.f32 %v2071, %v2077
      %v2086 = vmul.f32 %v2068, %v2078
      %v2087 = vmul.f32 %v2065, %v2079
      %v2088 = vmul.f32 %v2062, %v2080
      %v2089 = vmul.f32 %v2072, %v2077
      %v2090 = vmul.f32 %v2069, %v2078
      %v2091 = vmul.f32 %v2066, %v2079
      %v2092 = vmul.f32 %v2063, %v2080
      %v2093 = vmul.f32 %v2073, %v2077
      %v2094 = vmul.f32 %v2070, %v2078
      %v2095 = vmul.f32 %v2067, %v2079
      %v2096 = vmul.f32 %v2064, %v2080
      %2097 = vrot.lane.b32.xlu0 %v1096, 65
      %v2098 = vpop.permute.xlu0 %2097
      %2099 = vrot.lane.b32.xlu0 %v1099, 65
      %v2100 = vpop.permute.xlu0 %2099
      %2101 = vrot.lane.b32.xlu0 %v1101, 65
      %v2102 = vpop.permute.xlu0 %2101
      %2103 = vrot.lane.b32.xlu0 %v1309, 65
      %v2104 = vpop.permute.xlu0 %2103
      %2105 = vrot.lane.b32.xlu0 %v1312, 65
      %v2106 = vpop.permute.xlu0 %2105
      %2107 = vrot.lane.b32.xlu0 %v1314, 65
      %v2108 = vpop.permute.xlu0 %2107
      %2109 = vrot.lane.b32.xlu0 %v1522, 65
      %v2110 = vpop.permute.xlu0 %2109
      %2111 = vrot.lane.b32.xlu0 %v1525, 65
      %v2112 = vpop.permute.xlu0 %2111
      %2113 = vrot.lane.b32.xlu0 %v1527, 65
      %v2114 = vpop.permute.xlu0 %2113
      %2115 = vrot.lane.b32.xlu0 %v1735, 65
      %v2116 = vpop.permute.xlu0 %2115
      %2117 = vrot.lane.b32.xlu0 %v1738, 65
      %v2118 = vpop.permute.xlu0 %2117
      %2119 = vrot.lane.b32.xlu0 %v1740, 65
      %v2120 = vpop.permute.xlu0 %2119
      %vm2121 = vcmp.lt.s32.totalorder %v1941, 65
      %v2122 = vsel %vm2121, %v2110, %v2116
      %v2123 = vsel %vm2121, %v2112, %v2118
      %v2124 = vsel %vm2121, %v2114, %v2120
      %v2125 = vsel %vm2121, %v2104, %v2110
      %v2126 = vsel %vm2121, %v2106, %v2112
      %v2127 = vsel %vm2121, %v2108, %v2114
      %v2128 = vsel %vm2121, %v2098, %v2104
      %v2129 = vsel %vm2121, %v2100, %v2106
      %v2130 = vsel %vm2121, %v2102, %v2108
      %v2131 = vsel %vm2121, %v2116, %v2098
      %v2132 = vsel %vm2121, %v2118, %v2100
      %v2133 = vsel %vm2121, %v2120, %v2102
      %s2134 = scalar_lea.vmem %s2, 3
      %v2135 = vld [vmem:[%s2134] ss:$8 sm:$0xf]
      %v2137 = vperm.slane %v2135, 0
      %v2138 = vperm.slane %v2135, 1
      %v2139 = vperm.slane %v2135, 2
      %v2140 = vperm.slane %v2135, 3
      %v2145 = vmul.f32 %v2131, %v2137
      %v2146 = vmul.f32 %v2128, %v2138
      %v2147 = vmul.f32 %v2125, %v2139
      %v2148 = vmul.f32 %v2122, %v2140
      %v2149 = vmul.f32 %v2132, %v2137
      %v2150 = vmul.f32 %v2129, %v2138
      %v2151 = vmul.f32 %v2126, %v2139
      %v2152 = vmul.f32 %v2123, %v2140
      %v2153 = vmul.f32 %v2133, %v2137
      %v2154 = vmul.f32 %v2130, %v2138
      %v2155 = vmul.f32 %v2127, %v2139
      %v2156 = vmul.f32 %v2124, %v2140
      %2157 = vrot.lane.b32.xlu0 %v1104, 64
      %v2158 = vpop.permute.xlu0 %2157
      %2159 = vrot.lane.b32.xlu0 %v1106, 64
      %v2160 = vpop.permute.xlu0 %2159
      %2161 = vrot.lane.b32.xlu0 %v1109, 64
      %v2162 = vpop.permute.xlu0 %2161
      %2163 = vrot.lane.b32.xlu0 %v1317, 64
      %v2164 = vpop.permute.xlu0 %2163
      %2165 = vrot.lane.b32.xlu0 %v1319, 64
      %v2166 = vpop.permute.xlu0 %2165
      %2167 = vrot.lane.b32.xlu0 %v1322, 64
      %v2168 = vpop.permute.xlu0 %2167
      %2169 = vrot.lane.b32.xlu0 %v1530, 64
      %v2170 = vpop.permute.xlu0 %2169
      %2171 = vrot.lane.b32.xlu0 %v1532, 64
      %v2172 = vpop.permute.xlu0 %2171
      %2173 = vrot.lane.b32.xlu0 %v1535, 64
      %v2174 = vpop.permute.xlu0 %2173
      %2175 = vrot.lane.b32.xlu0 %v1743, 64
      %v2176 = vpop.permute.xlu0 %2175
      %2177 = vrot.lane.b32.xlu0 %v1745, 64
      %v2178 = vpop.permute.xlu0 %2177
      %2179 = vrot.lane.b32.xlu0 %v1748, 64
      %v2180 = vpop.permute.xlu0 %2179
      %vm2181 = vcmp.lt.s32.totalorder %v1941, 64
      %v2182 = vsel %vm2181, %v2170, %v2176
      %v2183 = vsel %vm2181, %v2172, %v2178
      %v2184 = vsel %vm2181, %v2174, %v2180
      %v2185 = vsel %vm2181, %v2164, %v2170
      %v2186 = vsel %vm2181, %v2166, %v2172
      %v2187 = vsel %vm2181, %v2168, %v2174
      %v2188 = vsel %vm2181, %v2158, %v2164
      %v2189 = vsel %vm2181, %v2160, %v2166
      %v2190 = vsel %vm2181, %v2162, %v2168
      %v2191 = vsel %vm2181, %v2176, %v2158
      %v2192 = vsel %vm2181, %v2178, %v2160
      %v2193 = vsel %vm2181, %v2180, %v2162
      %s2194 = scalar_lea.vmem %s2, 4
      %v2195 = vld [vmem:[%s2194] ss:$8 sm:$0xf]
      %v2197 = vperm.slane %v2195, 0
      %v2198 = vperm.slane %v2195, 1
      %v2199 = vperm.slane %v2195, 2
      %v2200 = vperm.slane %v2195, 3
      %v2205 = vmul.f32 %v2191, %v2197
      %v2206 = vmul.f32 %v2188, %v2198
      %v2207 = vmul.f32 %v2185, %v2199
      %v2208 = vmul.f32 %v2182, %v2200
      %v2209 = vmul.f32 %v2192, %v2197
      %v2210 = vmul.f32 %v2189, %v2198
      %v2211 = vmul.f32 %v2186, %v2199
      %v2212 = vmul.f32 %v2183, %v2200
      %v2213 = vmul.f32 %v2193, %v2197
      %v2214 = vmul.f32 %v2190, %v2198
      %v2215 = vmul.f32 %v2187, %v2199
      %v2216 = vmul.f32 %v2184, %v2200
      %v2217 = vadd.f32 %v1965, %v2205
      %v2218 = vadd.f32 %v1966, %v2206
      %v2219 = vadd.f32 %v1967, %v2207
      %v2220 = vadd.f32 %v1968, %v2208
      %v2221 = vadd.f32 %v1969, %v2209
      %v2222 = vadd.f32 %v1970, %v2210
      %v2223 = vadd.f32 %v1971, %v2211
      %v2224 = vadd.f32 %v1972, %v2212
      %v2225 = vadd.f32 %v1973, %v2213
      %v2226 = vadd.f32 %v1974, %v2214
      %v2227 = vadd.f32 %v1975, %v2215
      %v2228 = vadd.f32 %v1976, %v2216
      %2229 = vrot.lane.b32.xlu0 %v1111, 63
      %v2230 = vpop.permute.xlu0 %2229
      %2231 = vrot.lane.b32.xlu0 %v1114, 63
      %v2232 = vpop.permute.xlu0 %2231
      %2233 = vrot.lane.b32.xlu0 %v1116, 63
      %v2234 = vpop.permute.xlu0 %2233
      %2235 = vrot.lane.b32.xlu0 %v1324, 63
      %v2236 = vpop.permute.xlu0 %2235
      %2237 = vrot.lane.b32.xlu0 %v1327, 63
      %v2238 = vpop.permute.xlu0 %2237
      %2239 = vrot.lane.b32.xlu0 %v1329, 63
      %v2240 = vpop.permute.xlu0 %2239
      %2241 = vrot.lane.b32.xlu0 %v1537, 63
      %v2242 = vpop.permute.xlu0 %2241
      %2243 = vrot.lane.b32.xlu0 %v1540, 63
      %v2244 = vpop.permute.xlu0 %2243
      %2245 = vrot.lane.b32.xlu0 %v1542, 63
      %v2246 = vpop.permute.xlu0 %2245
      %2247 = vrot.lane.b32.xlu0 %v1750, 63
      %v2248 = vpop.permute.xlu0 %2247
      %2249 = vrot.lane.b32.xlu0 %v1753, 63
      %v2250 = vpop.permute.xlu0 %2249
      %2251 = vrot.lane.b32.xlu0 %v1755, 63
      %v2252 = vpop.permute.xlu0 %2251
      %vm2253 = vcmp.lt.s32.totalorder %v1941, 63
      %v2254 = vsel %vm2253, %v2242, %v2248
      %v2255 = vsel %vm2253, %v2244, %v2250
      %v2256 = vsel %vm2253, %v2246, %v2252
      %v2257 = vsel %vm2253, %v2236, %v2242
      %v2258 = vsel %vm2253, %v2238, %v2244
      %v2259 = vsel %vm2253, %v2240, %v2246
      %v2260 = vsel %vm2253, %v2230, %v2236
      %v2261 = vsel %vm2253, %v2232, %v2238
      %v2262 = vsel %vm2253, %v2234, %v2240
      %v2263 = vsel %vm2253, %v2248, %v2230
      %v2264 = vsel %vm2253, %v2250, %v2232
      %v2265 = vsel %vm2253, %v2252, %v2234
      %s2266 = scalar_lea.vmem %s2, 5
      %v2267 = vld [vmem:[%s2266] ss:$8 sm:$0xf]
      %v2269 = vperm.slane %v2267, 0
      %v2270 = vperm.slane %v2267, 1
      %v2271 = vperm.slane %v2267, 2
      %v2272 = vperm.slane %v2267, 3
      %v2277 = vmul.f32 %v2263, %v2269
      %v2278 = vmul.f32 %v2260, %v2270
      %v2279 = vmul.f32 %v2257, %v2271
      %v2280 = vmul.f32 %v2254, %v2272
      %v2281 = vmul.f32 %v2264, %v2269
      %v2282 = vmul.f32 %v2261, %v2270
      %v2283 = vmul.f32 %v2258, %v2271
      %v2284 = vmul.f32 %v2255, %v2272
      %v2285 = vmul.f32 %v2265, %v2269
      %v2286 = vmul.f32 %v2262, %v2270
      %v2287 = vmul.f32 %v2259, %v2271
      %v2288 = vmul.f32 %v2256, %v2272
      %v2289 = vadd.f32 %v2025, %v2277
      %v2290 = vadd.f32 %v2026, %v2278
      %v2291 = vadd.f32 %v2027, %v2279
      %v2292 = vadd.f32 %v2028, %v2280
      %v2293 = vadd.f32 %v2029, %v2281
      %v2294 = vadd.f32 %v2030, %v2282
      %v2295 = vadd.f32 %v2031, %v2283
      %v2296 = vadd.f32 %v2032, %v2284
      %v2297 = vadd.f32 %v2033, %v2285
      %v2298 = vadd.f32 %v2034, %v2286
      %v2299 = vadd.f32 %v2035, %v2287
      %v2300 = vadd.f32 %v2036, %v2288
      %2301 = vrot.lane.b32.xlu0 %v1119, 57
      %v2302 = vpop.permute.xlu0 %2301
      %2303 = vrot.lane.b32.xlu0 %v1121, 57
      %v2304 = vpop.permute.xlu0 %2303
      %2305 = vrot.lane.b32.xlu0 %v1124, 57
      %v2306 = vpop.permute.xlu0 %2305
      %2307 = vrot.lane.b32.xlu0 %v1332, 57
      %v2308 = vpop.permute.xlu0 %2307
      %2309 = vrot.lane.b32.xlu0 %v1334, 57
      %v2310 = vpop.permute.xlu0 %2309
      %2311 = vrot.lane.b32.xlu0 %v1337, 57
      %v2312 = vpop.permute.xlu0 %2311
      %2313 = vrot.lane.b32.xlu0 %v1545, 57
      %v2314 = vpop.permute.xlu0 %2313
      %2315 = vrot.lane.b32.xlu0 %v1547, 57
      %v2316 = vpop.permute.xlu0 %2315
      %2317 = vrot.lane.b32.xlu0 %v1550, 57
      %v2318 = vpop.permute.xlu0 %2317
      %2319 = vrot.lane.b32.xlu0 %v1758, 57
      %v2320 = vpop.permute.xlu0 %2319
      %2321 = vrot.lane.b32.xlu0 %v1760, 57
      %v2322 = vpop.permute.xlu0 %2321
      %2323 = vrot.lane.b32.xlu0 %v1763, 57
      %v2324 = vpop.permute.xlu0 %2323
      %vm2325 = vcmp.lt.s32.totalorder %v1941, 57
      %v2326 = vsel %vm2325, %v2314, %v2320
      %v2327 = vsel %vm2325, %v2316, %v2322
      %v2328 = vsel %vm2325, %v2318, %v2324
      %v2329 = vsel %vm2325, %v2308, %v2314
      %v2330 = vsel %vm2325, %v2310, %v2316
      %v2331 = vsel %vm2325, %v2312, %v2318
      %v2332 = vsel %vm2325, %v2302, %v2308
      %v2333 = vsel %vm2325, %v2304, %v2310
      %v2334 = vsel %vm2325, %v2306, %v2312
      %v2335 = vsel %vm2325, %v2320, %v2302
      %v2336 = vsel %vm2325, %v2322, %v2304
      %v2337 = vsel %vm2325, %v2324, %v2306
      %s2338 = scalar_lea.vmem %s2, 6
      %v2339 = vld [vmem:[%s2338] ss:$8 sm:$0xf]
      %v2341 = vperm.slane %v2339, 0
      %v2342 = vperm.slane %v2339, 1
      %v2343 = vperm.slane %v2339, 2
      %v2344 = vperm.slane %v2339, 3
      %v2349 = vmul.f32 %v2335, %v2341
      %v2350 = vmul.f32 %v2332, %v2342
      %v2351 = vmul.f32 %v2329, %v2343
      %v2352 = vmul.f32 %v2326, %v2344
      %v2353 = vmul.f32 %v2336, %v2341
      %v2354 = vmul.f32 %v2333, %v2342
      %v2355 = vmul.f32 %v2330, %v2343
      %v2356 = vmul.f32 %v2327, %v2344
      %v2357 = vmul.f32 %v2337, %v2341
      %v2358 = vmul.f32 %v2334, %v2342
      %v2359 = vmul.f32 %v2331, %v2343
      %v2360 = vmul.f32 %v2328, %v2344
      %v2361 = vadd.f32 %v2085, %v2349
      %v2362 = vadd.f32 %v2086, %v2350
      %v2363 = vadd.f32 %v2087, %v2351
      %v2364 = vadd.f32 %v2088, %v2352
      %v2365 = vadd.f32 %v2089, %v2353
      %v2366 = vadd.f32 %v2090, %v2354
      %v2367 = vadd.f32 %v2091, %v2355
      %v2368 = vadd.f32 %v2092, %v2356
      %v2369 = vadd.f32 %v2093, %v2357
      %v2370 = vadd.f32 %v2094, %v2358
      %v2371 = vadd.f32 %v2095, %v2359
      %v2372 = vadd.f32 %v2096, %v2360
      %2373 = vrot.lane.b32.xlu0 %v1126, 56
      %v2374 = vpop.permute.xlu0 %2373
      %2375 = vrot.lane.b32.xlu0 %v1129, 56
      %v2376 = vpop.permute.xlu0 %2375
      %2377 = vrot.lane.b32.xlu0 %v1131, 56
      %v2378 = vpop.permute.xlu0 %2377
      %2379 = vrot.lane.b32.xlu0 %v1339, 56
      %v2380 = vpop.permute.xlu0 %2379
      %2381 = vrot.lane.b32.xlu0 %v1342, 56
      %v2382 = vpop.permute.xlu0 %2381
      %2383 = vrot.lane.b32.xlu0 %v1344, 56
      %v2384 = vpop.permute.xlu0 %2383
      %2385 = vrot.lane.b32.xlu0 %v1552, 56
      %v2386 = vpop.permute.xlu0 %2385
      %2387 = vrot.lane.b32.xlu0 %v1555, 56
      %v2388 = vpop.permute.xlu0 %2387
      %2389 = vrot.lane.b32.xlu0 %v1557, 56
      %v2390 = vpop.permute.xlu0 %2389
      %2391 = vrot.lane.b32.xlu0 %v1765, 56
      %v2392 = vpop.permute.xlu0 %2391
      %2393 = vrot.lane.b32.xlu0 %v1768, 56
      %v2394 = vpop.permute.xlu0 %2393
      %2395 = vrot.lane.b32.xlu0 %v1770, 56
      %v2396 = vpop.permute.xlu0 %2395
      %vm2397 = vcmp.lt.s32.totalorder %v1941, 56
      %v2398 = vsel %vm2397, %v2386, %v2392
      %v2399 = vsel %vm2397, %v2388, %v2394
      %v2400 = vsel %vm2397, %v2390, %v2396
      %v2401 = vsel %vm2397, %v2380, %v2386
      %v2402 = vsel %vm2397, %v2382, %v2388
      %v2403 = vsel %vm2397, %v2384, %v2390
      %v2404 = vsel %vm2397, %v2374, %v2380
      %v2405 = vsel %vm2397, %v2376, %v2382
      %v2406 = vsel %vm2397, %v2378, %v2384
      %v2407 = vsel %vm2397, %v2392, %v2374
      %v2408 = vsel %vm2397, %v2394, %v2376
      %v2409 = vsel %vm2397, %v2396, %v2378
      %s2410 = scalar_lea.vmem %s2, 7
      %v2411 = vld [vmem:[%s2410] ss:$8 sm:$0xf]
      %v2413 = vperm.slane %v2411, 0
      %v2414 = vperm.slane %v2411, 1
      %v2415 = vperm.slane %v2411, 2
      %v2416 = vperm.slane %v2411, 3
      %v2421 = vmul.f32 %v2407, %v2413
      %v2422 = vmul.f32 %v2404, %v2414
      %v2423 = vmul.f32 %v2401, %v2415
      %v2424 = vmul.f32 %v2398, %v2416
      %v2425 = vmul.f32 %v2408, %v2413
      %v2426 = vmul.f32 %v2405, %v2414
      %v2427 = vmul.f32 %v2402, %v2415
      %v2428 = vmul.f32 %v2399, %v2416
      %v2429 = vmul.f32 %v2409, %v2413
      %v2430 = vmul.f32 %v2406, %v2414
      %v2431 = vmul.f32 %v2403, %v2415
      %v2432 = vmul.f32 %v2400, %v2416
      %v2433 = vadd.f32 %v2145, %v2421
      %v2434 = vadd.f32 %v2146, %v2422
      %v2435 = vadd.f32 %v2147, %v2423
      %v2436 = vadd.f32 %v2148, %v2424
      %v2437 = vadd.f32 %v2149, %v2425
      %v2438 = vadd.f32 %v2150, %v2426
      %v2439 = vadd.f32 %v2151, %v2427
      %v2440 = vadd.f32 %v2152, %v2428
      %v2441 = vadd.f32 %v2153, %v2429
      %v2442 = vadd.f32 %v2154, %v2430
      %v2443 = vadd.f32 %v2155, %v2431
      %v2444 = vadd.f32 %v2156, %v2432
      %2445 = vrot.lane.b32.xlu0 %v1134, 55
      %v2446 = vpop.permute.xlu0 %2445
      %2447 = vrot.lane.b32.xlu0 %v1136, 55
      %v2448 = vpop.permute.xlu0 %2447
      %2449 = vrot.lane.b32.xlu0 %v1139, 55
      %v2450 = vpop.permute.xlu0 %2449
      %2451 = vrot.lane.b32.xlu0 %v1347, 55
      %v2452 = vpop.permute.xlu0 %2451
      %2453 = vrot.lane.b32.xlu0 %v1349, 55
      %v2454 = vpop.permute.xlu0 %2453
      %2455 = vrot.lane.b32.xlu0 %v1352, 55
      %v2456 = vpop.permute.xlu0 %2455
      %2457 = vrot.lane.b32.xlu0 %v1560, 55
      %v2458 = vpop.permute.xlu0 %2457
      %2459 = vrot.lane.b32.xlu0 %v1562, 55
      %v2460 = vpop.permute.xlu0 %2459
      %2461 = vrot.lane.b32.xlu0 %v1565, 55
      %v2462 = vpop.permute.xlu0 %2461
      %2463 = vrot.lane.b32.xlu0 %v1773, 55
      %v2464 = vpop.permute.xlu0 %2463
      %2465 = vrot.lane.b32.xlu0 %v1775, 55
      %v2466 = vpop.permute.xlu0 %2465
      %2467 = vrot.lane.b32.xlu0 %v1778, 55
      %v2468 = vpop.permute.xlu0 %2467
      %vm2469 = vcmp.lt.s32.totalorder %v1941, 55
      %v2470 = vsel %vm2469, %v2458, %v2464
      %v2471 = vsel %vm2469, %v2460, %v2466
      %v2472 = vsel %vm2469, %v2462, %v2468
      %v2473 = vsel %vm2469, %v2452, %v2458
      %v2474 = vsel %vm2469, %v2454, %v2460
      %v2475 = vsel %vm2469, %v2456, %v2462
      %v2476 = vsel %vm2469, %v2446, %v2452
      %v2477 = vsel %vm2469, %v2448, %v2454
      %v2478 = vsel %vm2469, %v2450, %v2456
      %v2479 = vsel %vm2469, %v2464, %v2446
      %v2480 = vsel %vm2469, %v2466, %v2448
      %v2481 = vsel %vm2469, %v2468, %v2450
      %s2482 = scalar_lea.vmem %s2, 32
      %v2483 = vld [vmem:[%s2482] ss:$8 sm:$0xf]
      %v2485 = vperm.slane %v2483, 0
      %v2486 = vperm.slane %v2483, 1
      %v2487 = vperm.slane %v2483, 2
      %v2488 = vperm.slane %v2483, 3
      %v2493 = vmul.f32 %v2479, %v2485
      %v2494 = vmul.f32 %v2476, %v2486
      %v2495 = vmul.f32 %v2473, %v2487
      %v2496 = vmul.f32 %v2470, %v2488
      %v2497 = vmul.f32 %v2480, %v2485
      %v2498 = vmul.f32 %v2477, %v2486
      %v2499 = vmul.f32 %v2474, %v2487
      %v2500 = vmul.f32 %v2471, %v2488
      %v2501 = vmul.f32 %v2481, %v2485
      %v2502 = vmul.f32 %v2478, %v2486
      %v2503 = vmul.f32 %v2475, %v2487
      %v2504 = vmul.f32 %v2472, %v2488
      %v2505 = vadd.f32 %v2217, %v2493
      %v2506 = vadd.f32 %v2218, %v2494
      %v2507 = vadd.f32 %v2219, %v2495
      %v2508 = vadd.f32 %v2220, %v2496
      %v2509 = vadd.f32 %v2221, %v2497
      %v2510 = vadd.f32 %v2222, %v2498
      %v2511 = vadd.f32 %v2223, %v2499
      %v2512 = vadd.f32 %v2224, %v2500
      %v2513 = vadd.f32 %v2225, %v2501
      %v2514 = vadd.f32 %v2226, %v2502
      %v2515 = vadd.f32 %v2227, %v2503
      %v2516 = vadd.f32 %v2228, %v2504
      %2517 = vrot.lane.b32.xlu0 %v1141, 9
      %v2518 = vpop.permute.xlu0 %2517
      %2519 = vrot.lane.b32.xlu0 %v1144, 9
      %v2520 = vpop.permute.xlu0 %2519
      %2521 = vrot.lane.b32.xlu0 %v1146, 9
      %v2522 = vpop.permute.xlu0 %2521
      %2523 = vrot.lane.b32.xlu0 %v1354, 9
      %v2524 = vpop.permute.xlu0 %2523
      %2525 = vrot.lane.b32.xlu0 %v1357, 9
      %v2526 = vpop.permute.xlu0 %2525
      %2527 = vrot.lane.b32.xlu0 %v1359, 9
      %v2528 = vpop.permute.xlu0 %2527
      %2529 = vrot.lane.b32.xlu0 %v1567, 9
      %v2530 = vpop.permute.xlu0 %2529
      %2531 = vrot.lane.b32.xlu0 %v1570, 9
      %v2532 = vpop.permute.xlu0 %2531
      %2533 = vrot.lane.b32.xlu0 %v1572, 9
      %v2534 = vpop.permute.xlu0 %2533
      %2535 = vrot.lane.b32.xlu0 %v1780, 9
      %v2536 = vpop.permute.xlu0 %2535
      %2537 = vrot.lane.b32.xlu0 %v1783, 9
      %v2538 = vpop.permute.xlu0 %2537
      %2539 = vrot.lane.b32.xlu0 %v1785, 9
      %v2540 = vpop.permute.xlu0 %2539
      %vm2541 = vcmp.lt.s32.totalorder %v1941, 9
      %v2542 = vsel %vm2541, %v2530, %v2536
      %v2543 = vsel %vm2541, %v2532, %v2538
      %v2544 = vsel %vm2541, %v2534, %v2540
      %v2545 = vsel %vm2541, %v2524, %v2530
      %v2546 = vsel %vm2541, %v2526, %v2532
      %v2547 = vsel %vm2541, %v2528, %v2534
      %v2548 = vsel %vm2541, %v2518, %v2524
      %v2549 = vsel %vm2541, %v2520, %v2526
      %v2550 = vsel %vm2541, %v2522, %v2528
      %v2551 = vsel %vm2541, %v2536, %v2518
      %v2552 = vsel %vm2541, %v2538, %v2520
      %v2553 = vsel %vm2541, %v2540, %v2522
      %s2554 = scalar_lea.vmem %s2, 33
      %v2555 = vld [vmem:[%s2554] ss:$8 sm:$0xf]
      %v2557 = vperm.slane %v2555, 0
      %v2558 = vperm.slane %v2555, 1
      %v2559 = vperm.slane %v2555, 2
      %v2560 = vperm.slane %v2555, 3
      %v2565 = vmul.f32 %v2551, %v2557
      %v2566 = vmul.f32 %v2548, %v2558
      %v2567 = vmul.f32 %v2545, %v2559
      %v2568 = vmul.f32 %v2542, %v2560
      %v2569 = vmul.f32 %v2552, %v2557
      %v2570 = vmul.f32 %v2549, %v2558
      %v2571 = vmul.f32 %v2546, %v2559
      %v2572 = vmul.f32 %v2543, %v2560
      %v2573 = vmul.f32 %v2553, %v2557
      %v2574 = vmul.f32 %v2550, %v2558
      %v2575 = vmul.f32 %v2547, %v2559
      %v2576 = vmul.f32 %v2544, %v2560
      %v2577 = vadd.f32 %v2289, %v2565
      %v2578 = vadd.f32 %v2290, %v2566
      %v2579 = vadd.f32 %v2291, %v2567
      %v2580 = vadd.f32 %v2292, %v2568
      %v2581 = vadd.f32 %v2293, %v2569
      %v2582 = vadd.f32 %v2294, %v2570
      %v2583 = vadd.f32 %v2295, %v2571
      %v2584 = vadd.f32 %v2296, %v2572
      %v2585 = vadd.f32 %v2297, %v2573
      %v2586 = vadd.f32 %v2298, %v2574
      %v2587 = vadd.f32 %v2299, %v2575
      %v2588 = vadd.f32 %v2300, %v2576
      %2589 = vrot.lane.b32.xlu0 %v1149, 8
      %v2590 = vpop.permute.xlu0 %2589
      %2591 = vrot.lane.b32.xlu0 %v1151, 8
      %v2592 = vpop.permute.xlu0 %2591
      %2593 = vrot.lane.b32.xlu0 %v1154, 8
      %v2594 = vpop.permute.xlu0 %2593
      %2595 = vrot.lane.b32.xlu0 %v1362, 8
      %v2596 = vpop.permute.xlu0 %2595
      %2597 = vrot.lane.b32.xlu0 %v1364, 8
      %v2598 = vpop.permute.xlu0 %2597
      %2599 = vrot.lane.b32.xlu0 %v1367, 8
      %v2600 = vpop.permute.xlu0 %2599
      %2601 = vrot.lane.b32.xlu0 %v1575, 8
      %v2602 = vpop.permute.xlu0 %2601
      %2603 = vrot.lane.b32.xlu0 %v1577, 8
      %v2604 = vpop.permute.xlu0 %2603
      %2605 = vrot.lane.b32.xlu0 %v1580, 8
      %v2606 = vpop.permute.xlu0 %2605
      %2607 = vrot.lane.b32.xlu0 %v1788, 8
      %v2608 = vpop.permute.xlu0 %2607
      %2609 = vrot.lane.b32.xlu0 %v1790, 8
      %v2610 = vpop.permute.xlu0 %2609
      %2611 = vrot.lane.b32.xlu0 %v1793, 8
      %v2612 = vpop.permute.xlu0 %2611
      %vm2613 = vcmp.lt.s32.totalorder %v1941, 8
      %v2614 = vsel %vm2613, %v2602, %v2608
      %v2615 = vsel %vm2613, %v2604, %v2610
      %v2616 = vsel %vm2613, %v2606, %v2612
      %v2617 = vsel %vm2613, %v2596, %v2602
      %v2618 = vsel %vm2613, %v2598, %v2604
      %v2619 = vsel %vm2613, %v2600, %v2606
      %v2620 = vsel %vm2613, %v2590, %v2596
      %v2621 = vsel %vm2613, %v2592, %v2598
      %v2622 = vsel %vm2613, %v2594, %v2600
      %v2623 = vsel %vm2613, %v2608, %v2590
      %v2624 = vsel %vm2613, %v2610, %v2592
      %v2625 = vsel %vm2613, %v2612, %v2594
      %s2626 = scalar_lea.vmem %s2, 34
      %v2627 = vld [vmem:[%s2626] ss:$8 sm:$0xf]
      %v2629 = vperm.slane %v2627, 0
      %v2630 = vperm.slane %v2627, 1
      %v2631 = vperm.slane %v2627, 2
      %v2632 = vperm.slane %v2627, 3
      %v2637 = vmul.f32 %v2623, %v2629
      %v2638 = vmul.f32 %v2620, %v2630
      %v2639 = vmul.f32 %v2617, %v2631
      %v2640 = vmul.f32 %v2614, %v2632
      %v2641 = vmul.f32 %v2624, %v2629
      %v2642 = vmul.f32 %v2621, %v2630
      %v2643 = vmul.f32 %v2618, %v2631
      %v2644 = vmul.f32 %v2615, %v2632
      %v2645 = vmul.f32 %v2625, %v2629
      %v2646 = vmul.f32 %v2622, %v2630
      %v2647 = vmul.f32 %v2619, %v2631
      %v2648 = vmul.f32 %v2616, %v2632
      %v2649 = vadd.f32 %v2361, %v2637
      %v2650 = vadd.f32 %v2362, %v2638
      %v2651 = vadd.f32 %v2363, %v2639
      %v2652 = vadd.f32 %v2364, %v2640
      %v2653 = vadd.f32 %v2365, %v2641
      %v2654 = vadd.f32 %v2366, %v2642
      %v2655 = vadd.f32 %v2367, %v2643
      %v2656 = vadd.f32 %v2368, %v2644
      %v2657 = vadd.f32 %v2369, %v2645
      %v2658 = vadd.f32 %v2370, %v2646
      %v2659 = vadd.f32 %v2371, %v2647
      %v2660 = vadd.f32 %v2372, %v2648
      %2661 = vrot.lane.b32.xlu0 %v1156, 7
      %v2662 = vpop.permute.xlu0 %2661
      %2663 = vrot.lane.b32.xlu0 %v1159, 7
      %v2664 = vpop.permute.xlu0 %2663
      %2665 = vrot.lane.b32.xlu0 %v1161, 7
      %v2666 = vpop.permute.xlu0 %2665
      %2667 = vrot.lane.b32.xlu0 %v1369, 7
      %v2668 = vpop.permute.xlu0 %2667
      %2669 = vrot.lane.b32.xlu0 %v1372, 7
      %v2670 = vpop.permute.xlu0 %2669
      %2671 = vrot.lane.b32.xlu0 %v1374, 7
      %v2672 = vpop.permute.xlu0 %2671
      %2673 = vrot.lane.b32.xlu0 %v1582, 7
      %v2674 = vpop.permute.xlu0 %2673
      %2675 = vrot.lane.b32.xlu0 %v1585, 7
      %v2676 = vpop.permute.xlu0 %2675
      %2677 = vrot.lane.b32.xlu0 %v1587, 7
      %v2678 = vpop.permute.xlu0 %2677
      %2679 = vrot.lane.b32.xlu0 %v1795, 7
      %v2680 = vpop.permute.xlu0 %2679
      %2681 = vrot.lane.b32.xlu0 %v1798, 7
      %v2682 = vpop.permute.xlu0 %2681
      %2683 = vrot.lane.b32.xlu0 %v1800, 7
      %v2684 = vpop.permute.xlu0 %2683
      %vm2685 = vcmp.lt.s32.totalorder %v1941, 7
      %v2686 = vsel %vm2685, %v2674, %v2680
      %v2687 = vsel %vm2685, %v2676, %v2682
      %v2688 = vsel %vm2685, %v2678, %v2684
      %v2689 = vsel %vm2685, %v2668, %v2674
      %v2690 = vsel %vm2685, %v2670, %v2676
      %v2691 = vsel %vm2685, %v2672, %v2678
      %v2692 = vsel %vm2685, %v2662, %v2668
      %v2693 = vsel %vm2685, %v2664, %v2670
      %v2694 = vsel %vm2685, %v2666, %v2672
      %v2695 = vsel %vm2685, %v2680, %v2662
      %v2696 = vsel %vm2685, %v2682, %v2664
      %v2697 = vsel %vm2685, %v2684, %v2666
      %s2698 = scalar_lea.vmem %s2, 35
      %v2699 = vld [vmem:[%s2698] ss:$8 sm:$0xf]
      %v2701 = vperm.slane %v2699, 0
      %v2702 = vperm.slane %v2699, 1
      %v2703 = vperm.slane %v2699, 2
      %v2704 = vperm.slane %v2699, 3
      %v2709 = vmul.f32 %v2695, %v2701
      %v2710 = vmul.f32 %v2692, %v2702
      %v2711 = vmul.f32 %v2689, %v2703
      %v2712 = vmul.f32 %v2686, %v2704
      %v2713 = vmul.f32 %v2696, %v2701
      %v2714 = vmul.f32 %v2693, %v2702
      %v2715 = vmul.f32 %v2690, %v2703
      %v2716 = vmul.f32 %v2687, %v2704
      %v2717 = vmul.f32 %v2697, %v2701
      %v2718 = vmul.f32 %v2694, %v2702
      %v2719 = vmul.f32 %v2691, %v2703
      %v2720 = vmul.f32 %v2688, %v2704
      %v2721 = vadd.f32 %v2433, %v2709
      %v2722 = vadd.f32 %v2434, %v2710
      %v2723 = vadd.f32 %v2435, %v2711
      %v2724 = vadd.f32 %v2436, %v2712
      %v2725 = vadd.f32 %v2437, %v2713
      %v2726 = vadd.f32 %v2438, %v2714
      %v2727 = vadd.f32 %v2439, %v2715
      %v2728 = vadd.f32 %v2440, %v2716
      %v2729 = vadd.f32 %v2441, %v2717
      %v2730 = vadd.f32 %v2442, %v2718
      %v2731 = vadd.f32 %v2443, %v2719
      %v2732 = vadd.f32 %v2444, %v2720
      %2733 = vrot.lane.b32.xlu0 %v1164, 1
      %v2734 = vpop.permute.xlu0 %2733
      %2735 = vrot.lane.b32.xlu0 %v1166, 1
      %v2736 = vpop.permute.xlu0 %2735
      %2737 = vrot.lane.b32.xlu0 %v1169, 1
      %v2738 = vpop.permute.xlu0 %2737
      %2739 = vrot.lane.b32.xlu0 %v1377, 1
      %v2740 = vpop.permute.xlu0 %2739
      %2741 = vrot.lane.b32.xlu0 %v1379, 1
      %v2742 = vpop.permute.xlu0 %2741
      %2743 = vrot.lane.b32.xlu0 %v1382, 1
      %v2744 = vpop.permute.xlu0 %2743
      %2745 = vrot.lane.b32.xlu0 %v1590, 1
      %v2746 = vpop.permute.xlu0 %2745
      %2747 = vrot.lane.b32.xlu0 %v1592, 1
      %v2748 = vpop.permute.xlu0 %2747
      %2749 = vrot.lane.b32.xlu0 %v1595, 1
      %v2750 = vpop.permute.xlu0 %2749
      %2751 = vrot.lane.b32.xlu0 %v1803, 1
      %v2752 = vpop.permute.xlu0 %2751
      %2753 = vrot.lane.b32.xlu0 %v1805, 1
      %v2754 = vpop.permute.xlu0 %2753
      %2755 = vrot.lane.b32.xlu0 %v1808, 1
      %v2756 = vpop.permute.xlu0 %2755
      %vm2757 = vcmp.lt.s32.totalorder %v1941, 1
      %v2758 = vsel %vm2757, %v2746, %v2752
      %v2759 = vsel %vm2757, %v2748, %v2754
      %v2760 = vsel %vm2757, %v2750, %v2756
      %v2761 = vsel %vm2757, %v2740, %v2746
      %v2762 = vsel %vm2757, %v2742, %v2748
      %v2763 = vsel %vm2757, %v2744, %v2750
      %v2764 = vsel %vm2757, %v2734, %v2740
      %v2765 = vsel %vm2757, %v2736, %v2742
      %v2766 = vsel %vm2757, %v2738, %v2744
      %v2767 = vsel %vm2757, %v2752, %v2734
      %v2768 = vsel %vm2757, %v2754, %v2736
      %v2769 = vsel %vm2757, %v2756, %v2738
      %s2770 = scalar_lea.vmem %s2, 36
      %v2771 = vld [vmem:[%s2770] ss:$8 sm:$0xf]
      %v2773 = vperm.slane %v2771, 0
      %v2774 = vperm.slane %v2771, 1
      %v2775 = vperm.slane %v2771, 2
      %v2776 = vperm.slane %v2771, 3
      %v2781 = vmul.f32 %v2767, %v2773
      %v2782 = vmul.f32 %v2764, %v2774
      %v2783 = vmul.f32 %v2761, %v2775
      %v2784 = vmul.f32 %v2758, %v2776
      %v2785 = vmul.f32 %v2768, %v2773
      %v2786 = vmul.f32 %v2765, %v2774
      %v2787 = vmul.f32 %v2762, %v2775
      %v2788 = vmul.f32 %v2759, %v2776
      %v2789 = vmul.f32 %v2769, %v2773
      %v2790 = vmul.f32 %v2766, %v2774
      %v2791 = vmul.f32 %v2763, %v2775
      %v2792 = vmul.f32 %v2760, %v2776
      %v2793 = vadd.f32 %v2505, %v2781
      %v2794 = vadd.f32 %v2506, %v2782
      %v2795 = vadd.f32 %v2507, %v2783
      %v2796 = vadd.f32 %v2508, %v2784
      %v2797 = vadd.f32 %v2509, %v2785
      %v2798 = vadd.f32 %v2510, %v2786
      %v2799 = vadd.f32 %v2511, %v2787
      %v2800 = vadd.f32 %v2512, %v2788
      %v2801 = vadd.f32 %v2513, %v2789
      %v2802 = vadd.f32 %v2514, %v2790
      %v2803 = vadd.f32 %v2515, %v2791
      %v2804 = vadd.f32 %v2516, %v2792
      %v2805 = vadd.f32 %v2577, %v1171
      %v2806 = vadd.f32 %v2578, %v1384
      %v2807 = vadd.f32 %v2579, %v1597
      %v2808 = vadd.f32 %v2580, %v1810
      %v2809 = vadd.f32 %v2581, %v1174
      %v2810 = vadd.f32 %v2582, %v1387
      %v2811 = vadd.f32 %v2583, %v1600
      %v2812 = vadd.f32 %v2584, %v1813
      %v2813 = vadd.f32 %v2585, %v1176
      %v2814 = vadd.f32 %v2586, %v1389
      %v2815 = vadd.f32 %v2587, %v1602
      %v2816 = vadd.f32 %v2588, %v1815
      %2817 = vrot.lane.b32.xlu0 %v1179, 127
      %v2818 = vpop.permute.xlu0 %2817
      %2819 = vrot.lane.b32.xlu0 %v1181, 127
      %v2820 = vpop.permute.xlu0 %2819
      %2821 = vrot.lane.b32.xlu0 %v1184, 127
      %v2822 = vpop.permute.xlu0 %2821
      %2823 = vrot.lane.b32.xlu0 %v1392, 127
      %v2824 = vpop.permute.xlu0 %2823
      %2825 = vrot.lane.b32.xlu0 %v1394, 127
      %v2826 = vpop.permute.xlu0 %2825
      %2827 = vrot.lane.b32.xlu0 %v1397, 127
      %v2828 = vpop.permute.xlu0 %2827
      %2829 = vrot.lane.b32.xlu0 %v1605, 127
      %v2830 = vpop.permute.xlu0 %2829
      %2831 = vrot.lane.b32.xlu0 %v1607, 127
      %v2832 = vpop.permute.xlu0 %2831
      %2833 = vrot.lane.b32.xlu0 %v1610, 127
      %v2834 = vpop.permute.xlu0 %2833
      %2835 = vrot.lane.b32.xlu0 %v1818, 127
      %v2836 = vpop.permute.xlu0 %2835
      %2837 = vrot.lane.b32.xlu0 %v1820, 127
      %v2838 = vpop.permute.xlu0 %2837
      %2839 = vrot.lane.b32.xlu0 %v1823, 127
      %v2840 = vpop.permute.xlu0 %2839
      %vm2841 = vcmp.lt.s32.totalorder %v1941, 127
      %v2842 = vsel %vm2841, %v2830, %v2836
      %v2843 = vsel %vm2841, %v2832, %v2838
      %v2844 = vsel %vm2841, %v2834, %v2840
      %v2845 = vsel %vm2841, %v2824, %v2830
      %v2846 = vsel %vm2841, %v2826, %v2832
      %v2847 = vsel %vm2841, %v2828, %v2834
      %v2848 = vsel %vm2841, %v2818, %v2824
      %v2849 = vsel %vm2841, %v2820, %v2826
      %v2850 = vsel %vm2841, %v2822, %v2828
      %v2851 = vsel %vm2841, %v2836, %v2818
      %v2852 = vsel %vm2841, %v2838, %v2820
      %v2853 = vsel %vm2841, %v2840, %v2822
      %s2854 = scalar_lea.vmem %s2, 38
      %v2855 = vld [vmem:[%s2854] ss:$8 sm:$0xf]
      %v2857 = vperm.slane %v2855, 0
      %v2858 = vperm.slane %v2855, 1
      %v2859 = vperm.slane %v2855, 2
      %v2860 = vperm.slane %v2855, 3
      %v2865 = vmul.f32 %v2848, %v2857
      %v2866 = vmul.f32 %v2845, %v2858
      %v2867 = vmul.f32 %v2842, %v2859
      %v2868 = vmul.f32 %v2851, %v2860
      %v2869 = vmul.f32 %v2849, %v2857
      %v2870 = vmul.f32 %v2846, %v2858
      %v2871 = vmul.f32 %v2843, %v2859
      %v2872 = vmul.f32 %v2852, %v2860
      %v2873 = vmul.f32 %v2850, %v2857
      %v2874 = vmul.f32 %v2847, %v2858
      %v2875 = vmul.f32 %v2844, %v2859
      %v2876 = vmul.f32 %v2853, %v2860
      %v2877 = vadd.f32 %v2649, %v2865
      %v2878 = vadd.f32 %v2650, %v2866
      %v2879 = vadd.f32 %v2651, %v2867
      %v2880 = vadd.f32 %v2652, %v2868
      %v2881 = vadd.f32 %v2653, %v2869
      %v2882 = vadd.f32 %v2654, %v2870
      %v2883 = vadd.f32 %v2655, %v2871
      %v2884 = vadd.f32 %v2656, %v2872
      %v2885 = vadd.f32 %v2657, %v2873
      %v2886 = vadd.f32 %v2658, %v2874
      %v2887 = vadd.f32 %v2659, %v2875
      %v2888 = vadd.f32 %v2660, %v2876
      %2889 = vrot.lane.b32.xlu0 %v1186, 121
      %v2890 = vpop.permute.xlu0 %2889
      %2891 = vrot.lane.b32.xlu0 %v1189, 121
      %v2892 = vpop.permute.xlu0 %2891
      %2893 = vrot.lane.b32.xlu0 %v1191, 121
      %v2894 = vpop.permute.xlu0 %2893
      %2895 = vrot.lane.b32.xlu0 %v1399, 121
      %v2896 = vpop.permute.xlu0 %2895
      %2897 = vrot.lane.b32.xlu0 %v1402, 121
      %v2898 = vpop.permute.xlu0 %2897
      %2899 = vrot.lane.b32.xlu0 %v1404, 121
      %v2900 = vpop.permute.xlu0 %2899
      %2901 = vrot.lane.b32.xlu0 %v1612, 121
      %v2902 = vpop.permute.xlu0 %2901
      %2903 = vrot.lane.b32.xlu0 %v1615, 121
      %v2904 = vpop.permute.xlu0 %2903
      %2905 = vrot.lane.b32.xlu0 %v1617, 121
      %v2906 = vpop.permute.xlu0 %2905
      %2907 = vrot.lane.b32.xlu0 %v1825, 121
      %v2908 = vpop.permute.xlu0 %2907
      %2909 = vrot.lane.b32.xlu0 %v1828, 121
      %v2910 = vpop.permute.xlu0 %2909
      %2911 = vrot.lane.b32.xlu0 %v1830, 121
      %v2912 = vpop.permute.xlu0 %2911
      %vm2913 = vcmp.lt.s32.totalorder %v1941, 121
      %v2914 = vsel %vm2913, %v2902, %v2908
      %v2915 = vsel %vm2913, %v2904, %v2910
      %v2916 = vsel %vm2913, %v2906, %v2912
      %v2917 = vsel %vm2913, %v2896, %v2902
      %v2918 = vsel %vm2913, %v2898, %v2904
      %v2919 = vsel %vm2913, %v2900, %v2906
      %v2920 = vsel %vm2913, %v2890, %v2896
      %v2921 = vsel %vm2913, %v2892, %v2898
      %v2922 = vsel %vm2913, %v2894, %v2900
      %v2923 = vsel %vm2913, %v2908, %v2890
      %v2924 = vsel %vm2913, %v2910, %v2892
      %v2925 = vsel %vm2913, %v2912, %v2894
      %s2926 = scalar_lea.vmem %s2, 39
      %v2927 = vld [vmem:[%s2926] ss:$8 sm:$0xf]
      %v2929 = vperm.slane %v2927, 0
      %v2930 = vperm.slane %v2927, 1
      %v2931 = vperm.slane %v2927, 2
      %v2932 = vperm.slane %v2927, 3
      %v2937 = vmul.f32 %v2920, %v2929
      %v2938 = vmul.f32 %v2917, %v2930
      %v2939 = vmul.f32 %v2914, %v2931
      %v2940 = vmul.f32 %v2923, %v2932
      %v2941 = vmul.f32 %v2921, %v2929
      %v2942 = vmul.f32 %v2918, %v2930
      %v2943 = vmul.f32 %v2915, %v2931
      %v2944 = vmul.f32 %v2924, %v2932
      %v2945 = vmul.f32 %v2922, %v2929
      %v2946 = vmul.f32 %v2919, %v2930
      %v2947 = vmul.f32 %v2916, %v2931
      %v2948 = vmul.f32 %v2925, %v2932
      %v2949 = vadd.f32 %v2721, %v2937
      %v2950 = vadd.f32 %v2722, %v2938
      %v2951 = vadd.f32 %v2723, %v2939
      %v2952 = vadd.f32 %v2724, %v2940
      %v2953 = vadd.f32 %v2725, %v2941
      %v2954 = vadd.f32 %v2726, %v2942
      %v2955 = vadd.f32 %v2727, %v2943
      %v2956 = vadd.f32 %v2728, %v2944
      %v2957 = vadd.f32 %v2729, %v2945
      %v2958 = vadd.f32 %v2730, %v2946
      %v2959 = vadd.f32 %v2731, %v2947
      %v2960 = vadd.f32 %v2732, %v2948
      %2961 = vrot.lane.b32.xlu0 %v1194, 120
      %v2962 = vpop.permute.xlu0 %2961
      %2963 = vrot.lane.b32.xlu0 %v1196, 120
      %v2964 = vpop.permute.xlu0 %2963
      %2965 = vrot.lane.b32.xlu0 %v1199, 120
      %v2966 = vpop.permute.xlu0 %2965
      %2967 = vrot.lane.b32.xlu0 %v1407, 120
      %v2968 = vpop.permute.xlu0 %2967
      %2969 = vrot.lane.b32.xlu0 %v1409, 120
      %v2970 = vpop.permute.xlu0 %2969
      %2971 = vrot.lane.b32.xlu0 %v1412, 120
      %v2972 = vpop.permute.xlu0 %2971
      %2973 = vrot.lane.b32.xlu0 %v1620, 120
      %v2974 = vpop.permute.xlu0 %2973
      %2975 = vrot.lane.b32.xlu0 %v1622, 120
      %v2976 = vpop.permute.xlu0 %2975
      %2977 = vrot.lane.b32.xlu0 %v1625, 120
      %v2978 = vpop.permute.xlu0 %2977
      %2979 = vrot.lane.b32.xlu0 %v1833, 120
      %v2980 = vpop.permute.xlu0 %2979
      %2981 = vrot.lane.b32.xlu0 %v1835, 120
      %v2982 = vpop.permute.xlu0 %2981
      %2983 = vrot.lane.b32.xlu0 %v1838, 120
      %v2984 = vpop.permute.xlu0 %2983
      %vm2985 = vcmp.lt.s32.totalorder %v1941, 120
      %v2986 = vsel %vm2985, %v2974, %v2980
      %v2987 = vsel %vm2985, %v2976, %v2982
      %v2988 = vsel %vm2985, %v2978, %v2984
      %v2989 = vsel %vm2985, %v2968, %v2974
      %v2990 = vsel %vm2985, %v2970, %v2976
      %v2991 = vsel %vm2985, %v2972, %v2978
      %v2992 = vsel %vm2985, %v2962, %v2968
      %v2993 = vsel %vm2985, %v2964, %v2970
      %v2994 = vsel %vm2985, %v2966, %v2972
      %v2995 = vsel %vm2985, %v2980, %v2962
      %v2996 = vsel %vm2985, %v2982, %v2964
      %v2997 = vsel %vm2985, %v2984, %v2966
      %s2998 = scalar_lea.vmem %s2, 64
      %v2999 = vld [vmem:[%s2998] ss:$8 sm:$0xf]
      %v3001 = vperm.slane %v2999, 0
      %v3002 = vperm.slane %v2999, 1
      %v3003 = vperm.slane %v2999, 2
      %v3004 = vperm.slane %v2999, 3
      %v3009 = vmul.f32 %v2992, %v3001
      %v3010 = vmul.f32 %v2989, %v3002
      %v3011 = vmul.f32 %v2986, %v3003
      %v3012 = vmul.f32 %v2995, %v3004
      %v3013 = vmul.f32 %v2993, %v3001
      %v3014 = vmul.f32 %v2990, %v3002
      %v3015 = vmul.f32 %v2987, %v3003
      %v3016 = vmul.f32 %v2996, %v3004
      %v3017 = vmul.f32 %v2994, %v3001
      %v3018 = vmul.f32 %v2991, %v3002
      %v3019 = vmul.f32 %v2988, %v3003
      %v3020 = vmul.f32 %v2997, %v3004
      %v3021 = vadd.f32 %v2793, %v3009
      %v3022 = vadd.f32 %v2794, %v3010
      %v3023 = vadd.f32 %v2795, %v3011
      %v3024 = vadd.f32 %v2796, %v3012
      %v3025 = vadd.f32 %v2797, %v3013
      %v3026 = vadd.f32 %v2798, %v3014
      %v3027 = vadd.f32 %v2799, %v3015
      %v3028 = vadd.f32 %v2800, %v3016
      %v3029 = vadd.f32 %v2801, %v3017
      %v3030 = vadd.f32 %v2802, %v3018
      %v3031 = vadd.f32 %v2803, %v3019
      %v3032 = vadd.f32 %v2804, %v3020
      %3033 = vrot.lane.b32.xlu0 %v1201, 119
      %v3034 = vpop.permute.xlu0 %3033
      %3035 = vrot.lane.b32.xlu0 %v1204, 119
      %v3036 = vpop.permute.xlu0 %3035
      %3037 = vrot.lane.b32.xlu0 %v1206, 119
      %v3038 = vpop.permute.xlu0 %3037
      %3039 = vrot.lane.b32.xlu0 %v1414, 119
      %v3040 = vpop.permute.xlu0 %3039
      %3041 = vrot.lane.b32.xlu0 %v1417, 119
      %v3042 = vpop.permute.xlu0 %3041
      %3043 = vrot.lane.b32.xlu0 %v1419, 119
      %v3044 = vpop.permute.xlu0 %3043
      %3045 = vrot.lane.b32.xlu0 %v1627, 119
      %v3046 = vpop.permute.xlu0 %3045
      %3047 = vrot.lane.b32.xlu0 %v1630, 119
      %v3048 = vpop.permute.xlu0 %3047
      %3049 = vrot.lane.b32.xlu0 %v1632, 119
      %v3050 = vpop.permute.xlu0 %3049
      %3051 = vrot.lane.b32.xlu0 %v1840, 119
      %v3052 = vpop.permute.xlu0 %3051
      %3053 = vrot.lane.b32.xlu0 %v1843, 119
      %v3054 = vpop.permute.xlu0 %3053
      %3055 = vrot.lane.b32.xlu0 %v1845, 119
      %v3056 = vpop.permute.xlu0 %3055
      %vm3057 = vcmp.lt.s32.totalorder %v1941, 119
      %v3058 = vsel %vm3057, %v3046, %v3052
      %v3059 = vsel %vm3057, %v3048, %v3054
      %v3060 = vsel %vm3057, %v3050, %v3056
      %v3061 = vsel %vm3057, %v3040, %v3046
      %v3062 = vsel %vm3057, %v3042, %v3048
      %v3063 = vsel %vm3057, %v3044, %v3050
      %v3064 = vsel %vm3057, %v3034, %v3040
      %v3065 = vsel %vm3057, %v3036, %v3042
      %v3066 = vsel %vm3057, %v3038, %v3044
      %v3067 = vsel %vm3057, %v3052, %v3034
      %v3068 = vsel %vm3057, %v3054, %v3036
      %v3069 = vsel %vm3057, %v3056, %v3038
      %s3070 = scalar_lea.vmem %s2, 65
      %v3071 = vld [vmem:[%s3070] ss:$8 sm:$0xf]
      %v3073 = vperm.slane %v3071, 0
      %v3074 = vperm.slane %v3071, 1
      %v3075 = vperm.slane %v3071, 2
      %v3076 = vperm.slane %v3071, 3
      %v3081 = vmul.f32 %v3064, %v3073
      %v3082 = vmul.f32 %v3061, %v3074
      %v3083 = vmul.f32 %v3058, %v3075
      %v3084 = vmul.f32 %v3067, %v3076
      %v3085 = vmul.f32 %v3065, %v3073
      %v3086 = vmul.f32 %v3062, %v3074
      %v3087 = vmul.f32 %v3059, %v3075
      %v3088 = vmul.f32 %v3068, %v3076
      %v3089 = vmul.f32 %v3066, %v3073
      %v3090 = vmul.f32 %v3063, %v3074
      %v3091 = vmul.f32 %v3060, %v3075
      %v3092 = vmul.f32 %v3069, %v3076
      %v3093 = vadd.f32 %v2805, %v3081
      %v3094 = vadd.f32 %v2806, %v3082
      %v3095 = vadd.f32 %v2807, %v3083
      %v3096 = vadd.f32 %v2808, %v3084
      %v3097 = vadd.f32 %v2809, %v3085
      %v3098 = vadd.f32 %v2810, %v3086
      %v3099 = vadd.f32 %v2811, %v3087
      %v3100 = vadd.f32 %v2812, %v3088
      %v3101 = vadd.f32 %v2813, %v3089
      %v3102 = vadd.f32 %v2814, %v3090
      %v3103 = vadd.f32 %v2815, %v3091
      %v3104 = vadd.f32 %v2816, %v3092
      %3105 = vrot.lane.b32.xlu0 %v1209, 73
      %v3106 = vpop.permute.xlu0 %3105
      %3107 = vrot.lane.b32.xlu0 %v1211, 73
      %v3108 = vpop.permute.xlu0 %3107
      %3109 = vrot.lane.b32.xlu0 %v1214, 73
      %v3110 = vpop.permute.xlu0 %3109
      %3111 = vrot.lane.b32.xlu0 %v1422, 73
      %v3112 = vpop.permute.xlu0 %3111
      %3113 = vrot.lane.b32.xlu0 %v1424, 73
      %v3114 = vpop.permute.xlu0 %3113
      %3115 = vrot.lane.b32.xlu0 %v1427, 73
      %v3116 = vpop.permute.xlu0 %3115
      %3117 = vrot.lane.b32.xlu0 %v1635, 73
      %v3118 = vpop.permute.xlu0 %3117
      %3119 = vrot.lane.b32.xlu0 %v1637, 73
      %v3120 = vpop.permute.xlu0 %3119
      %3121 = vrot.lane.b32.xlu0 %v1640, 73
      %v3122 = vpop.permute.xlu0 %3121
      %3123 = vrot.lane.b32.xlu0 %v1848, 73
      %v3124 = vpop.permute.xlu0 %3123
      %3125 = vrot.lane.b32.xlu0 %v1850, 73
      %v3126 = vpop.permute.xlu0 %3125
      %3127 = vrot.lane.b32.xlu0 %v1853, 73
      %v3128 = vpop.permute.xlu0 %3127
      %v3129 = vsel %vm1942, %v3118, %v3124
      %v3130 = vsel %vm1942, %v3120, %v3126
      %v3131 = vsel %vm1942, %v3122, %v3128
      %v3132 = vsel %vm1942, %v3112, %v3118
      %v3133 = vsel %vm1942, %v3114, %v3120
      %v3134 = vsel %vm1942, %v3116, %v3122
      %v3135 = vsel %vm1942, %v3106, %v3112
      %v3136 = vsel %vm1942, %v3108, %v3114
      %v3137 = vsel %vm1942, %v3110, %v3116
      %v3138 = vsel %vm1942, %v3124, %v3106
      %v3139 = vsel %vm1942, %v3126, %v3108
      %v3140 = vsel %vm1942, %v3128, %v3110
      %s3141 = scalar_lea.vmem %s2, 66
      %v3142 = vld [vmem:[%s3141] ss:$8 sm:$0xf]
      %v3144 = vperm.slane %v3142, 0
      %v3145 = vperm.slane %v3142, 1
      %v3146 = vperm.slane %v3142, 2
      %v3147 = vperm.slane %v3142, 3
      %v3152 = vmul.f32 %v3135, %v3144
      %v3153 = vmul.f32 %v3132, %v3145
      %v3154 = vmul.f32 %v3129, %v3146
      %v3155 = vmul.f32 %v3138, %v3147
      %v3156 = vmul.f32 %v3136, %v3144
      %v3157 = vmul.f32 %v3133, %v3145
      %v3158 = vmul.f32 %v3130, %v3146
      %v3159 = vmul.f32 %v3139, %v3147
      %v3160 = vmul.f32 %v3137, %v3144
      %v3161 = vmul.f32 %v3134, %v3145
      %v3162 = vmul.f32 %v3131, %v3146
      %v3163 = vmul.f32 %v3140, %v3147
      %v3164 = vadd.f32 %v2877, %v3152
      %v3165 = vadd.f32 %v2878, %v3153
      %v3166 = vadd.f32 %v2879, %v3154
      %v3167 = vadd.f32 %v2880, %v3155
      %v3168 = vadd.f32 %v2881, %v3156
      %v3169 = vadd.f32 %v2882, %v3157
      %v3170 = vadd.f32 %v2883, %v3158
      %v3171 = vadd.f32 %v2884, %v3159
      %v3172 = vadd.f32 %v2885, %v3160
      %v3173 = vadd.f32 %v2886, %v3161
      %v3174 = vadd.f32 %v2887, %v3162
      %v3175 = vadd.f32 %v2888, %v3163
      %3176 = vrot.lane.b32.xlu0 %v1216, 72
      %v3177 = vpop.permute.xlu0 %3176
      %3178 = vrot.lane.b32.xlu0 %v1219, 72
      %v3179 = vpop.permute.xlu0 %3178
      %3180 = vrot.lane.b32.xlu0 %v1221, 72
      %v3181 = vpop.permute.xlu0 %3180
      %3182 = vrot.lane.b32.xlu0 %v1429, 72
      %v3183 = vpop.permute.xlu0 %3182
      %3184 = vrot.lane.b32.xlu0 %v1432, 72
      %v3185 = vpop.permute.xlu0 %3184
      %3186 = vrot.lane.b32.xlu0 %v1434, 72
      %v3187 = vpop.permute.xlu0 %3186
      %3188 = vrot.lane.b32.xlu0 %v1642, 72
      %v3189 = vpop.permute.xlu0 %3188
      %3190 = vrot.lane.b32.xlu0 %v1645, 72
      %v3191 = vpop.permute.xlu0 %3190
      %3192 = vrot.lane.b32.xlu0 %v1647, 72
      %v3193 = vpop.permute.xlu0 %3192
      %3194 = vrot.lane.b32.xlu0 %v1855, 72
      %v3195 = vpop.permute.xlu0 %3194
      %3196 = vrot.lane.b32.xlu0 %v1858, 72
      %v3197 = vpop.permute.xlu0 %3196
      %3198 = vrot.lane.b32.xlu0 %v1860, 72
      %v3199 = vpop.permute.xlu0 %3198
      %v3200 = vsel %vm2001, %v3189, %v3195
      %v3201 = vsel %vm2001, %v3191, %v3197
      %v3202 = vsel %vm2001, %v3193, %v3199
      %v3203 = vsel %vm2001, %v3183, %v3189
      %v3204 = vsel %vm2001, %v3185, %v3191
      %v3205 = vsel %vm2001, %v3187, %v3193
      %v3206 = vsel %vm2001, %v3177, %v3183
      %v3207 = vsel %vm2001, %v3179, %v3185
      %v3208 = vsel %vm2001, %v3181, %v3187
      %v3209 = vsel %vm2001, %v3195, %v3177
      %v3210 = vsel %vm2001, %v3197, %v3179
      %v3211 = vsel %vm2001, %v3199, %v3181
      %s3212 = scalar_lea.vmem %s2, 67
      %v3213 = vld [vmem:[%s3212] ss:$8 sm:$0xf]
      %v3215 = vperm.slane %v3213, 0
      %v3216 = vperm.slane %v3213, 1
      %v3217 = vperm.slane %v3213, 2
      %v3218 = vperm.slane %v3213, 3
      %v3223 = vmul.f32 %v3206, %v3215
      %v3224 = vmul.f32 %v3203, %v3216
      %v3225 = vmul.f32 %v3200, %v3217
      %v3226 = vmul.f32 %v3209, %v3218
      %v3227 = vmul.f32 %v3207, %v3215
      %v3228 = vmul.f32 %v3204, %v3216
      %v3229 = vmul.f32 %v3201, %v3217
      %v3230 = vmul.f32 %v3210, %v3218
      %v3231 = vmul.f32 %v3208, %v3215
      %v3232 = vmul.f32 %v3205, %v3216
      %v3233 = vmul.f32 %v3202, %v3217
      %v3234 = vmul.f32 %v3211, %v3218
      %v3235 = vadd.f32 %v2949, %v3223
      %v3236 = vadd.f32 %v2950, %v3224
      %v3237 = vadd.f32 %v2951, %v3225
      %v3238 = vadd.f32 %v2952, %v3226
      %v3239 = vadd.f32 %v2953, %v3227
      %v3240 = vadd.f32 %v2954, %v3228
      %v3241 = vadd.f32 %v2955, %v3229
      %v3242 = vadd.f32 %v2956, %v3230
      %v3243 = vadd.f32 %v2957, %v3231
      %v3244 = vadd.f32 %v2958, %v3232
      %v3245 = vadd.f32 %v2959, %v3233
      %v3246 = vadd.f32 %v2960, %v3234
      %3247 = vrot.lane.b32.xlu0 %v1224, 71
      %v3248 = vpop.permute.xlu0 %3247
      %3249 = vrot.lane.b32.xlu0 %v1226, 71
      %v3250 = vpop.permute.xlu0 %3249
      %3251 = vrot.lane.b32.xlu0 %v1229, 71
      %v3252 = vpop.permute.xlu0 %3251
      %3253 = vrot.lane.b32.xlu0 %v1437, 71
      %v3254 = vpop.permute.xlu0 %3253
      %3255 = vrot.lane.b32.xlu0 %v1439, 71
      %v3256 = vpop.permute.xlu0 %3255
      %3257 = vrot.lane.b32.xlu0 %v1442, 71
      %v3258 = vpop.permute.xlu0 %3257
      %3259 = vrot.lane.b32.xlu0 %v1650, 71
      %v3260 = vpop.permute.xlu0 %3259
      %3261 = vrot.lane.b32.xlu0 %v1652, 71
      %v3262 = vpop.permute.xlu0 %3261
      %3263 = vrot.lane.b32.xlu0 %v1655, 71
      %v3264 = vpop.permute.xlu0 %3263
      %3265 = vrot.lane.b32.xlu0 %v1863, 71
      %v3266 = vpop.permute.xlu0 %3265
      %3267 = vrot.lane.b32.xlu0 %v1865, 71
      %v3268 = vpop.permute.xlu0 %3267
      %3269 = vrot.lane.b32.xlu0 %v1868, 71
      %v3270 = vpop.permute.xlu0 %3269
      %v3271 = vsel %vm2061, %v3260, %v3266
      %v3272 = vsel %vm2061, %v3262, %v3268
      %v3273 = vsel %vm2061, %v3264, %v3270
      %v3274 = vsel %vm2061, %v3254, %v3260
      %v3275 = vsel %vm2061, %v3256, %v3262
      %v3276 = vsel %vm2061, %v3258, %v3264
      %v3277 = vsel %vm2061, %v3248, %v3254
      %v3278 = vsel %vm2061, %v3250, %v3256
      %v3279 = vsel %vm2061, %v3252, %v3258
      %v3280 = vsel %vm2061, %v3266, %v3248
      %v3281 = vsel %vm2061, %v3268, %v3250
      %v3282 = vsel %vm2061, %v3270, %v3252
      %s3283 = scalar_lea.vmem %s2, 68
      %v3284 = vld [vmem:[%s3283] ss:$8 sm:$0xf]
      %v3286 = vperm.slane %v3284, 0
      %v3287 = vperm.slane %v3284, 1
      %v3288 = vperm.slane %v3284, 2
      %v3289 = vperm.slane %v3284, 3
      %v3294 = vmul.f32 %v3277, %v3286
      %v3295 = vmul.f32 %v3274, %v3287
      %v3296 = vmul.f32 %v3271, %v3288
      %v3297 = vmul.f32 %v3280, %v3289
      %v3298 = vmul.f32 %v3278, %v3286
      %v3299 = vmul.f32 %v3275, %v3287
      %v3300 = vmul.f32 %v3272, %v3288
      %v3301 = vmul.f32 %v3281, %v3289
      %v3302 = vmul.f32 %v3279, %v3286
      %v3303 = vmul.f32 %v3276, %v3287
      %v3304 = vmul.f32 %v3273, %v3288
      %v3305 = vmul.f32 %v3282, %v3289
      %v3306 = vadd.f32 %v3021, %v3294
      %v3307 = vadd.f32 %v3022, %v3295
      %v3308 = vadd.f32 %v3023, %v3296
      %v3309 = vadd.f32 %v3024, %v3297
      %v3310 = vadd.f32 %v3025, %v3298
      %v3311 = vadd.f32 %v3026, %v3299
      %v3312 = vadd.f32 %v3027, %v3300
      %v3313 = vadd.f32 %v3028, %v3301
      %v3314 = vadd.f32 %v3029, %v3302
      %v3315 = vadd.f32 %v3030, %v3303
      %v3316 = vadd.f32 %v3031, %v3304
      %v3317 = vadd.f32 %v3032, %v3305
      %3318 = vrot.lane.b32.xlu0 %v1231, 65
      %v3319 = vpop.permute.xlu0 %3318
      %3320 = vrot.lane.b32.xlu0 %v1234, 65
      %v3321 = vpop.permute.xlu0 %3320
      %3322 = vrot.lane.b32.xlu0 %v1236, 65
      %v3323 = vpop.permute.xlu0 %3322
      %3324 = vrot.lane.b32.xlu0 %v1444, 65
      %v3325 = vpop.permute.xlu0 %3324
      %3326 = vrot.lane.b32.xlu0 %v1447, 65
      %v3327 = vpop.permute.xlu0 %3326
      %3328 = vrot.lane.b32.xlu0 %v1449, 65
      %v3329 = vpop.permute.xlu0 %3328
      %3330 = vrot.lane.b32.xlu0 %v1657, 65
      %v3331 = vpop.permute.xlu0 %3330
      %3332 = vrot.lane.b32.xlu0 %v1660, 65
      %v3333 = vpop.permute.xlu0 %3332
      %3334 = vrot.lane.b32.xlu0 %v1662, 65
      %v3335 = vpop.permute.xlu0 %3334
      %3336 = vrot.lane.b32.xlu0 %v1870, 65
      %v3337 = vpop.permute.xlu0 %3336
      %3338 = vrot.lane.b32.xlu0 %v1873, 65
      %v3339 = vpop.permute.xlu0 %3338
      %3340 = vrot.lane.b32.xlu0 %v1875, 65
      %v3341 = vpop.permute.xlu0 %3340
      %v3342 = vsel %vm2121, %v3331, %v3337
      %v3343 = vsel %vm2121, %v3333, %v3339
      %v3344 = vsel %vm2121, %v3335, %v3341
      %v3345 = vsel %vm2121, %v3325, %v3331
      %v3346 = vsel %vm2121, %v3327, %v3333
      %v3347 = vsel %vm2121, %v3329, %v3335
      %v3348 = vsel %vm2121, %v3319, %v3325
      %v3349 = vsel %vm2121, %v3321, %v3327
      %v3350 = vsel %vm2121, %v3323, %v3329
      %v3351 = vsel %vm2121, %v3337, %v3319
      %v3352 = vsel %vm2121, %v3339, %v3321
      %v3353 = vsel %vm2121, %v3341, %v3323
      %s3354 = scalar_lea.vmem %s2, 69
      %v3355 = vld [vmem:[%s3354] ss:$8 sm:$0xf]
      %v3357 = vperm.slane %v3355, 0
      %v3358 = vperm.slane %v3355, 1
      %v3359 = vperm.slane %v3355, 2
      %v3360 = vperm.slane %v3355, 3
      %v3365 = vmul.f32 %v3348, %v3357
      %v3366 = vmul.f32 %v3345, %v3358
      %v3367 = vmul.f32 %v3342, %v3359
      %v3368 = vmul.f32 %v3351, %v3360
      %v3369 = vmul.f32 %v3349, %v3357
      %v3370 = vmul.f32 %v3346, %v3358
      %v3371 = vmul.f32 %v3343, %v3359
      %v3372 = vmul.f32 %v3352, %v3360
      %v3373 = vmul.f32 %v3350, %v3357
      %v3374 = vmul.f32 %v3347, %v3358
      %v3375 = vmul.f32 %v3344, %v3359
      %v3376 = vmul.f32 %v3353, %v3360
      %v3377 = vadd.f32 %v3093, %v3365
      %v3378 = vadd.f32 %v3094, %v3366
      %v3379 = vadd.f32 %v3095, %v3367
      %v3380 = vadd.f32 %v3096, %v3368
      %v3381 = vadd.f32 %v3097, %v3369
      %v3382 = vadd.f32 %v3098, %v3370
      %v3383 = vadd.f32 %v3099, %v3371
      %v3384 = vadd.f32 %v3100, %v3372
      %v3385 = vadd.f32 %v3101, %v3373
      %v3386 = vadd.f32 %v3102, %v3374
      %v3387 = vadd.f32 %v3103, %v3375
      %v3388 = vadd.f32 %v3104, %v3376
      %3389 = vrot.lane.b32.xlu0 %v1239, 64
      %v3390 = vpop.permute.xlu0 %3389
      %3391 = vrot.lane.b32.xlu0 %v1241, 64
      %v3392 = vpop.permute.xlu0 %3391
      %3393 = vrot.lane.b32.xlu0 %v1244, 64
      %v3394 = vpop.permute.xlu0 %3393
      %3395 = vrot.lane.b32.xlu0 %v1452, 64
      %v3396 = vpop.permute.xlu0 %3395
      %3397 = vrot.lane.b32.xlu0 %v1454, 64
      %v3398 = vpop.permute.xlu0 %3397
      %3399 = vrot.lane.b32.xlu0 %v1457, 64
      %v3400 = vpop.permute.xlu0 %3399
      %3401 = vrot.lane.b32.xlu0 %v1665, 64
      %v3402 = vpop.permute.xlu0 %3401
      %3403 = vrot.lane.b32.xlu0 %v1667, 64
      %v3404 = vpop.permute.xlu0 %3403
      %3405 = vrot.lane.b32.xlu0 %v1670, 64
      %v3406 = vpop.permute.xlu0 %3405
      %3407 = vrot.lane.b32.xlu0 %v1878, 64
      %v3408 = vpop.permute.xlu0 %3407
      %3409 = vrot.lane.b32.xlu0 %v1880, 64
      %v3410 = vpop.permute.xlu0 %3409
      %3411 = vrot.lane.b32.xlu0 %v1883, 64
      %v3412 = vpop.permute.xlu0 %3411
      %v3413 = vsel %vm2181, %v3402, %v3408
      %v3414 = vsel %vm2181, %v3404, %v3410
      %v3415 = vsel %vm2181, %v3406, %v3412
      %v3416 = vsel %vm2181, %v3396, %v3402
      %v3417 = vsel %vm2181, %v3398, %v3404
      %v3418 = vsel %vm2181, %v3400, %v3406
      %v3419 = vsel %vm2181, %v3390, %v3396
      %v3420 = vsel %vm2181, %v3392, %v3398
      %v3421 = vsel %vm2181, %v3394, %v3400
      %v3422 = vsel %vm2181, %v3408, %v3390
      %v3423 = vsel %vm2181, %v3410, %v3392
      %v3424 = vsel %vm2181, %v3412, %v3394
      %s3425 = scalar_lea.vmem %s2, 70
      %v3426 = vld [vmem:[%s3425] ss:$8 sm:$0xf]
      %v3428 = vperm.slane %v3426, 0
      %v3429 = vperm.slane %v3426, 1
      %v3430 = vperm.slane %v3426, 2
      %v3431 = vperm.slane %v3426, 3
      %v3436 = vmul.f32 %v3419, %v3428
      %v3437 = vmul.f32 %v3416, %v3429
      %v3438 = vmul.f32 %v3413, %v3430
      %v3439 = vmul.f32 %v3422, %v3431
      %v3440 = vmul.f32 %v3420, %v3428
      %v3441 = vmul.f32 %v3417, %v3429
      %v3442 = vmul.f32 %v3414, %v3430
      %v3443 = vmul.f32 %v3423, %v3431
      %v3444 = vmul.f32 %v3421, %v3428
      %v3445 = vmul.f32 %v3418, %v3429
      %v3446 = vmul.f32 %v3415, %v3430
      %v3447 = vmul.f32 %v3424, %v3431
      %v3448 = vadd.f32 %v3164, %v3436
      %v3449 = vadd.f32 %v3165, %v3437
      %v3450 = vadd.f32 %v3166, %v3438
      %v3451 = vadd.f32 %v3167, %v3439
      %v3452 = vadd.f32 %v3168, %v3440
      %v3453 = vadd.f32 %v3169, %v3441
      %v3454 = vadd.f32 %v3170, %v3442
      %v3455 = vadd.f32 %v3171, %v3443
      %v3456 = vadd.f32 %v3172, %v3444
      %v3457 = vadd.f32 %v3173, %v3445
      %v3458 = vadd.f32 %v3174, %v3446
      %v3459 = vadd.f32 %v3175, %v3447
      %3460 = vrot.lane.b32.xlu0 %v1246, 63
      %v3461 = vpop.permute.xlu0 %3460
      %3462 = vrot.lane.b32.xlu0 %v1249, 63
      %v3463 = vpop.permute.xlu0 %3462
      %3464 = vrot.lane.b32.xlu0 %v1251, 63
      %v3465 = vpop.permute.xlu0 %3464
      %3466 = vrot.lane.b32.xlu0 %v1459, 63
      %v3467 = vpop.permute.xlu0 %3466
      %3468 = vrot.lane.b32.xlu0 %v1462, 63
      %v3469 = vpop.permute.xlu0 %3468
      %3470 = vrot.lane.b32.xlu0 %v1464, 63
      %v3471 = vpop.permute.xlu0 %3470
      %3472 = vrot.lane.b32.xlu0 %v1672, 63
      %v3473 = vpop.permute.xlu0 %3472
      %3474 = vrot.lane.b32.xlu0 %v1675, 63
      %v3475 = vpop.permute.xlu0 %3474
      %3476 = vrot.lane.b32.xlu0 %v1677, 63
      %v3477 = vpop.permute.xlu0 %3476
      %3478 = vrot.lane.b32.xlu0 %v1885, 63
      %v3479 = vpop.permute.xlu0 %3478
      %3480 = vrot.lane.b32.xlu0 %v1888, 63
      %v3481 = vpop.permute.xlu0 %3480
      %3482 = vrot.lane.b32.xlu0 %v1890, 63
      %v3483 = vpop.permute.xlu0 %3482
      %v3484 = vsel %vm2253, %v3473, %v3479
      %v3485 = vsel %vm2253, %v3475, %v3481
      %v3486 = vsel %vm2253, %v3477, %v3483
      %v3487 = vsel %vm2253, %v3467, %v3473
      %v3488 = vsel %vm2253, %v3469, %v3475
      %v3489 = vsel %vm2253, %v3471, %v3477
      %v3490 = vsel %vm2253, %v3461, %v3467
      %v3491 = vsel %vm2253, %v3463, %v3469
      %v3492 = vsel %vm2253, %v3465, %v3471
      %v3493 = vsel %vm2253, %v3479, %v3461
      %v3494 = vsel %vm2253, %v3481, %v3463
      %v3495 = vsel %vm2253, %v3483, %v3465
      %s3496 = scalar_lea.vmem %s2, 71
      %v3497 = vld [vmem:[%s3496] ss:$8 sm:$0xf]
      %v3499 = vperm.slane %v3497, 0
      %v3500 = vperm.slane %v3497, 1
      %v3501 = vperm.slane %v3497, 2
      %v3502 = vperm.slane %v3497, 3
      %v3507 = vmul.f32 %v3490, %v3499
      %v3508 = vmul.f32 %v3487, %v3500
      %v3509 = vmul.f32 %v3484, %v3501
      %v3510 = vmul.f32 %v3493, %v3502
      %v3511 = vmul.f32 %v3491, %v3499
      %v3512 = vmul.f32 %v3488, %v3500
      %v3513 = vmul.f32 %v3485, %v3501
      %v3514 = vmul.f32 %v3494, %v3502
      %v3515 = vmul.f32 %v3492, %v3499
      %v3516 = vmul.f32 %v3489, %v3500
      %v3517 = vmul.f32 %v3486, %v3501
      %v3518 = vmul.f32 %v3495, %v3502
      %v3519 = vadd.f32 %v3235, %v3507
      %v3520 = vadd.f32 %v3236, %v3508
      %v3521 = vadd.f32 %v3237, %v3509
      %v3522 = vadd.f32 %v3238, %v3510
      %v3523 = vadd.f32 %v3239, %v3511
      %v3524 = vadd.f32 %v3240, %v3512
      %v3525 = vadd.f32 %v3241, %v3513
      %v3526 = vadd.f32 %v3242, %v3514
      %v3527 = vadd.f32 %v3243, %v3515
      %v3528 = vadd.f32 %v3244, %v3516
      %v3529 = vadd.f32 %v3245, %v3517
      %v3530 = vadd.f32 %v3246, %v3518
      %3531 = vrot.lane.b32.xlu0 %v1254, 57
      %v3532 = vpop.permute.xlu0 %3531
      %3533 = vrot.lane.b32.xlu0 %v1256, 57
      %v3534 = vpop.permute.xlu0 %3533
      %3535 = vrot.lane.b32.xlu0 %v1259, 57
      %v3536 = vpop.permute.xlu0 %3535
      %3537 = vrot.lane.b32.xlu0 %v1467, 57
      %v3538 = vpop.permute.xlu0 %3537
      %3539 = vrot.lane.b32.xlu0 %v1469, 57
      %v3540 = vpop.permute.xlu0 %3539
      %3541 = vrot.lane.b32.xlu0 %v1472, 57
      %v3542 = vpop.permute.xlu0 %3541
      %3543 = vrot.lane.b32.xlu0 %v1680, 57
      %v3544 = vpop.permute.xlu0 %3543
      %3545 = vrot.lane.b32.xlu0 %v1682, 57
      %v3546 = vpop.permute.xlu0 %3545
      %3547 = vrot.lane.b32.xlu0 %v1685, 57
      %v3548 = vpop.permute.xlu0 %3547
      %3549 = vrot.lane.b32.xlu0 %v1893, 57
      %v3550 = vpop.permute.xlu0 %3549
      %3551 = vrot.lane.b32.xlu0 %v1895, 57
      %v3552 = vpop.permute.xlu0 %3551
      %3553 = vrot.lane.b32.xlu0 %v1898, 57
      %v3554 = vpop.permute.xlu0 %3553
      %v3555 = vsel %vm2325, %v3544, %v3550
      %v3556 = vsel %vm2325, %v3546, %v3552
      %v3557 = vsel %vm2325, %v3548, %v3554
      %v3558 = vsel %vm2325, %v3538, %v3544
      %v3559 = vsel %vm2325, %v3540, %v3546
      %v3560 = vsel %vm2325, %v3542, %v3548
      %v3561 = vsel %vm2325, %v3532, %v3538
      %v3562 = vsel %vm2325, %v3534, %v3540
      %v3563 = vsel %vm2325, %v3536, %v3542
      %v3564 = vsel %vm2325, %v3550, %v3532
      %v3565 = vsel %vm2325, %v3552, %v3534
      %v3566 = vsel %vm2325, %v3554, %v3536
      %s3567 = scalar_lea.vmem %s2, 96
      %v3568 = vld [vmem:[%s3567] ss:$8 sm:$0xf]
      %v3570 = vperm.slane %v3568, 0
      %v3571 = vperm.slane %v3568, 1
      %v3572 = vperm.slane %v3568, 2
      %v3573 = vperm.slane %v3568, 3
      %v3578 = vmul.f32 %v3561, %v3570
      %v3579 = vmul.f32 %v3558, %v3571
      %v3580 = vmul.f32 %v3555, %v3572
      %v3581 = vmul.f32 %v3564, %v3573
      %v3582 = vmul.f32 %v3562, %v3570
      %v3583 = vmul.f32 %v3559, %v3571
      %v3584 = vmul.f32 %v3556, %v3572
      %v3585 = vmul.f32 %v3565, %v3573
      %v3586 = vmul.f32 %v3563, %v3570
      %v3587 = vmul.f32 %v3560, %v3571
      %v3588 = vmul.f32 %v3557, %v3572
      %v3589 = vmul.f32 %v3566, %v3573
      %v3590 = vadd.f32 %v3306, %v3578
      %v3591 = vadd.f32 %v3307, %v3579
      %v3592 = vadd.f32 %v3308, %v3580
      %v3593 = vadd.f32 %v3309, %v3581
      %v3594 = vadd.f32 %v3310, %v3582
      %v3595 = vadd.f32 %v3311, %v3583
      %v3596 = vadd.f32 %v3312, %v3584
      %v3597 = vadd.f32 %v3313, %v3585
      %v3598 = vadd.f32 %v3314, %v3586
      %v3599 = vadd.f32 %v3315, %v3587
      %v3600 = vadd.f32 %v3316, %v3588
      %v3601 = vadd.f32 %v3317, %v3589
      %3602 = vrot.lane.b32.xlu0 %v1261, 56
      %v3603 = vpop.permute.xlu0 %3602
      %3604 = vrot.lane.b32.xlu0 %v1264, 56
      %v3605 = vpop.permute.xlu0 %3604
      %3606 = vrot.lane.b32.xlu0 %v1266, 56
      %v3607 = vpop.permute.xlu0 %3606
      %3608 = vrot.lane.b32.xlu0 %v1474, 56
      %v3609 = vpop.permute.xlu0 %3608
      %3610 = vrot.lane.b32.xlu0 %v1477, 56
      %v3611 = vpop.permute.xlu0 %3610
      %3612 = vrot.lane.b32.xlu0 %v1479, 56
      %v3613 = vpop.permute.xlu0 %3612
      %3614 = vrot.lane.b32.xlu0 %v1687, 56
      %v3615 = vpop.permute.xlu0 %3614
      %3616 = vrot.lane.b32.xlu0 %v1690, 56
      %v3617 = vpop.permute.xlu0 %3616
      %3618 = vrot.lane.b32.xlu0 %v1692, 56
      %v3619 = vpop.permute.xlu0 %3618
      %3620 = vrot.lane.b32.xlu0 %v1900, 56
      %v3621 = vpop.permute.xlu0 %3620
      %3622 = vrot.lane.b32.xlu0 %v1903, 56
      %v3623 = vpop.permute.xlu0 %3622
      %3624 = vrot.lane.b32.xlu0 %v1905, 56
      %v3625 = vpop.permute.xlu0 %3624
      %v3626 = vsel %vm2397, %v3615, %v3621
      %v3627 = vsel %vm2397, %v3617, %v3623
      %v3628 = vsel %vm2397, %v3619, %v3625
      %v3629 = vsel %vm2397, %v3609, %v3615
      %v3630 = vsel %vm2397, %v3611, %v3617
      %v3631 = vsel %vm2397, %v3613, %v3619
      %v3632 = vsel %vm2397, %v3603, %v3609
      %v3633 = vsel %vm2397, %v3605, %v3611
      %v3634 = vsel %vm2397, %v3607, %v3613
      %v3635 = vsel %vm2397, %v3621, %v3603
      %v3636 = vsel %vm2397, %v3623, %v3605
      %v3637 = vsel %vm2397, %v3625, %v3607
      %s3638 = scalar_lea.vmem %s2, 97
      %v3639 = vld [vmem:[%s3638] ss:$8 sm:$0xf]
      %v3641 = vperm.slane %v3639, 0
      %v3642 = vperm.slane %v3639, 1
      %v3643 = vperm.slane %v3639, 2
      %v3644 = vperm.slane %v3639, 3
      %v3649 = vmul.f32 %v3632, %v3641
      %v3650 = vmul.f32 %v3629, %v3642
      %v3651 = vmul.f32 %v3626, %v3643
      %v3652 = vmul.f32 %v3635, %v3644
      %v3653 = vmul.f32 %v3633, %v3641
      %v3654 = vmul.f32 %v3630, %v3642
      %v3655 = vmul.f32 %v3627, %v3643
      %v3656 = vmul.f32 %v3636, %v3644
      %v3657 = vmul.f32 %v3634, %v3641
      %v3658 = vmul.f32 %v3631, %v3642
      %v3659 = vmul.f32 %v3628, %v3643
      %v3660 = vmul.f32 %v3637, %v3644
      %v3661 = vadd.f32 %v3377, %v3649
      %v3662 = vadd.f32 %v3378, %v3650
      %v3663 = vadd.f32 %v3379, %v3651
      %v3664 = vadd.f32 %v3380, %v3652
      %v3665 = vadd.f32 %v3381, %v3653
      %v3666 = vadd.f32 %v3382, %v3654
      %v3667 = vadd.f32 %v3383, %v3655
      %v3668 = vadd.f32 %v3384, %v3656
      %v3669 = vadd.f32 %v3385, %v3657
      %v3670 = vadd.f32 %v3386, %v3658
      %v3671 = vadd.f32 %v3387, %v3659
      %v3672 = vadd.f32 %v3388, %v3660
      %3673 = vrot.lane.b32.xlu0 %v1269, 55
      %v3674 = vpop.permute.xlu0 %3673
      %3675 = vrot.lane.b32.xlu0 %v1271, 55
      %v3676 = vpop.permute.xlu0 %3675
      %3677 = vrot.lane.b32.xlu0 %v1274, 55
      %v3678 = vpop.permute.xlu0 %3677
      %3679 = vrot.lane.b32.xlu0 %v1482, 55
      %v3680 = vpop.permute.xlu0 %3679
      %3681 = vrot.lane.b32.xlu0 %v1484, 55
      %v3682 = vpop.permute.xlu0 %3681
      %3683 = vrot.lane.b32.xlu0 %v1487, 55
      %v3684 = vpop.permute.xlu0 %3683
      %3685 = vrot.lane.b32.xlu0 %v1695, 55
      %v3686 = vpop.permute.xlu0 %3685
      %3687 = vrot.lane.b32.xlu0 %v1697, 55
      %v3688 = vpop.permute.xlu0 %3687
      %3689 = vrot.lane.b32.xlu0 %v1700, 55
      %v3690 = vpop.permute.xlu0 %3689
      %3691 = vrot.lane.b32.xlu0 %v1908, 55
      %v3692 = vpop.permute.xlu0 %3691
      %3693 = vrot.lane.b32.xlu0 %v1910, 55
      %v3694 = vpop.permute.xlu0 %3693
      %3695 = vrot.lane.b32.xlu0 %v1913, 55
      %v3696 = vpop.permute.xlu0 %3695
      %v3697 = vsel %vm2469, %v3686, %v3692
      %v3698 = vsel %vm2469, %v3688, %v3694
      %v3699 = vsel %vm2469, %v3690, %v3696
      %v3700 = vsel %vm2469, %v3680, %v3686
      %v3701 = vsel %vm2469, %v3682, %v3688
      %v3702 = vsel %vm2469, %v3684, %v3690
      %v3703 = vsel %vm2469, %v3674, %v3680
      %v3704 = vsel %vm2469, %v3676, %v3682
      %v3705 = vsel %vm2469, %v3678, %v3684
      %v3706 = vsel %vm2469, %v3692, %v3674
      %v3707 = vsel %vm2469, %v3694, %v3676
      %v3708 = vsel %vm2469, %v3696, %v3678
      %s3709 = scalar_lea.vmem %s2, 98
      %v3710 = vld [vmem:[%s3709] ss:$8 sm:$0xf]
      %v3712 = vperm.slane %v3710, 0
      %v3713 = vperm.slane %v3710, 1
      %v3714 = vperm.slane %v3710, 2
      %v3715 = vperm.slane %v3710, 3
      %v3720 = vmul.f32 %v3703, %v3712
      %v3721 = vmul.f32 %v3700, %v3713
      %v3722 = vmul.f32 %v3697, %v3714
      %v3723 = vmul.f32 %v3706, %v3715
      %v3724 = vmul.f32 %v3704, %v3712
      %v3725 = vmul.f32 %v3701, %v3713
      %v3726 = vmul.f32 %v3698, %v3714
      %v3727 = vmul.f32 %v3707, %v3715
      %v3728 = vmul.f32 %v3705, %v3712
      %v3729 = vmul.f32 %v3702, %v3713
      %v3730 = vmul.f32 %v3699, %v3714
      %v3731 = vmul.f32 %v3708, %v3715
      %v3732 = vadd.f32 %v3448, %v3720
      %v3733 = vadd.f32 %v3449, %v3721
      %v3734 = vadd.f32 %v3450, %v3722
      %v3735 = vadd.f32 %v3451, %v3723
      %v3736 = vadd.f32 %v3452, %v3724
      %v3737 = vadd.f32 %v3453, %v3725
      %v3738 = vadd.f32 %v3454, %v3726
      %v3739 = vadd.f32 %v3455, %v3727
      %v3740 = vadd.f32 %v3456, %v3728
      %v3741 = vadd.f32 %v3457, %v3729
      %v3742 = vadd.f32 %v3458, %v3730
      %v3743 = vadd.f32 %v3459, %v3731
      %v3744 = vadd.f32 %v3590, %v3661
      %v3745 = vadd.f32 %v3591, %v3662
      %v3746 = vadd.f32 %v3592, %v3663
      %v3747 = vadd.f32 %v3593, %v3664
      %v3748 = vadd.f32 %v3594, %v3665
      %v3749 = vadd.f32 %v3595, %v3666
      %v3750 = vadd.f32 %v3596, %v3667
      %v3751 = vadd.f32 %v3597, %v3668
      %v3752 = vadd.f32 %v3598, %v3669
      %v3753 = vadd.f32 %v3599, %v3670
      %v3754 = vadd.f32 %v3600, %v3671
      %v3755 = vadd.f32 %v3601, %v3672
      %v3756 = vadd.f32 %v3732, %v3519
      %v3757 = vadd.f32 %v3733, %v3520
      %v3758 = vadd.f32 %v3734, %v3521
      %v3759 = vadd.f32 %v3735, %v3522
      %v3760 = vadd.f32 %v3736, %v3523
      %v3761 = vadd.f32 %v3737, %v3524
      %v3762 = vadd.f32 %v3738, %v3525
      %v3763 = vadd.f32 %v3739, %v3526
      %v3764 = vadd.f32 %v3740, %v3527
      %v3765 = vadd.f32 %v3741, %v3528
      %v3766 = vadd.f32 %v3742, %v3529
      %v3767 = vadd.f32 %v3743, %v3530
      %v3768 = vadd.f32 %v3744, %v3756
      %v3769 = vadd.f32 %v3745, %v3757
      %v3770 = vadd.f32 %v3746, %v3758
      %v3771 = vadd.f32 %v3747, %v3759
      %v3772 = vadd.f32 %v3748, %v3760
      %v3773 = vadd.f32 %v3749, %v3761
      %v3774 = vadd.f32 %v3750, %v3762
      %v3775 = vadd.f32 %v3751, %v3763
      %v3776 = vadd.f32 %v3752, %v3764
      %v3777 = vadd.f32 %v3753, %v3765
      %v3778 = vadd.f32 %v3754, %v3766
      %v3779 = vadd.f32 %v3755, %v3767
      %v3780 = vld [vmem:[%s513] sm:$0xff]
      %v3781 = vld [vmem:[%s513 + $0x8] sm:$0xff]
      %v3782 = vld [vmem:[%s513 + $0x10] sm:$0xff]
      %3784 = vset.pattern.permute.xlu0 0
      %3785 = vperm.xlu0 %3784, %v3780
      %v3786 = vpop.permute.xlu0 %3785
      %3789 = vset.pattern.permute.xlu0 0
      %3790 = vperm.xlu0 %3789, %v3781
      %v3791 = vpop.permute.xlu0 %3790
      %3794 = vset.pattern.permute.xlu0 0
      %3795 = vperm.xlu0 %3794, %v3782
      %v3796 = vpop.permute.xlu0 %3795
      %v3798 = vadd.f32 %v3768, %v3786
      %v3799 = vadd.f32 %v3769, %v3786
      %v3800 = vadd.f32 %v3770, %v3786
      %v3801 = vadd.f32 %v3771, %v3786
      %v3802 = vadd.f32 %v3772, %v3791
      %v3803 = vadd.f32 %v3773, %v3791
      %v3804 = vadd.f32 %v3774, %v3791
      %v3805 = vadd.f32 %v3775, %v3791
      %v3806 = vadd.f32 %v3776, %v3796
      %v3807 = vadd.f32 %v3777, %v3796
      %v3808 = vadd.f32 %v3778, %v3796
      %v3809 = vadd.f32 %v3779, %v3796
      %v3810 = vld [vmem:[%s518] sm:$0xf]
      %v3811 = vld [vmem:[%s518 + $0x4] sm:$0xf]
      %v3812 = vld [vmem:[%s518 + $0x8] sm:$0xf]
      %v3813 = vld [vmem:[%s518 + $0xc] sm:$0xf]
      %v3814 = vld [vmem:[%s518 + $0x10] sm:$0xf]
      %v3815 = vld [vmem:[%s518 + $0x14] sm:$0xf]
      %v3816 = vld [vmem:[%s518 + $0x18] sm:$0xf]
      %v3817 = vld [vmem:[%s518 + $0x1c] sm:$0xf]
      %v3818 = vld [vmem:[%s518 + $0x20] sm:$0xf]
      %v3819 = vld [vmem:[%s518 + $0x24] sm:$0xf]
      %v3820 = vld [vmem:[%s518 + $0x28] sm:$0xf]
      %v3821 = vld [vmem:[%s518 + $0x2c] sm:$0xf]
      %v3822 = vld [vmem:[%s518 + $0x30] sm:$0xf]
      %v3823 = vld [vmem:[%s518 + $0x34] sm:$0xf]
      %v3824 = vld [vmem:[%s518 + $0x38] sm:$0xf]
      %v3825 = vld [vmem:[%s518 + $0x3c] sm:$0xf]
      %v3826 = vld [vmem:[%s518 + $0x40] sm:$0xf]
      %v3827 = vld [vmem:[%s518 + $0x44] sm:$0xf]
      %v3828 = vld [vmem:[%s518 + $0x48] sm:$0xf]
      %v3829 = vld [vmem:[%s518 + $0x4c] sm:$0xf]
      %v3830 = vld [vmem:[%s518 + $0x50] sm:$0xf]
      %v3831 = vld [vmem:[%s518 + $0x54] sm:$0xf]
      %v3832 = vld [vmem:[%s518 + $0x58] sm:$0xf]
      %v3833 = vld [vmem:[%s518 + $0x5c] sm:$0xf]
      %v3834 = vld [vmem:[%s518 + $0x60] sm:$0xf]
      %v3835 = vld [vmem:[%s518 + $0x64] sm:$0xf]
      %v3836 = vld [vmem:[%s518 + $0x68] sm:$0xf]
      %v3837 = vpack.c.bf16 %v3802, %v3798
      %v3838 = vpack.c.bf16 %v3803, %v3799
      %v3839 = vpack.c.bf16 %v3804, %v3800
      %v3840 = vpack.c.bf16 %v3805, %v3801
      %v3841 = vpack.c.bf16 %v3806, %v3806
      %v3842 = vpack.c.bf16 %v3807, %v3807
      %v3843 = vpack.c.bf16 %v3808, %v3808
      %v3844 = vpack.c.bf16 %v3809, %v3809
      %v3872 = vunpack.c.l.b16 %v3810
      %v3873 = vunpack.c.l.b16 %v3811
      %v3874 = vunpack.c.l.b16 %v3812
      %v3875 = vunpack.c.l.b16 %v3813
      %v3876 = vunpack.c.l.b16 %v3814
      %v3877 = vunpack.c.l.b16 %v3815
      %v3878 = vunpack.c.l.b16 %v3816
      %v3879 = vunpack.c.l.b16 %v3817
      %v3880 = vunpack.c.l.b16 %v3818
      %v3881 = vunpack.c.l.b16 %v3819
      %v3882 = vunpack.c.l.b16 %v3820
      %v3883 = vunpack.c.l.b16 %v3821
      %v3884 = vunpack.c.l.b16 %v3822
      %v3885 = vunpack.c.l.b16 %v3823
      %v3886 = vunpack.c.l.b16 %v3824
      %v3887 = vunpack.c.l.b16 %v3825
      %v3888 = vunpack.c.l.b16 %v3826
      %v3889 = vunpack.c.l.b16 %v3827
      %v3890 = vunpack.c.l.b16 %v3828
      %v3891 = vunpack.c.l.b16 %v3829
      %v3892 = vunpack.c.l.b16 %v3830
      %v3893 = vunpack.c.l.b16 %v3831
      %v3894 = vunpack.c.l.b16 %v3832
      %v3895 = vunpack.c.l.b16 %v3833
      %v3896 = vunpack.c.l.b16 %v3834
      %v3897 = vunpack.c.l.b16 %v3835
      %v3898 = vunpack.c.l.b16 %v3836
      %v3899 = vpack.c.b16 %v3873, %v3872
      %v3900 = vpack.c.b16 %v3875, %v3874
      %v3901 = vpack.c.b16 %v3877, %v3876
      %v3902 = vpack.c.b16 %v3879, %v3878
      %v3903 = vpack.c.b16 %v3881, %v3880
      %v3904 = vpack.c.b16 %v3883, %v3882
      %v3905 = vpack.c.b16 %v3885, %v3884
      %v3906 = vpack.c.b16 %v3887, %v3886
      %v3907 = vpack.c.b16 %v3889, %v3888
      %v3908 = vpack.c.b16 %v3891, %v3890
      %v3909 = vpack.c.b16 %v3893, %v3892
      %v3910 = vpack.c.b16 %v3895, %v3894
      %v3911 = vpack.c.b16 %v3897, %v3896
      %v3912 = vpack.c.b16 %v3898, %v3898
      %vm3913 = vcmask 195584
      %v3915 = vsel %vm3913, %v3899, 0
      %v3918 = vsel %vm3913, %v3900, 0
      %v3921 = vsel %vm3913, %v3901, 0
      %v3924 = vsel %vm3913, %v3902, 0
      %v3927 = vsel %vm3913, %v3903, 0
      %v3930 = vsel %vm3913, %v3904, 0
      %v3933 = vsel %vm3913, %v3905, 0
      %v3936 = vsel %vm3913, %v3906, 0
      %v3939 = vsel %vm3913, %v3907, 0
      %v3942 = vsel %vm3913, %v3908, 0
      %v3945 = vsel %vm3913, %v3909, 0
      %v3948 = vsel %vm3913, %v3910, 0
      %v3951 = vsel %vm3913, %v3911, 0
      %v3954 = vsel %vm3913, %v3912, 0
      %vm3956 = vcmask 1043456
      %v3958 = vsel %vm3956, %v3841, 0
      %v3961 = vsel %vm3956, %v3842, 0
      %v3964 = vsel %vm3956, %v3843, 0
      %v3967 = vsel %vm3956, %v3844, 0
      %3969 = vmatpush.bf16.msra.mxu0 0
      %3970 = vmatpush.bf16.msra.mxu0 0
      %3971 = vmatpush.bf16.msra.mxu0 0
      %3972 = vmatpush.bf16.msra.mxu0 0
      %3973 = vmatpush.bf16.msra.mxu0 0
      %3974 = vmatpush.bf16.msra.mxu0 0
      %3975 = vmatpush.bf16.msra.mxu0 %v3958
      %3976 = vmatpush.bf16.msra.mxu0 %v3837
      %3977 = vmatmul.bf16.gmra.mxu0 %v3915
      %v3978 = vpop.f32.mrf.mxu0
      %v3979 = vadd.f32 0.0, %v3978
      %v3980 = vpop.f32.mrf.mxu0
      %v3981 = vadd.f32 0.0, %v3980
      %3982 = vmatmul.bf16.gmra.mxu0 %v3918
      %v3983 = vpop.f32.mrf.mxu0
      %v3984 = vadd.f32 0.0, %v3983
      %v3985 = vpop.f32.mrf.mxu0
      %v3986 = vadd.f32 0.0, %v3985
      %3987 = vmatmul.bf16.gmra.mxu0 %v3921
      %v3988 = vpop.f32.mrf.mxu0
      %v3989 = vadd.f32 0.0, %v3988
      %v3990 = vpop.f32.mrf.mxu0
      %v3991 = vadd.f32 0.0, %v3990
      %3992 = vmatmul.bf16.gmra.mxu0 %v3924
      %v3993 = vpop.f32.mrf.mxu0
      %v3994 = vadd.f32 0.0, %v3993
      %v3995 = vpop.f32.mrf.mxu0
      %v3996 = vadd.f32 0.0, %v3995
      %3997 = vmatmul.bf16.gmra.mxu0 %v3927
      %v3998 = vpop.f32.mrf.mxu0
      %v3999 = vadd.f32 0.0, %v3998
      %v4000 = vpop.f32.mrf.mxu0
      %v4001 = vadd.f32 0.0, %v4000
      %4002 = vmatmul.bf16.gmra.mxu0 %v3930
      %v4003 = vpop.f32.mrf.mxu0
      %v4004 = vadd.f32 0.0, %v4003
      %v4005 = vpop.f32.mrf.mxu0
      %v4006 = vadd.f32 0.0, %v4005
      %4007 = vmatmul.bf16.gmra.mxu0 %v3933
      %v4008 = vpop.f32.mrf.mxu0
      %v4009 = vadd.f32 0.0, %v4008
      %v4010 = vpop.f32.mrf.mxu0
      %v4011 = vadd.f32 0.0, %v4010
      %4012 = vmatmul.bf16.gmra.mxu0 %v3936
      %v4013 = vpop.f32.mrf.mxu0
      %v4014 = vadd.f32 0.0, %v4013
      %v4015 = vpop.f32.mrf.mxu0
      %v4016 = vadd.f32 0.0, %v4015
      %4017 = vmatmul.bf16.gmra.mxu0 %v3939
      %v4018 = vpop.f32.mrf.mxu0
      %v4019 = vadd.f32 0.0, %v4018
      %v4020 = vpop.f32.mrf.mxu0
      %v4021 = vadd.f32 0.0, %v4020
      %4022 = vmatmul.bf16.gmra.mxu0 %v3942
      %v4023 = vpop.f32.mrf.mxu0
      %v4024 = vadd.f32 0.0, %v4023
      %v4025 = vpop.f32.mrf.mxu0
      %v4026 = vadd.f32 0.0, %v4025
      %4027 = vmatmul.bf16.gmra.mxu0 %v3945
      %v4028 = vpop.f32.mrf.mxu0
      %v4029 = vadd.f32 0.0, %v4028
      %v4030 = vpop.f32.mrf.mxu0
      %v4031 = vadd.f32 0.0, %v4030
      %4032 = vmatmul.bf16.gmra.mxu0 %v3948
      %v4033 = vpop.f32.mrf.mxu0
      %v4034 = vadd.f32 0.0, %v4033
      %v4035 = vpop.f32.mrf.mxu0
      %v4036 = vadd.f32 0.0, %v4035
      %4037 = vmatmul.bf16.gmra.mxu0 %v3951
      %v4038 = vpop.f32.mrf.mxu0
      %v4039 = vadd.f32 0.0, %v4038
      %v4040 = vpop.f32.mrf.mxu0
      %v4041 = vadd.f32 0.0, %v4040
      %4042 = vmatmul.bf16.gmra.mxu0 %v3954
      %v4043 = vpop.f32.mrf.mxu0
      %v4044 = vadd.f32 0.0, %v4043
      %v4045 = vpop.f32.mrf.mxu0
      %4046 = vdwg.mxu0
      %4047 = vmatpush.bf16.msra.mxu0 0
      %4048 = vmatpush.bf16.msra.mxu0 0
      %4049 = vmatpush.bf16.msra.mxu0 0
      %4050 = vmatpush.bf16.msra.mxu0 0
      %4051 = vmatpush.bf16.msra.mxu0 0
      %4052 = vmatpush.bf16.msra.mxu0 0
      %4053 = vmatpush.bf16.msra.mxu0 %v3961
      %4054 = vmatpush.bf16.msra.mxu0 %v3838
      %4055 = vmatmul.bf16.gmra.mxu0 %v3915
      %v4056 = vpop.f32.mrf.mxu0
      %v4057 = vadd.f32 0.0, %v4056
      %v4058 = vpop.f32.mrf.mxu0
      %v4059 = vadd.f32 0.0, %v4058
      %4060 = vmatmul.bf16.gmra.mxu0 %v3918
      %v4061 = vpop.f32.mrf.mxu0
      %v4062 = vadd.f32 0.0, %v4061
      %v4063 = vpop.f32.mrf.mxu0
      %v4064 = vadd.f32 0.0, %v4063
      %4065 = vmatmul.bf16.gmra.mxu0 %v3921
      %v4066 = vpop.f32.mrf.mxu0
      %v4067 = vadd.f32 0.0, %v4066
      %v4068 = vpop.f32.mrf.mxu0
      %v4069 = vadd.f32 0.0, %v4068
      %4070 = vmatmul.bf16.gmra.mxu0 %v3924
      %v4071 = vpop.f32.mrf.mxu0
      %v4072 = vadd.f32 0.0, %v4071
      %v4073 = vpop.f32.mrf.mxu0
      %v4074 = vadd.f32 0.0, %v4073
      %4075 = vmatmul.bf16.gmra.mxu0 %v3927
      %v4076 = vpop.f32.mrf.mxu0
      %v4077 = vadd.f32 0.0, %v4076
      %v4078 = vpop.f32.mrf.mxu0
      %v4079 = vadd.f32 0.0, %v4078
      %4080 = vmatmul.bf16.gmra.mxu0 %v3930
      %v4081 = vpop.f32.mrf.mxu0
      %v4082 = vadd.f32 0.0, %v4081
      %v4083 = vpop.f32.mrf.mxu0
      %v4084 = vadd.f32 0.0, %v4083
      %4085 = vmatmul.bf16.gmra.mxu0 %v3933
      %v4086 = vpop.f32.mrf.mxu0
      %v4087 = vadd.f32 0.0, %v4086
      %v4088 = vpop.f32.mrf.mxu0
      %v4089 = vadd.f32 0.0, %v4088
      %4090 = vmatmul.bf16.gmra.mxu0 %v3936
      %v4091 = vpop.f32.mrf.mxu0
      %v4092 = vadd.f32 0.0, %v4091
      %v4093 = vpop.f32.mrf.mxu0
      %v4094 = vadd.f32 0.0, %v4093
      %4095 = vmatmul.bf16.gmra.mxu0 %v3939
      %v4096 = vpop.f32.mrf.mxu0
      %v4097 = vadd.f32 0.0, %v4096
      %v4098 = vpop.f32.mrf.mxu0
      %v4099 = vadd.f32 0.0, %v4098
      %4100 = vmatmul.bf16.gmra.mxu0 %v3942
      %v4101 = vpop.f32.mrf.mxu0
      %v4102 = vadd.f32 0.0, %v4101
      %v4103 = vpop.f32.mrf.mxu0
      %v4104 = vadd.f32 0.0, %v4103
      %4105 = vmatmul.bf16.gmra.mxu0 %v3945
      %v4106 = vpop.f32.mrf.mxu0
      %v4107 = vadd.f32 0.0, %v4106
      %v4108 = vpop.f32.mrf.mxu0
      %v4109 = vadd.f32 0.0, %v4108
      %4110 = vmatmul.bf16.gmra.mxu0 %v3948
      %v4111 = vpop.f32.mrf.mxu0
      %v4112 = vadd.f32 0.0, %v4111
      %v4113 = vpop.f32.mrf.mxu0
      %v4114 = vadd.f32 0.0, %v4113
      %4115 = vmatmul.bf16.gmra.mxu0 %v3951
      %v4116 = vpop.f32.mrf.mxu0
      %v4117 = vadd.f32 0.0, %v4116
      %v4118 = vpop.f32.mrf.mxu0
      %v4119 = vadd.f32 0.0, %v4118
      %4120 = vmatmul.bf16.gmra.mxu0 %v3954
      %v4121 = vpop.f32.mrf.mxu0
      %v4122 = vadd.f32 0.0, %v4121
      %v4123 = vpop.f32.mrf.mxu0
      %4124 = vdwg.mxu0
      %4125 = vmatpush.bf16.msra.mxu0 0
      %4126 = vmatpush.bf16.msra.mxu0 0
      %4127 = vmatpush.bf16.msra.mxu0 0
      %4128 = vmatpush.bf16.msra.mxu0 0
      %4129 = vmatpush.bf16.msra.mxu0 0
      %4130 = vmatpush.bf16.msra.mxu0 0
      %4131 = vmatpush.bf16.msra.mxu0 %v3964
      %4132 = vmatpush.bf16.msra.mxu0 %v3839
      %4133 = vmatmul.bf16.gmra.mxu0 %v3915
      %v4134 = vpop.f32.mrf.mxu0
      %v4135 = vadd.f32 0.0, %v4134
      %v4136 = vpop.f32.mrf.mxu0
      %v4137 = vadd.f32 0.0, %v4136
      %4138 = vmatmul.bf16.gmra.mxu0 %v3918
      %v4139 = vpop.f32.mrf.mxu0
      %v4140 = vadd.f32 0.0, %v4139
      %v4141 = vpop.f32.mrf.mxu0
      %v4142 = vadd.f32 0.0, %v4141
      %4143 = vmatmul.bf16.gmra.mxu0 %v3921
      %v4144 = vpop.f32.mrf.mxu0
      %v4145 = vadd.f32 0.0, %v4144
      %v4146 = vpop.f32.mrf.mxu0
      %v4147 = vadd.f32 0.0, %v4146
      %4148 = vmatmul.bf16.gmra.mxu0 %v3924
      %v4149 = vpop.f32.mrf.mxu0
      %v4150 = vadd.f32 0.0, %v4149
      %v4151 = vpop.f32.mrf.mxu0
      %v4152 = vadd.f32 0.0, %v4151
      %4153 = vmatmul.bf16.gmra.mxu0 %v3927
      %v4154 = vpop.f32.mrf.mxu0
      %v4155 = vadd.f32 0.0, %v4154
      %v4156 = vpop.f32.mrf.mxu0
      %v4157 = vadd.f32 0.0, %v4156
      %4158 = vmatmul.bf16.gmra.mxu0 %v3930
      %v4159 = vpop.f32.mrf.mxu0
      %v4160 = vadd.f32 0.0, %v4159
      %v4161 = vpop.f32.mrf.mxu0
      %v4162 = vadd.f32 0.0, %v4161
      %4163 = vmatmul.bf16.gmra.mxu0 %v3933
      %v4164 = vpop.f32.mrf.mxu0
      %v4165 = vadd.f32 0.0, %v4164
      %v4166 = vpop.f32.mrf.mxu0
      %v4167 = vadd.f32 0.0, %v4166
      %4168 = vmatmul.bf16.gmra.mxu0 %v3936
      %v4169 = vpop.f32.mrf.mxu0
      %v4170 = vadd.f32 0.0, %v4169
      %v4171 = vpop.f32.mrf.mxu0
      %v4172 = vadd.f32 0.0, %v4171
      %4173 = vmatmul.bf16.gmra.mxu0 %v3939
      %v4174 = vpop.f32.mrf.mxu0
      %v4175 = vadd.f32 0.0, %v4174
      %v4176 = vpop.f32.mrf.mxu0
      %v4177 = vadd.f32 0.0, %v4176
      %4178 = vmatmul.bf16.gmra.mxu0 %v3942
      %v4179 = vpop.f32.mrf.mxu0
      %v4180 = vadd.f32 0.0, %v4179
      %v4181 = vpop.f32.mrf.mxu0
      %v4182 = vadd.f32 0.0, %v4181
      %4183 = vmatmul.bf16.gmra.mxu0 %v3945
      %v4184 = vpop.f32.mrf.mxu0
      %v4185 = vadd.f32 0.0, %v4184
      %v4186 = vpop.f32.mrf.mxu0
      %v4187 = vadd.f32 0.0, %v4186
      %4188 = vmatmul.bf16.gmra.mxu0 %v3948
      %v4189 = vpop.f32.mrf.mxu0
      %v4190 = vadd.f32 0.0, %v4189
      %v4191 = vpop.f32.mrf.mxu0
      %v4192 = vadd.f32 0.0, %v4191
      %4193 = vmatmul.bf16.gmra.mxu0 %v3951
      %v4194 = vpop.f32.mrf.mxu0
      %v4195 = vadd.f32 0.0, %v4194
      %v4196 = vpop.f32.mrf.mxu0
      %v4197 = vadd.f32 0.0, %v4196
      %4198 = vmatmul.bf16.gmra.mxu0 %v3954
      %v4199 = vpop.f32.mrf.mxu0
      %v4200 = vadd.f32 0.0, %v4199
      %v4201 = vpop.f32.mrf.mxu0
      %4202 = vdwg.mxu0
      %4203 = vmatpush.bf16.msra.mxu0 0
      %4204 = vmatpush.bf16.msra.mxu0 0
      %4205 = vmatpush.bf16.msra.mxu0 0
      %4206 = vmatpush.bf16.msra.mxu0 0
      %4207 = vmatpush.bf16.msra.mxu0 0
      %4208 = vmatpush.bf16.msra.mxu0 0
      %4209 = vmatpush.bf16.msra.mxu0 %v3967
      %4210 = vmatpush.bf16.msra.mxu0 %v3840
      %4211 = vmatmul.bf16.gmra.mxu0 %v3915
      %v4212 = vpop.f32.mrf.mxu0
      %v4213 = vadd.f32 0.0, %v4212
      %v4214 = vpop.f32.mrf.mxu0
      %v4215 = vadd.f32 0.0, %v4214
      %4216 = vmatmul.bf16.gmra.mxu0 %v3918
      %v4217 = vpop.f32.mrf.mxu0
      %v4218 = vadd.f32 0.0, %v4217
      %v4219 = vpop.f32.mrf.mxu0
      %v4220 = vadd.f32 0.0, %v4219
      %4221 = vmatmul.bf16.gmra.mxu0 %v3921
      %v4222 = vpop.f32.mrf.mxu0
      %v4223 = vadd.f32 0.0, %v4222
      %v4224 = vpop.f32.mrf.mxu0
      %v4225 = vadd.f32 0.0, %v4224
      %4226 = vmatmul.bf16.gmra.mxu0 %v3924
      %v4227 = vpop.f32.mrf.mxu0
      %v4228 = vadd.f32 0.0, %v4227
      %v4229 = vpop.f32.mrf.mxu0
      %v4230 = vadd.f32 0.0, %v4229
      %4231 = vmatmul.bf16.gmra.mxu0 %v3927
      %v4232 = vpop.f32.mrf.mxu0
      %v4233 = vadd.f32 0.0, %v4232
      %v4234 = vpop.f32.mrf.mxu0
      %v4235 = vadd.f32 0.0, %v4234
      %4236 = vmatmul.bf16.gmra.mxu0 %v3930
      %v4237 = vpop.f32.mrf.mxu0
      %v4238 = vadd.f32 0.0, %v4237
      %v4239 = vpop.f32.mrf.mxu0
      %v4240 = vadd.f32 0.0, %v4239
      %4241 = vmatmul.bf16.gmra.mxu0 %v3933
      %v4242 = vpop.f32.mrf.mxu0
      %v4243 = vadd.f32 0.0, %v4242
      %v4244 = vpop.f32.mrf.mxu0
      %v4245 = vadd.f32 0.0, %v4244
      %4246 = vmatmul.bf16.gmra.mxu0 %v3936
      %v4247 = vpop.f32.mrf.mxu0
      %v4248 = vadd.f32 0.0, %v4247
      %v4249 = vpop.f32.mrf.mxu0
      %v4250 = vadd.f32 0.0, %v4249
      %4251 = vmatmul.bf16.gmra.mxu0 %v3939
      %v4252 = vpop.f32.mrf.mxu0
      %v4253 = vadd.f32 0.0, %v4252
      %v4254 = vpop.f32.mrf.mxu0
      %v4255 = vadd.f32 0.0, %v4254
      %4256 = vmatmul.bf16.gmra.mxu0 %v3942
      %v4257 = vpop.f32.mrf.mxu0
      %v4258 = vadd.f32 0.0, %v4257
      %v4259 = vpop.f32.mrf.mxu0
      %v4260 = vadd.f32 0.0, %v4259
      %4261 = vmatmul.bf16.gmra.mxu0 %v3945
      %v4262 = vpop.f32.mrf.mxu0
      %v4263 = vadd.f32 0.0, %v4262
      %v4264 = vpop.f32.mrf.mxu0
      %v4265 = vadd.f32 0.0, %v4264
      %4266 = vmatmul.bf16.gmra.mxu0 %v3948
      %v4267 = vpop.f32.mrf.mxu0
      %v4268 = vadd.f32 0.0, %v4267
      %v4269 = vpop.f32.mrf.mxu0
      %v4270 = vadd.f32 0.0, %v4269
      %4271 = vmatmul.bf16.gmra.mxu0 %v3951
      %v4272 = vpop.f32.mrf.mxu0
      %v4273 = vadd.f32 0.0, %v4272
      %v4274 = vpop.f32.mrf.mxu0
      %v4275 = vadd.f32 0.0, %v4274
      %4276 = vmatmul.bf16.gmra.mxu0 %v3954
      %v4277 = vpop.f32.mrf.mxu0
      %v4278 = vadd.f32 0.0, %v4277
      %v4279 = vpop.f32.mrf.mxu0
      %4280 = vdwg.mxu0
      %4281 = vrot.lane.b32.xlu0 %v3979, 72
      %v4282 = vpop.permute.xlu0 %4281
      %4283 = vrot.lane.b32.xlu0 %v3981, 72
      %v4284 = vpop.permute.xlu0 %4283
      %4285 = vrot.lane.b32.xlu0 %v3984, 72
      %v4286 = vpop.permute.xlu0 %4285
      %4287 = vrot.lane.b32.xlu0 %v4057, 72
      %v4288 = vpop.permute.xlu0 %4287
      %4289 = vrot.lane.b32.xlu0 %v4059, 72
      %v4290 = vpop.permute.xlu0 %4289
      %4291 = vrot.lane.b32.xlu0 %v4062, 72
      %v4292 = vpop.permute.xlu0 %4291
      %4293 = vrot.lane.b32.xlu0 %v4135, 72
      %v4294 = vpop.permute.xlu0 %4293
      %4295 = vrot.lane.b32.xlu0 %v4137, 72
      %v4296 = vpop.permute.xlu0 %4295
      %4297 = vrot.lane.b32.xlu0 %v4140, 72
      %v4298 = vpop.permute.xlu0 %4297
      %4299 = vrot.lane.b32.xlu0 %v4213, 72
      %v4300 = vpop.permute.xlu0 %4299
      %4301 = vrot.lane.b32.xlu0 %v4215, 72
      %v4302 = vpop.permute.xlu0 %4301
      %4303 = vrot.lane.b32.xlu0 %v4218, 72
      %v4304 = vpop.permute.xlu0 %4303
      %v4305 = vsel %vm2001, %v4294, %v4300
      %v4306 = vsel %vm2001, %v4296, %v4302
      %v4307 = vsel %vm2001, %v4298, %v4304
      %v4308 = vsel %vm2001, %v4288, %v4294
      %v4309 = vsel %vm2001, %v4290, %v4296
      %v4310 = vsel %vm2001, %v4292, %v4298
      %v4311 = vsel %vm2001, %v4282, %v4288
      %v4312 = vsel %vm2001, %v4284, %v4290
      %v4313 = vsel %vm2001, %v4286, %v4292
      %v4314 = vsel %vm2001, %v4300, %v4282
      %v4315 = vsel %vm2001, %v4302, %v4284
      %v4316 = vsel %vm2001, %v4304, %v4286
      %v4317 = vld [vmem:[%s3] ss:$8 sm:$0xf]
      %v4319 = vperm.slane %v4317, 0
      %v4320 = vperm.slane %v4317, 1
      %v4321 = vperm.slane %v4317, 2
      %v4322 = vperm.slane %v4317, 3
      %v4327 = vmul.f32 %v4314, %v4319
      %v4328 = vmul.f32 %v4311, %v4320
      %v4329 = vmul.f32 %v4308, %v4321
      %v4330 = vmul.f32 %v4305, %v4322
      %v4331 = vmul.f32 %v4315, %v4319
      %v4332 = vmul.f32 %v4312, %v4320
      %v4333 = vmul.f32 %v4309, %v4321
      %v4334 = vmul.f32 %v4306, %v4322
      %v4335 = vmul.f32 %v4316, %v4319
      %v4336 = vmul.f32 %v4313, %v4320
      %v4337 = vmul.f32 %v4310, %v4321
      %v4338 = vmul.f32 %v4307, %v4322
      %4339 = vrot.lane.b32.xlu0 %v3986, 64
      %v4340 = vpop.permute.xlu0 %4339
      %4341 = vrot.lane.b32.xlu0 %v3989, 64
      %v4342 = vpop.permute.xlu0 %4341
      %4343 = vrot.lane.b32.xlu0 %v3991, 64
      %v4344 = vpop.permute.xlu0 %4343
      %4345 = vrot.lane.b32.xlu0 %v4064, 64
      %v4346 = vpop.permute.xlu0 %4345
      %4347 = vrot.lane.b32.xlu0 %v4067, 64
      %v4348 = vpop.permute.xlu0 %4347
      %4349 = vrot.lane.b32.xlu0 %v4069, 64
      %v4350 = vpop.permute.xlu0 %4349
      %4351 = vrot.lane.b32.xlu0 %v4142, 64
      %v4352 = vpop.permute.xlu0 %4351
      %4353 = vrot.lane.b32.xlu0 %v4145, 64
      %v4354 = vpop.permute.xlu0 %4353
      %4355 = vrot.lane.b32.xlu0 %v4147, 64
      %v4356 = vpop.permute.xlu0 %4355
      %4357 = vrot.lane.b32.xlu0 %v4220, 64
      %v4358 = vpop.permute.xlu0 %4357
      %4359 = vrot.lane.b32.xlu0 %v4223, 64
      %v4360 = vpop.permute.xlu0 %4359
      %4361 = vrot.lane.b32.xlu0 %v4225, 64
      %v4362 = vpop.permute.xlu0 %4361
      %v4363 = vsel %vm2181, %v4352, %v4358
      %v4364 = vsel %vm2181, %v4354, %v4360
      %v4365 = vsel %vm2181, %v4356, %v4362
      %v4366 = vsel %vm2181, %v4346, %v4352
      %v4367 = vsel %vm2181, %v4348, %v4354
      %v4368 = vsel %vm2181, %v4350, %v4356
      %v4369 = vsel %vm2181, %v4340, %v4346
      %v4370 = vsel %vm2181, %v4342, %v4348
      %v4371 = vsel %vm2181, %v4344, %v4350
      %v4372 = vsel %vm2181, %v4358, %v4340
      %v4373 = vsel %vm2181, %v4360, %v4342
      %v4374 = vsel %vm2181, %v4362, %v4344
      %s4375 = scalar_lea.vmem %s3, 1
      %v4376 = vld [vmem:[%s4375] ss:$8 sm:$0xf]
      %v4378 = vperm.slane %v4376, 0
      %v4379 = vperm.slane %v4376, 1
      %v4380 = vperm.slane %v4376, 2
      %v4381 = vperm.slane %v4376, 3
      %v4386 = vmul.f32 %v4372, %v4378
      %v4387 = vmul.f32 %v4369, %v4379
      %v4388 = vmul.f32 %v4366, %v4380
      %v4389 = vmul.f32 %v4363, %v4381
      %v4390 = vmul.f32 %v4373, %v4378
      %v4391 = vmul.f32 %v4370, %v4379
      %v4392 = vmul.f32 %v4367, %v4380
      %v4393 = vmul.f32 %v4364, %v4381
      %v4394 = vmul.f32 %v4374, %v4378
      %v4395 = vmul.f32 %v4371, %v4379
      %v4396 = vmul.f32 %v4368, %v4380
      %v4397 = vmul.f32 %v4365, %v4381
      %4398 = vrot.lane.b32.xlu0 %v3994, 56
      %v4399 = vpop.permute.xlu0 %4398
      %4400 = vrot.lane.b32.xlu0 %v3996, 56
      %v4401 = vpop.permute.xlu0 %4400
      %4402 = vrot.lane.b32.xlu0 %v3999, 56
      %v4403 = vpop.permute.xlu0 %4402
      %4404 = vrot.lane.b32.xlu0 %v4072, 56
      %v4405 = vpop.permute.xlu0 %4404
      %4406 = vrot.lane.b32.xlu0 %v4074, 56
      %v4407 = vpop.permute.xlu0 %4406
      %4408 = vrot.lane.b32.xlu0 %v4077, 56
      %v4409 = vpop.permute.xlu0 %4408
      %4410 = vrot.lane.b32.xlu0 %v4150, 56
      %v4411 = vpop.permute.xlu0 %4410
      %4412 = vrot.lane.b32.xlu0 %v4152, 56
      %v4413 = vpop.permute.xlu0 %4412
      %4414 = vrot.lane.b32.xlu0 %v4155, 56
      %v4415 = vpop.permute.xlu0 %4414
      %4416 = vrot.lane.b32.xlu0 %v4228, 56
      %v4417 = vpop.permute.xlu0 %4416
      %4418 = vrot.lane.b32.xlu0 %v4230, 56
      %v4419 = vpop.permute.xlu0 %4418
      %4420 = vrot.lane.b32.xlu0 %v4233, 56
      %v4421 = vpop.permute.xlu0 %4420
      %v4422 = vsel %vm2397, %v4411, %v4417
      %v4423 = vsel %vm2397, %v4413, %v4419
      %v4424 = vsel %vm2397, %v4415, %v4421
      %v4425 = vsel %vm2397, %v4405, %v4411
      %v4426 = vsel %vm2397, %v4407, %v4413
      %v4427 = vsel %vm2397, %v4409, %v4415
      %v4428 = vsel %vm2397, %v4399, %v4405
      %v4429 = vsel %vm2397, %v4401, %v4407
      %v4430 = vsel %vm2397, %v4403, %v4409
      %v4431 = vsel %vm2397, %v4417, %v4399
      %v4432 = vsel %vm2397, %v4419, %v4401
      %v4433 = vsel %vm2397, %v4421, %v4403
      %s4434 = scalar_lea.vmem %s3, 2
      %v4435 = vld [vmem:[%s4434] ss:$8 sm:$0xf]
      %v4437 = vperm.slane %v4435, 0
      %v4438 = vperm.slane %v4435, 1
      %v4439 = vperm.slane %v4435, 2
      %v4440 = vperm.slane %v4435, 3
      %v4445 = vmul.f32 %v4431, %v4437
      %v4446 = vmul.f32 %v4428, %v4438
      %v4447 = vmul.f32 %v4425, %v4439
      %v4448 = vmul.f32 %v4422, %v4440
      %v4449 = vmul.f32 %v4432, %v4437
      %v4450 = vmul.f32 %v4429, %v4438
      %v4451 = vmul.f32 %v4426, %v4439
      %v4452 = vmul.f32 %v4423, %v4440
      %v4453 = vmul.f32 %v4433, %v4437
      %v4454 = vmul.f32 %v4430, %v4438
      %v4455 = vmul.f32 %v4427, %v4439
      %v4456 = vmul.f32 %v4424, %v4440
      %4457 = vrot.lane.b32.xlu0 %v4001, 8
      %v4458 = vpop.permute.xlu0 %4457
      %4459 = vrot.lane.b32.xlu0 %v4004, 8
      %v4460 = vpop.permute.xlu0 %4459
      %4461 = vrot.lane.b32.xlu0 %v4006, 8
      %v4462 = vpop.permute.xlu0 %4461
      %4463 = vrot.lane.b32.xlu0 %v4079, 8
      %v4464 = vpop.permute.xlu0 %4463
      %4465 = vrot.lane.b32.xlu0 %v4082, 8
      %v4466 = vpop.permute.xlu0 %4465
      %4467 = vrot.lane.b32.xlu0 %v4084, 8
      %v4468 = vpop.permute.xlu0 %4467
      %4469 = vrot.lane.b32.xlu0 %v4157, 8
      %v4470 = vpop.permute.xlu0 %4469
      %4471 = vrot.lane.b32.xlu0 %v4160, 8
      %v4472 = vpop.permute.xlu0 %4471
      %4473 = vrot.lane.b32.xlu0 %v4162, 8
      %v4474 = vpop.permute.xlu0 %4473
      %4475 = vrot.lane.b32.xlu0 %v4235, 8
      %v4476 = vpop.permute.xlu0 %4475
      %4477 = vrot.lane.b32.xlu0 %v4238, 8
      %v4478 = vpop.permute.xlu0 %4477
      %4479 = vrot.lane.b32.xlu0 %v4240, 8
      %v4480 = vpop.permute.xlu0 %4479
      %v4481 = vsel %vm2613, %v4470, %v4476
      %v4482 = vsel %vm2613, %v4472, %v4478
      %v4483 = vsel %vm2613, %v4474, %v4480
      %v4484 = vsel %vm2613, %v4464, %v4470
      %v4485 = vsel %vm2613, %v4466, %v4472
      %v4486 = vsel %vm2613, %v4468, %v4474
      %v4487 = vsel %vm2613, %v4458, %v4464
      %v4488 = vsel %vm2613, %v4460, %v4466
      %v4489 = vsel %vm2613, %v4462, %v4468
      %v4490 = vsel %vm2613, %v4476, %v4458
      %v4491 = vsel %vm2613, %v4478, %v4460
      %v4492 = vsel %vm2613, %v4480, %v4462
      %s4493 = scalar_lea.vmem %s3, 3
      %v4494 = vld [vmem:[%s4493] ss:$8 sm:$0xf]
      %v4496 = vperm.slane %v4494, 0
      %v4497 = vperm.slane %v4494, 1
      %v4498 = vperm.slane %v4494, 2
      %v4499 = vperm.slane %v4494, 3
      %v4504 = vmul.f32 %v4490, %v4496
      %v4505 = vmul.f32 %v4487, %v4497
      %v4506 = vmul.f32 %v4484, %v4498
      %v4507 = vmul.f32 %v4481, %v4499
      %v4508 = vmul.f32 %v4491, %v4496
      %v4509 = vmul.f32 %v4488, %v4497
      %v4510 = vmul.f32 %v4485, %v4498
      %v4511 = vmul.f32 %v4482, %v4499
      %v4512 = vmul.f32 %v4492, %v4496
      %v4513 = vmul.f32 %v4489, %v4497
      %v4514 = vmul.f32 %v4486, %v4498
      %v4515 = vmul.f32 %v4483, %v4499
      %v4516 = vadd.f32 %v4327, %v4009
      %v4517 = vadd.f32 %v4328, %v4087
      %v4518 = vadd.f32 %v4329, %v4165
      %v4519 = vadd.f32 %v4330, %v4243
      %v4520 = vadd.f32 %v4331, %v4011
      %v4521 = vadd.f32 %v4332, %v4089
      %v4522 = vadd.f32 %v4333, %v4167
      %v4523 = vadd.f32 %v4334, %v4245
      %v4524 = vadd.f32 %v4335, %v4014
      %v4525 = vadd.f32 %v4336, %v4092
      %v4526 = vadd.f32 %v4337, %v4170
      %v4527 = vadd.f32 %v4338, %v4248
      %4528 = vrot.lane.b32.xlu0 %v4016, 120
      %v4529 = vpop.permute.xlu0 %4528
      %4530 = vrot.lane.b32.xlu0 %v4019, 120
      %v4531 = vpop.permute.xlu0 %4530
      %4532 = vrot.lane.b32.xlu0 %v4021, 120
      %v4533 = vpop.permute.xlu0 %4532
      %4534 = vrot.lane.b32.xlu0 %v4094, 120
      %v4535 = vpop.permute.xlu0 %4534
      %4536 = vrot.lane.b32.xlu0 %v4097, 120
      %v4537 = vpop.permute.xlu0 %4536
      %4538 = vrot.lane.b32.xlu0 %v4099, 120
      %v4539 = vpop.permute.xlu0 %4538
      %4540 = vrot.lane.b32.xlu0 %v4172, 120
      %v4541 = vpop.permute.xlu0 %4540
      %4542 = vrot.lane.b32.xlu0 %v4175, 120
      %v4543 = vpop.permute.xlu0 %4542
      %4544 = vrot.lane.b32.xlu0 %v4177, 120
      %v4545 = vpop.permute.xlu0 %4544
      %4546 = vrot.lane.b32.xlu0 %v4250, 120
      %v4547 = vpop.permute.xlu0 %4546
      %4548 = vrot.lane.b32.xlu0 %v4253, 120
      %v4549 = vpop.permute.xlu0 %4548
      %4550 = vrot.lane.b32.xlu0 %v4255, 120
      %v4551 = vpop.permute.xlu0 %4550
      %v4552 = vsel %vm2985, %v4541, %v4547
      %v4553 = vsel %vm2985, %v4543, %v4549
      %v4554 = vsel %vm2985, %v4545, %v4551
      %v4555 = vsel %vm2985, %v4535, %v4541
      %v4556 = vsel %vm2985, %v4537, %v4543
      %v4557 = vsel %vm2985, %v4539, %v4545
      %v4558 = vsel %vm2985, %v4529, %v4535
      %v4559 = vsel %vm2985, %v4531, %v4537
      %v4560 = vsel %vm2985, %v4533, %v4539
      %v4561 = vsel %vm2985, %v4547, %v4529
      %v4562 = vsel %vm2985, %v4549, %v4531
      %v4563 = vsel %vm2985, %v4551, %v4533
      %s4564 = scalar_lea.vmem %s3, 5
      %v4565 = vld [vmem:[%s4564] ss:$8 sm:$0xf]
      %v4567 = vperm.slane %v4565, 0
      %v4568 = vperm.slane %v4565, 1
      %v4569 = vperm.slane %v4565, 2
      %v4570 = vperm.slane %v4565, 3
      %v4575 = vmul.f32 %v4558, %v4567
      %v4576 = vmul.f32 %v4555, %v4568
      %v4577 = vmul.f32 %v4552, %v4569
      %v4578 = vmul.f32 %v4561, %v4570
      %v4579 = vmul.f32 %v4559, %v4567
      %v4580 = vmul.f32 %v4556, %v4568
      %v4581 = vmul.f32 %v4553, %v4569
      %v4582 = vmul.f32 %v4562, %v4570
      %v4583 = vmul.f32 %v4560, %v4567
      %v4584 = vmul.f32 %v4557, %v4568
      %v4585 = vmul.f32 %v4554, %v4569
      %v4586 = vmul.f32 %v4563, %v4570
      %v4587 = vadd.f32 %v4386, %v4575
      %v4588 = vadd.f32 %v4387, %v4576
      %v4589 = vadd.f32 %v4388, %v4577
      %v4590 = vadd.f32 %v4389, %v4578
      %v4591 = vadd.f32 %v4390, %v4579
      %v4592 = vadd.f32 %v4391, %v4580
      %v4593 = vadd.f32 %v4392, %v4581
      %v4594 = vadd.f32 %v4393, %v4582
      %v4595 = vadd.f32 %v4394, %v4583
      %v4596 = vadd.f32 %v4395, %v4584
      %v4597 = vadd.f32 %v4396, %v4585
      %v4598 = vadd.f32 %v4397, %v4586
      %4599 = vrot.lane.b32.xlu0 %v4024, 72
      %v4600 = vpop.permute.xlu0 %4599
      %4601 = vrot.lane.b32.xlu0 %v4026, 72
      %v4602 = vpop.permute.xlu0 %4601
      %4603 = vrot.lane.b32.xlu0 %v4029, 72
      %v4604 = vpop.permute.xlu0 %4603
      %4605 = vrot.lane.b32.xlu0 %v4102, 72
      %v4606 = vpop.permute.xlu0 %4605
      %4607 = vrot.lane.b32.xlu0 %v4104, 72
      %v4608 = vpop.permute.xlu0 %4607
      %4609 = vrot.lane.b32.xlu0 %v4107, 72
      %v4610 = vpop.permute.xlu0 %4609
      %4611 = vrot.lane.b32.xlu0 %v4180, 72
      %v4612 = vpop.permute.xlu0 %4611
      %4613 = vrot.lane.b32.xlu0 %v4182, 72
      %v4614 = vpop.permute.xlu0 %4613
      %4615 = vrot.lane.b32.xlu0 %v4185, 72
      %v4616 = vpop.permute.xlu0 %4615
      %4617 = vrot.lane.b32.xlu0 %v4258, 72
      %v4618 = vpop.permute.xlu0 %4617
      %4619 = vrot.lane.b32.xlu0 %v4260, 72
      %v4620 = vpop.permute.xlu0 %4619
      %4621 = vrot.lane.b32.xlu0 %v4263, 72
      %v4622 = vpop.permute.xlu0 %4621
      %v4623 = vsel %vm2001, %v4612, %v4618
      %v4624 = vsel %vm2001, %v4614, %v4620
      %v4625 = vsel %vm2001, %v4616, %v4622
      %v4626 = vsel %vm2001, %v4606, %v4612
      %v4627 = vsel %vm2001, %v4608, %v4614
      %v4628 = vsel %vm2001, %v4610, %v4616
      %v4629 = vsel %vm2001, %v4600, %v4606
      %v4630 = vsel %vm2001, %v4602, %v4608
      %v4631 = vsel %vm2001, %v4604, %v4610
      %v4632 = vsel %vm2001, %v4618, %v4600
      %v4633 = vsel %vm2001, %v4620, %v4602
      %v4634 = vsel %vm2001, %v4622, %v4604
      %s4635 = scalar_lea.vmem %s3, 6
      %v4636 = vld [vmem:[%s4635] ss:$8 sm:$0xf]
      %v4638 = vperm.slane %v4636, 0
      %v4639 = vperm.slane %v4636, 1
      %v4640 = vperm.slane %v4636, 2
      %v4641 = vperm.slane %v4636, 3
      %v4646 = vmul.f32 %v4629, %v4638
      %v4647 = vmul.f32 %v4626, %v4639
      %v4648 = vmul.f32 %v4623, %v4640
      %v4649 = vmul.f32 %v4632, %v4641
      %v4650 = vmul.f32 %v4630, %v4638
      %v4651 = vmul.f32 %v4627, %v4639
      %v4652 = vmul.f32 %v4624, %v4640
      %v4653 = vmul.f32 %v4633, %v4641
      %v4654 = vmul.f32 %v4631, %v4638
      %v4655 = vmul.f32 %v4628, %v4639
      %v4656 = vmul.f32 %v4625, %v4640
      %v4657 = vmul.f32 %v4634, %v4641
      %v4658 = vadd.f32 %v4445, %v4646
      %v4659 = vadd.f32 %v4446, %v4647
      %v4660 = vadd.f32 %v4447, %v4648
      %v4661 = vadd.f32 %v4448, %v4649
      %v4662 = vadd.f32 %v4449, %v4650
      %v4663 = vadd.f32 %v4450, %v4651
      %v4664 = vadd.f32 %v4451, %v4652
      %v4665 = vadd.f32 %v4452, %v4653
      %v4666 = vadd.f32 %v4453, %v4654
      %v4667 = vadd.f32 %v4454, %v4655
      %v4668 = vadd.f32 %v4455, %v4656
      %v4669 = vadd.f32 %v4456, %v4657
      %4670 = vrot.lane.b32.xlu0 %v4031, 64
      %v4671 = vpop.permute.xlu0 %4670
      %4672 = vrot.lane.b32.xlu0 %v4034, 64
      %v4673 = vpop.permute.xlu0 %4672
      %4674 = vrot.lane.b32.xlu0 %v4036, 64
      %v4675 = vpop.permute.xlu0 %4674
      %4676 = vrot.lane.b32.xlu0 %v4109, 64
      %v4677 = vpop.permute.xlu0 %4676
      %4678 = vrot.lane.b32.xlu0 %v4112, 64
      %v4679 = vpop.permute.xlu0 %4678
      %4680 = vrot.lane.b32.xlu0 %v4114, 64
      %v4681 = vpop.permute.xlu0 %4680
      %4682 = vrot.lane.b32.xlu0 %v4187, 64
      %v4683 = vpop.permute.xlu0 %4682
      %4684 = vrot.lane.b32.xlu0 %v4190, 64
      %v4685 = vpop.permute.xlu0 %4684
      %4686 = vrot.lane.b32.xlu0 %v4192, 64
      %v4687 = vpop.permute.xlu0 %4686
      %4688 = vrot.lane.b32.xlu0 %v4265, 64
      %v4689 = vpop.permute.xlu0 %4688
      %4690 = vrot.lane.b32.xlu0 %v4268, 64
      %v4691 = vpop.permute.xlu0 %4690
      %4692 = vrot.lane.b32.xlu0 %v4270, 64
      %v4693 = vpop.permute.xlu0 %4692
      %v4694 = vsel %vm2181, %v4683, %v4689
      %v4695 = vsel %vm2181, %v4685, %v4691
      %v4696 = vsel %vm2181, %v4687, %v4693
      %v4697 = vsel %vm2181, %v4677, %v4683
      %v4698 = vsel %vm2181, %v4679, %v4685
      %v4699 = vsel %vm2181, %v4681, %v4687
      %v4700 = vsel %vm2181, %v4671, %v4677
      %v4701 = vsel %vm2181, %v4673, %v4679
      %v4702 = vsel %vm2181, %v4675, %v4681
      %v4703 = vsel %vm2181, %v4689, %v4671
      %v4704 = vsel %vm2181, %v4691, %v4673
      %v4705 = vsel %vm2181, %v4693, %v4675
      %s4706 = scalar_lea.vmem %s3, 7
      %v4707 = vld [vmem:[%s4706] ss:$8 sm:$0xf]
      %v4709 = vperm.slane %v4707, 0
      %v4710 = vperm.slane %v4707, 1
      %v4711 = vperm.slane %v4707, 2
      %v4712 = vperm.slane %v4707, 3
      %v4717 = vmul.f32 %v4700, %v4709
      %v4718 = vmul.f32 %v4697, %v4710
      %v4719 = vmul.f32 %v4694, %v4711
      %v4720 = vmul.f32 %v4703, %v4712
      %v4721 = vmul.f32 %v4701, %v4709
      %v4722 = vmul.f32 %v4698, %v4710
      %v4723 = vmul.f32 %v4695, %v4711
      %v4724 = vmul.f32 %v4704, %v4712
      %v4725 = vmul.f32 %v4702, %v4709
      %v4726 = vmul.f32 %v4699, %v4710
      %v4727 = vmul.f32 %v4696, %v4711
      %v4728 = vmul.f32 %v4705, %v4712
      %v4729 = vadd.f32 %v4504, %v4717
      %v4730 = vadd.f32 %v4505, %v4718
      %v4731 = vadd.f32 %v4506, %v4719
      %v4732 = vadd.f32 %v4507, %v4720
      %v4733 = vadd.f32 %v4508, %v4721
      %v4734 = vadd.f32 %v4509, %v4722
      %v4735 = vadd.f32 %v4510, %v4723
      %v4736 = vadd.f32 %v4511, %v4724
      %v4737 = vadd.f32 %v4512, %v4725
      %v4738 = vadd.f32 %v4513, %v4726
      %v4739 = vadd.f32 %v4514, %v4727
      %v4740 = vadd.f32 %v4515, %v4728
      %4741 = vrot.lane.b32.xlu0 %v4039, 56
      %v4742 = vpop.permute.xlu0 %4741
      %4743 = vrot.lane.b32.xlu0 %v4041, 56
      %v4744 = vpop.permute.xlu0 %4743
      %4745 = vrot.lane.b32.xlu0 %v4044, 56
      %v4746 = vpop.permute.xlu0 %4745
      %4747 = vrot.lane.b32.xlu0 %v4117, 56
      %v4748 = vpop.permute.xlu0 %4747
      %4749 = vrot.lane.b32.xlu0 %v4119, 56
      %v4750 = vpop.permute.xlu0 %4749
      %4751 = vrot.lane.b32.xlu0 %v4122, 56
      %v4752 = vpop.permute.xlu0 %4751
      %4753 = vrot.lane.b32.xlu0 %v4195, 56
      %v4754 = vpop.permute.xlu0 %4753
      %4755 = vrot.lane.b32.xlu0 %v4197, 56
      %v4756 = vpop.permute.xlu0 %4755
      %4757 = vrot.lane.b32.xlu0 %v4200, 56
      %v4758 = vpop.permute.xlu0 %4757
      %4759 = vrot.lane.b32.xlu0 %v4273, 56
      %v4760 = vpop.permute.xlu0 %4759
      %4761 = vrot.lane.b32.xlu0 %v4275, 56
      %v4762 = vpop.permute.xlu0 %4761
      %4763 = vrot.lane.b32.xlu0 %v4278, 56
      %v4764 = vpop.permute.xlu0 %4763
      %v4765 = vsel %vm2397, %v4754, %v4760
      %v4766 = vsel %vm2397, %v4756, %v4762
      %v4767 = vsel %vm2397, %v4758, %v4764
      %v4768 = vsel %vm2397, %v4748, %v4754
      %v4769 = vsel %vm2397, %v4750, %v4756
      %v4770 = vsel %vm2397, %v4752, %v4758
      %v4771 = vsel %vm2397, %v4742, %v4748
      %v4772 = vsel %vm2397, %v4744, %v4750
      %v4773 = vsel %vm2397, %v4746, %v4752
      %v4774 = vsel %vm2397, %v4760, %v4742
      %v4775 = vsel %vm2397, %v4762, %v4744
      %v4776 = vsel %vm2397, %v4764, %v4746
      %s4777 = scalar_lea.vmem %s3, 32
      %v4778 = vld [vmem:[%s4777] ss:$8 sm:$0xf]
      %v4780 = vperm.slane %v4778, 0
      %v4781 = vperm.slane %v4778, 1
      %v4782 = vperm.slane %v4778, 2
      %v4783 = vperm.slane %v4778, 3
      %v4788 = vmul.f32 %v4771, %v4780
      %v4789 = vmul.f32 %v4768, %v4781
      %v4790 = vmul.f32 %v4765, %v4782
      %v4791 = vmul.f32 %v4774, %v4783
      %v4792 = vmul.f32 %v4772, %v4780
      %v4793 = vmul.f32 %v4769, %v4781
      %v4794 = vmul.f32 %v4766, %v4782
      %v4795 = vmul.f32 %v4775, %v4783
      %v4796 = vmul.f32 %v4773, %v4780
      %v4797 = vmul.f32 %v4770, %v4781
      %v4798 = vmul.f32 %v4767, %v4782
      %v4799 = vmul.f32 %v4776, %v4783
      %v4800 = vadd.f32 %v4516, %v4788
      %v4801 = vadd.f32 %v4517, %v4789
      %v4802 = vadd.f32 %v4518, %v4790
      %v4803 = vadd.f32 %v4519, %v4791
      %v4804 = vadd.f32 %v4520, %v4792
      %v4805 = vadd.f32 %v4521, %v4793
      %v4806 = vadd.f32 %v4522, %v4794
      %v4807 = vadd.f32 %v4523, %v4795
      %v4808 = vadd.f32 %v4524, %v4796
      %v4809 = vadd.f32 %v4525, %v4797
      %v4810 = vadd.f32 %v4526, %v4798
      %v4811 = vadd.f32 %v4527, %v4799
      %v4812 = vadd.f32 %v4800, %v4587
      %v4813 = vadd.f32 %v4801, %v4588
      %v4814 = vadd.f32 %v4802, %v4589
      %v4815 = vadd.f32 %v4803, %v4590
      %v4816 = vadd.f32 %v4804, %v4591
      %v4817 = vadd.f32 %v4805, %v4592
      %v4818 = vadd.f32 %v4806, %v4593
      %v4819 = vadd.f32 %v4807, %v4594
      %v4820 = vadd.f32 %v4808, %v4595
      %v4821 = vadd.f32 %v4809, %v4596
      %v4822 = vadd.f32 %v4810, %v4597
      %v4823 = vadd.f32 %v4811, %v4598
      %v4824 = vadd.f32 %v4658, %v4729
      %v4825 = vadd.f32 %v4659, %v4730
      %v4826 = vadd.f32 %v4660, %v4731
      %v4827 = vadd.f32 %v4661, %v4732
      %v4828 = vadd.f32 %v4662, %v4733
      %v4829 = vadd.f32 %v4663, %v4734
      %v4830 = vadd.f32 %v4664, %v4735
      %v4831 = vadd.f32 %v4665, %v4736
      %v4832 = vadd.f32 %v4666, %v4737
      %v4833 = vadd.f32 %v4667, %v4738
      %v4834 = vadd.f32 %v4668, %v4739
      %v4835 = vadd.f32 %v4669, %v4740
      %v4836 = vadd.f32 %v4812, %v4824
      %v4837 = vadd.f32 %v4813, %v4825
      %v4838 = vadd.f32 %v4814, %v4826
      %v4839 = vadd.f32 %v4815, %v4827
      %v4840 = vadd.f32 %v4816, %v4828
      %v4841 = vadd.f32 %v4817, %v4829
      %v4842 = vadd.f32 %v4818, %v4830
      %v4843 = vadd.f32 %v4819, %v4831
      %v4844 = vadd.f32 %v4820, %v4832
      %v4845 = vadd.f32 %v4821, %v4833
      %v4846 = vadd.f32 %v4822, %v4834
      %v4847 = vadd.f32 %v4823, %v4835
      %v4848 = vld [vmem:[%s523] sm:$0xff]
      %v4849 = vld [vmem:[%s523 + $0x8] sm:$0xff]
      %v4850 = vld [vmem:[%s523 + $0x10] sm:$0xff]
      %4852 = vset.pattern.permute.xlu0 0
      %4853 = vperm.xlu0 %4852, %v4848
      %v4854 = vpop.permute.xlu0 %4853
      %4857 = vset.pattern.permute.xlu0 0
      %4858 = vperm.xlu0 %4857, %v4849
      %v4859 = vpop.permute.xlu0 %4858
      %4862 = vset.pattern.permute.xlu0 0
      %4863 = vperm.xlu0 %4862, %v4850
      %v4864 = vpop.permute.xlu0 %4863
      %v4866 = vadd.f32 %v4836, %v4854
      %v4867 = vadd.f32 %v4837, %v4854
      %v4868 = vadd.f32 %v4838, %v4854
      %v4869 = vadd.f32 %v4839, %v4854
      %v4870 = vadd.f32 %v4840, %v4859
      %v4871 = vadd.f32 %v4841, %v4859
      %v4872 = vadd.f32 %v4842, %v4859
      %v4873 = vadd.f32 %v4843, %v4859
      %v4874 = vadd.f32 %v4844, %v4864
      %v4875 = vadd.f32 %v4845, %v4864
      %v4876 = vadd.f32 %v4846, %v4864
      %v4877 = vadd.f32 %v4847, %v4864
      %4878 = vst [vmem:[#allocation3] sm:$0xff] %v4866
      %4879 = vst [vmem:[#allocation3 + $0x8] sm:$0xff] %v4867
      %4880 = vst [vmem:[#allocation3 + $0x10] sm:$0xff] %v4868
      %4881 = vst [vmem:[#allocation3 + $0x18] sm:$0xff] %v4869
      %4882 = vst [vmem:[#allocation3 + $0x20] sm:$0xff] %v4870
      %4883 = vst [vmem:[#allocation3 + $0x28] sm:$0xff] %v4871
      %4884 = vst [vmem:[#allocation3 + $0x30] sm:$0xff] %v4872
      %4885 = vst [vmem:[#allocation3 + $0x38] sm:$0xff] %v4873
      %4886 = vst [vmem:[#allocation3 + $0x40] sm:$0xff] %v4874
      %4887 = vst [vmem:[#allocation3 + $0x48] sm:$0xff] %v4875
      %4888 = vst [vmem:[#allocation3 + $0x50] sm:$0xff] %v4876
      %4889 = vst [vmem:[#allocation3 + $0x58] sm:$0xff] %v4877
      %4890 = vst [vmem:[#allocation3 + $0x60] sm:$0xff] %v620
      %4891 = vst [vmem:[#allocation3 + $0x68] sm:$0xff] %v621
      %4892 = vst [vmem:[#allocation3 + $0x70] sm:$0xff] %v622
      %4893 = vst [vmem:[#allocation3 + $0x78] sm:$0xff] %v623
      %4894 = vst [vmem:[#allocation3 + $0x80] sm:$0xff] %v624
      %4895 = vst [vmem:[#allocation3 + $0x88] sm:$0xff] %v625
      %4896 = vst [vmem:[#allocation3 + $0x90] sm:$0xff] %v626
      %4897 = vst [vmem:[#allocation3 + $0x98] sm:$0xff] %v627
      %4898 = vst [vmem:[#allocation3 + $0xa0] sm:$0xff] %v628
      %4899 = vst [vmem:[#allocation3 + $0xa8] sm:$0xff] %v629
      %4900 = vst [vmem:[#allocation3 + $0xb0] sm:$0xff] %v630
      %4901 = vst [vmem:[#allocation3 + $0xb8] sm:$0xff] %v631
      %v4902 = vld [vmem:[%s528] sm:$0xf]
      %v4903 = vld [vmem:[%s528 + $0x4] sm:$0xf]
      %v4904 = vld [vmem:[%s528 + $0x8] sm:$0xf]
      %v4905 = vld [vmem:[%s528 + $0xc] sm:$0xf]
      %v4906 = vld [vmem:[%s528 + $0x10] sm:$0xf]
      %v4907 = vld [vmem:[%s528 + $0x14] sm:$0xf]
      %v4908 = vld [vmem:[%s528 + $0x18] sm:$0xf]
      %v4909 = vld [vmem:[%s528 + $0x1c] sm:$0xf]
      %v4910 = vld [vmem:[%s528 + $0x20] sm:$0xf]
      %v4911 = vld [vmem:[#allocation3] sm:$0xff]
      %v4912 = vld [vmem:[#allocation3 + $0x8] sm:$0xff]
      %v4913 = vld [vmem:[#allocation3 + $0x10] sm:$0xff]
      %v4914 = vld [vmem:[#allocation3 + $0x18] sm:$0xff]
      %v4915 = vld [vmem:[#allocation3 + $0x20] sm:$0xff]
      %v4916 = vld [vmem:[#allocation3 + $0x28] sm:$0xff]
      %v4917 = vld [vmem:[#allocation3 + $0x30] sm:$0xff]
      %v4918 = vld [vmem:[#allocation3 + $0x38] sm:$0xff]
      %v4919 = vld [vmem:[#allocation3 + $0x40] sm:$0xff]
      %v4920 = vld [vmem:[#allocation3 + $0x48] sm:$0xff]
      %v4921 = vld [vmem:[#allocation3 + $0x50] sm:$0xff]
      %v4922 = vld [vmem:[#allocation3 + $0x58] sm:$0xff]
      %v4923 = vld [vmem:[#allocation3 + $0x60] sm:$0xff]
      %v4924 = vld [vmem:[#allocation3 + $0x68] sm:$0xff]
      %v4925 = vld [vmem:[#allocation3 + $0x70] sm:$0xff]
      %v4926 = vld [vmem:[#allocation3 + $0x78] sm:$0xff]
      %v4927 = vld [vmem:[#allocation3 + $0x80] sm:$0xff]
      %v4928 = vld [vmem:[#allocation3 + $0x88] sm:$0xff]
      %v4929 = vld [vmem:[#allocation3 + $0x90] sm:$0xff]
      %v4930 = vld [vmem:[#allocation3 + $0x98] sm:$0xff]
      %v4931 = vld [vmem:[#allocation3 + $0xa0] sm:$0xff]
      %v4932 = vld [vmem:[#allocation3 + $0xa8] sm:$0xff]
      %v4933 = vld [vmem:[#allocation3 + $0xb0] sm:$0xff]
      %v4934 = vld [vmem:[#allocation3 + $0xb8] sm:$0xff]
      %v4935 = vpack.c.bf16 %v4915, %v4911
      %v4936 = vpack.c.bf16 %v4916, %v4912
      %v4937 = vpack.c.bf16 %v4917, %v4913
      %v4938 = vpack.c.bf16 %v4918, %v4914
      %v4939 = vpack.c.bf16 %v4923, %v4919
      %v4940 = vpack.c.bf16 %v4924, %v4920
      %v4941 = vpack.c.bf16 %v4925, %v4921
      %v4942 = vpack.c.bf16 %v4926, %v4922
      %v4943 = vpack.c.bf16 %v4931, %v4927
      %v4944 = vpack.c.bf16 %v4932, %v4928
      %v4945 = vpack.c.bf16 %v4933, %v4929
      %v4946 = vpack.c.bf16 %v4934, %v4930
      %v4956 = vunpack.c.l.b16 %v4902
      %v4957 = vunpack.c.l.b16 %v4903
      %v4958 = vunpack.c.l.b16 %v4904
      %v4959 = vunpack.c.l.b16 %v4905
      %v4960 = vunpack.c.l.b16 %v4906
      %v4961 = vunpack.c.l.b16 %v4907
      %v4962 = vunpack.c.l.b16 %v4908
      %v4963 = vunpack.c.l.b16 %v4909
      %v4964 = vunpack.c.l.b16 %v4910
      %v4965 = vpack.c.b16 %v4957, %v4956
      %v4966 = vpack.c.b16 %v4959, %v4958
      %v4967 = vpack.c.b16 %v4961, %v4960
      %v4968 = vpack.c.b16 %v4963, %v4962
      %v4969 = vpack.c.b16 %v4964, %v4964
      %v4971 = vsel %vm940, %v4965, 0
      %v4974 = vsel %vm940, %v4966, 0
      %v4977 = vsel %vm940, %v4967, 0
      %v4980 = vsel %vm940, %v4968, 0
      %v4983 = vsel %vm940, %v4969, 0
      %4985 = vmatpush.bf16.msra.mxu0 0
      %4986 = vmatpush.bf16.msra.mxu0 0
      %4987 = vmatpush.bf16.msra.mxu0 0
      %4988 = vmatpush.bf16.msra.mxu0 0
      %4989 = vmatpush.bf16.msra.mxu0 0
      %4990 = vmatpush.bf16.msra.mxu0 %v4943
      %4991 = vmatpush.bf16.msra.mxu0 %v4939
      %4992 = vmatpush.bf16.msra.mxu0 %v4935
      %4993 = vmatmul.bf16.gmra.mxu0 %v4971
      %v4994 = vpop.f32.mrf.mxu0
      %v4995 = vadd.f32 0.0, %v4994
      %v4996 = vpop.f32.mrf.mxu0
      %v4997 = vadd.f32 0.0, %v4996
      %4998 = vmatmul.bf16.gmra.mxu0 %v4974
      %v4999 = vpop.f32.mrf.mxu0
      %v5000 = vadd.f32 0.0, %v4999
      %v5001 = vpop.f32.mrf.mxu0
      %v5002 = vadd.f32 0.0, %v5001
      %5003 = vmatmul.bf16.gmra.mxu0 %v4977
      %v5004 = vpop.f32.mrf.mxu0
      %v5005 = vadd.f32 0.0, %v5004
      %v5006 = vpop.f32.mrf.mxu0
      %v5007 = vadd.f32 0.0, %v5006
      %5008 = vmatmul.bf16.gmra.mxu0 %v4980
      %v5009 = vpop.f32.mrf.mxu0
      %v5010 = vadd.f32 0.0, %v5009
      %v5011 = vpop.f32.mrf.mxu0
      %v5012 = vadd.f32 0.0, %v5011
      %5013 = vmatmul.bf16.gmra.mxu0 %v4983
      %v5014 = vpop.f32.mrf.mxu0
      %v5015 = vadd.f32 0.0, %v5014
      %v5016 = vpop.f32.mrf.mxu0
      %5017 = vdwg.mxu0
      %5018 = vmatpush.bf16.msra.mxu0 0
      %5019 = vmatpush.bf16.msra.mxu0 0
      %5020 = vmatpush.bf16.msra.mxu0 0
      %5021 = vmatpush.bf16.msra.mxu0 0
      %5022 = vmatpush.bf16.msra.mxu0 0
      %5023 = vmatpush.bf16.msra.mxu0 %v4944
      %5024 = vmatpush.bf16.msra.mxu0 %v4940
      %5025 = vmatpush.bf16.msra.mxu0 %v4936
      %5026 = vmatmul.bf16.gmra.mxu0 %v4971
      %v5027 = vpop.f32.mrf.mxu0
      %v5028 = vadd.f32 0.0, %v5027
      %v5029 = vpop.f32.mrf.mxu0
      %v5030 = vadd.f32 0.0, %v5029
      %5031 = vmatmul.bf16.gmra.mxu0 %v4974
      %v5032 = vpop.f32.mrf.mxu0
      %v5033 = vadd.f32 0.0, %v5032
      %v5034 = vpop.f32.mrf.mxu0
      %v5035 = vadd.f32 0.0, %v5034
      %5036 = vmatmul.bf16.gmra.mxu0 %v4977
      %v5037 = vpop.f32.mrf.mxu0
      %v5038 = vadd.f32 0.0, %v5037
      %v5039 = vpop.f32.mrf.mxu0
      %v5040 = vadd.f32 0.0, %v5039
      %5041 = vmatmul.bf16.gmra.mxu0 %v4980
      %v5042 = vpop.f32.mrf.mxu0
      %v5043 = vadd.f32 0.0, %v5042
      %v5044 = vpop.f32.mrf.mxu0
      %v5045 = vadd.f32 0.0, %v5044
      %5046 = vmatmul.bf16.gmra.mxu0 %v4983
      %v5047 = vpop.f32.mrf.mxu0
      %v5048 = vadd.f32 0.0, %v5047
      %v5049 = vpop.f32.mrf.mxu0
      %5050 = vdwg.mxu0
      %5051 = vmatpush.bf16.msra.mxu0 0
      %5052 = vmatpush.bf16.msra.mxu0 0
      %5053 = vmatpush.bf16.msra.mxu0 0
      %5054 = vmatpush.bf16.msra.mxu0 0
      %5055 = vmatpush.bf16.msra.mxu0 0
      %5056 = vmatpush.bf16.msra.mxu0 %v4945
      %5057 = vmatpush.bf16.msra.mxu0 %v4941
      %5058 = vmatpush.bf16.msra.mxu0 %v4937
      %5059 = vmatmul.bf16.gmra.mxu0 %v4971
      %v5060 = vpop.f32.mrf.mxu0
      %v5061 = vadd.f32 0.0, %v5060
      %v5062 = vpop.f32.mrf.mxu0
      %v5063 = vadd.f32 0.0, %v5062
      %5064 = vmatmul.bf16.gmra.mxu0 %v4974
      %v5065 = vpop.f32.mrf.mxu0
      %v5066 = vadd.f32 0.0, %v5065
      %v5067 = vpop.f32.mrf.mxu0
      %v5068 = vadd.f32 0.0, %v5067
      %5069 = vmatmul.bf16.gmra.mxu0 %v4977
      %v5070 = vpop.f32.mrf.mxu0
      %v5071 = vadd.f32 0.0, %v5070
      %v5072 = vpop.f32.mrf.mxu0
      %v5073 = vadd.f32 0.0, %v5072
      %5074 = vmatmul.bf16.gmra.mxu0 %v4980
      %v5075 = vpop.f32.mrf.mxu0
      %v5076 = vadd.f32 0.0, %v5075
      %v5077 = vpop.f32.mrf.mxu0
      %v5078 = vadd.f32 0.0, %v5077
      %5079 = vmatmul.bf16.gmra.mxu0 %v4983
      %v5080 = vpop.f32.mrf.mxu0
      %v5081 = vadd.f32 0.0, %v5080
      %v5082 = vpop.f32.mrf.mxu0
      %5083 = vdwg.mxu0
      %5084 = vmatpush.bf16.msra.mxu0 0
      %5085 = vmatpush.bf16.msra.mxu0 0
      %5086 = vmatpush.bf16.msra.mxu0 0
      %5087 = vmatpush.bf16.msra.mxu0 0
      %5088 = vmatpush.bf16.msra.mxu0 0
      %5089 = vmatpush.bf16.msra.mxu0 %v4946
      %5090 = vmatpush.bf16.msra.mxu0 %v4942
      %5091 = vmatpush.bf16.msra.mxu0 %v4938
      %5092 = vmatmul.bf16.gmra.mxu0 %v4971
      %v5093 = vpop.f32.mrf.mxu0
      %v5094 = vadd.f32 0.0, %v5093
      %v5095 = vpop.f32.mrf.mxu0
      %v5096 = vadd.f32 0.0, %v5095
      %5097 = vmatmul.bf16.gmra.mxu0 %v4974
      %v5098 = vpop.f32.mrf.mxu0
      %v5099 = vadd.f32 0.0, %v5098
      %v5100 = vpop.f32.mrf.mxu0
      %v5101 = vadd.f32 0.0, %v5100
      %5102 = vmatmul.bf16.gmra.mxu0 %v4977
      %v5103 = vpop.f32.mrf.mxu0
      %v5104 = vadd.f32 0.0, %v5103
      %v5105 = vpop.f32.mrf.mxu0
      %v5106 = vadd.f32 0.0, %v5105
      %5107 = vmatmul.bf16.gmra.mxu0 %v4980
      %v5108 = vpop.f32.mrf.mxu0
      %v5109 = vadd.f32 0.0, %v5108
      %v5110 = vpop.f32.mrf.mxu0
      %v5111 = vadd.f32 0.0, %v5110
      %5112 = vmatmul.bf16.gmra.mxu0 %v4983
      %v5113 = vpop.f32.mrf.mxu0
      %v5114 = vadd.f32 0.0, %v5113
      %v5115 = vpop.f32.mrf.mxu0
      %5116 = vdwg.mxu0
      %5117 = vrot.lane.b32.xlu0 %v4995, 1
      %v5118 = vpop.permute.xlu0 %5117
      %5119 = vrot.lane.b32.xlu0 %v4997, 1
      %v5120 = vpop.permute.xlu0 %5119
      %5121 = vrot.lane.b32.xlu0 %v5000, 1
      %v5122 = vpop.permute.xlu0 %5121
      %5123 = vrot.lane.b32.xlu0 %v5028, 1
      %v5124 = vpop.permute.xlu0 %5123
      %5125 = vrot.lane.b32.xlu0 %v5030, 1
      %v5126 = vpop.permute.xlu0 %5125
      %5127 = vrot.lane.b32.xlu0 %v5033, 1
      %v5128 = vpop.permute.xlu0 %5127
      %5129 = vrot.lane.b32.xlu0 %v5061, 1
      %v5130 = vpop.permute.xlu0 %5129
      %5131 = vrot.lane.b32.xlu0 %v5063, 1
      %v5132 = vpop.permute.xlu0 %5131
      %5133 = vrot.lane.b32.xlu0 %v5066, 1
      %v5134 = vpop.permute.xlu0 %5133
      %5135 = vrot.lane.b32.xlu0 %v5094, 1
      %v5136 = vpop.permute.xlu0 %5135
      %5137 = vrot.lane.b32.xlu0 %v5096, 1
      %v5138 = vpop.permute.xlu0 %5137
      %5139 = vrot.lane.b32.xlu0 %v5099, 1
      %v5140 = vpop.permute.xlu0 %5139
      %v5141 = vsel %vm2757, %v5130, %v5136
      %v5142 = vsel %vm2757, %v5132, %v5138
      %v5143 = vsel %vm2757, %v5134, %v5140
      %v5144 = vsel %vm2757, %v5124, %v5130
      %v5145 = vsel %vm2757, %v5126, %v5132
      %v5146 = vsel %vm2757, %v5128, %v5134
      %v5147 = vsel %vm2757, %v5118, %v5124
      %v5148 = vsel %vm2757, %v5120, %v5126
      %v5149 = vsel %vm2757, %v5122, %v5128
      %v5150 = vsel %vm2757, %v5136, %v5118
      %v5151 = vsel %vm2757, %v5138, %v5120
      %v5152 = vsel %vm2757, %v5140, %v5122
      %v5153 = vld [vmem:[%s4] ss:$4 sm:$0xf]
      %v5155 = vperm.slane %v5153, 0
      %v5156 = vperm.slane %v5153, 1
      %v5157 = vperm.slane %v5153, 2
      %v5158 = vperm.slane %v5153, 3
      %v5163 = vmul.f32 %v5150, %v5155
      %v5164 = vmul.f32 %v5147, %v5156
      %v5165 = vmul.f32 %v5144, %v5157
      %v5166 = vmul.f32 %v5141, %v5158
      %v5167 = vmul.f32 %v5151, %v5155
      %v5168 = vmul.f32 %v5148, %v5156
      %v5169 = vmul.f32 %v5145, %v5157
      %v5170 = vmul.f32 %v5142, %v5158
      %v5171 = vmul.f32 %v5152, %v5155
      %v5172 = vmul.f32 %v5149, %v5156
      %v5173 = vmul.f32 %v5146, %v5157
      %v5174 = vmul.f32 %v5143, %v5158
      %5175 = vrot.lane.b32.xlu0 %v5010, 127
      %v5176 = vpop.permute.xlu0 %5175
      %5177 = vrot.lane.b32.xlu0 %v5012, 127
      %v5178 = vpop.permute.xlu0 %5177
      %5179 = vrot.lane.b32.xlu0 %v5015, 127
      %v5180 = vpop.permute.xlu0 %5179
      %5181 = vrot.lane.b32.xlu0 %v5043, 127
      %v5182 = vpop.permute.xlu0 %5181
      %5183 = vrot.lane.b32.xlu0 %v5045, 127
      %v5184 = vpop.permute.xlu0 %5183
      %5185 = vrot.lane.b32.xlu0 %v5048, 127
      %v5186 = vpop.permute.xlu0 %5185
      %5187 = vrot.lane.b32.xlu0 %v5076, 127
      %v5188 = vpop.permute.xlu0 %5187
      %5189 = vrot.lane.b32.xlu0 %v5078, 127
      %v5190 = vpop.permute.xlu0 %5189
      %5191 = vrot.lane.b32.xlu0 %v5081, 127
      %v5192 = vpop.permute.xlu0 %5191
      %5193 = vrot.lane.b32.xlu0 %v5109, 127
      %v5194 = vpop.permute.xlu0 %5193
      %5195 = vrot.lane.b32.xlu0 %v5111, 127
      %v5196 = vpop.permute.xlu0 %5195
      %5197 = vrot.lane.b32.xlu0 %v5114, 127
      %v5198 = vpop.permute.xlu0 %5197
      %v5199 = vsel %vm2841, %v5188, %v5194
      %v5200 = vsel %vm2841, %v5190, %v5196
      %v5201 = vsel %vm2841, %v5192, %v5198
      %v5202 = vsel %vm2841, %v5182, %v5188
      %v5203 = vsel %vm2841, %v5184, %v5190
      %v5204 = vsel %vm2841, %v5186, %v5192
      %v5205 = vsel %vm2841, %v5176, %v5182
      %v5206 = vsel %vm2841, %v5178, %v5184
      %v5207 = vsel %vm2841, %v5180, %v5186
      %v5208 = vsel %vm2841, %v5194, %v5176
      %v5209 = vsel %vm2841, %v5196, %v5178
      %v5210 = vsel %vm2841, %v5198, %v5180
      %s5211 = scalar_lea.vmem %s4, 2
      %v5212 = vld [vmem:[%s5211] ss:$4 sm:$0xf]
      %v5214 = vperm.slane %v5212, 0
      %v5215 = vperm.slane %v5212, 1
      %v5216 = vperm.slane %v5212, 2
      %v5217 = vperm.slane %v5212, 3
      %v5222 = vmul.f32 %v5205, %v5214
      %v5223 = vmul.f32 %v5202, %v5215
      %v5224 = vmul.f32 %v5199, %v5216
      %v5225 = vmul.f32 %v5208, %v5217
      %v5226 = vmul.f32 %v5206, %v5214
      %v5227 = vmul.f32 %v5203, %v5215
      %v5228 = vmul.f32 %v5200, %v5216
      %v5229 = vmul.f32 %v5209, %v5217
      %v5230 = vmul.f32 %v5207, %v5214
      %v5231 = vmul.f32 %v5204, %v5215
      %v5232 = vmul.f32 %v5201, %v5216
      %v5233 = vmul.f32 %v5210, %v5217
      %v5234 = vadd.f32 %v5163, %v5002
      %v5235 = vadd.f32 %v5164, %v5035
      %v5236 = vadd.f32 %v5165, %v5068
      %v5237 = vadd.f32 %v5166, %v5101
      %v5238 = vadd.f32 %v5167, %v5005
      %v5239 = vadd.f32 %v5168, %v5038
      %v5240 = vadd.f32 %v5169, %v5071
      %v5241 = vadd.f32 %v5170, %v5104
      %v5242 = vadd.f32 %v5171, %v5007
      %v5243 = vadd.f32 %v5172, %v5040
      %v5244 = vadd.f32 %v5173, %v5073
      %v5245 = vadd.f32 %v5174, %v5106
      %v5246 = vadd.f32 %v5234, %v5222
      %v5247 = vadd.f32 %v5235, %v5223
      %v5248 = vadd.f32 %v5236, %v5224
      %v5249 = vadd.f32 %v5237, %v5225
      %v5250 = vadd.f32 %v5238, %v5226
      %v5251 = vadd.f32 %v5239, %v5227
      %v5252 = vadd.f32 %v5240, %v5228
      %v5253 = vadd.f32 %v5241, %v5229
      %v5254 = vadd.f32 %v5242, %v5230
      %v5255 = vadd.f32 %v5243, %v5231
      %v5256 = vadd.f32 %v5244, %v5232
      %v5257 = vadd.f32 %v5245, %v5233
      %v5258 = vld [vmem:[%s533] sm:$0xff]
      %v5259 = vld [vmem:[%s533 + $0x8] sm:$0xff]
      %v5260 = vld [vmem:[%s533 + $0x10] sm:$0xff]
      %5262 = vset.pattern.permute.xlu0 0
      %5263 = vperm.xlu0 %5262, %v5258
      %v5264 = vpop.permute.xlu0 %5263
      %5267 = vset.pattern.permute.xlu0 0
      %5268 = vperm.xlu0 %5267, %v5259
      %v5269 = vpop.permute.xlu0 %5268
      %5272 = vset.pattern.permute.xlu0 0
      %5273 = vperm.xlu0 %5272, %v5260
      %v5274 = vpop.permute.xlu0 %5273
      %v5276 = vadd.f32 %v5246, %v5264
      %v5277 = vadd.f32 %v5247, %v5264
      %v5278 = vadd.f32 %v5248, %v5264
      %v5279 = vadd.f32 %v5249, %v5264
      %v5280 = vadd.f32 %v5250, %v5269
      %v5281 = vadd.f32 %v5251, %v5269
      %v5282 = vadd.f32 %v5252, %v5269
      %v5283 = vadd.f32 %v5253, %v5269
      %v5284 = vadd.f32 %v5254, %v5274
      %v5285 = vadd.f32 %v5255, %v5274
      %v5286 = vadd.f32 %v5256, %v5274
      %v5287 = vadd.f32 %v5257, %v5274
      %5288 = vst [vmem:[%s538] sm:$0xff] %v5276
      %5289 = vst [vmem:[%s538 + $0x8] sm:$0xff] %v5277
      %5290 = vst [vmem:[%s538 + $0x10] sm:$0xff] %v5278
      %5291 = vst [vmem:[%s538 + $0x18] sm:$0xff] %v5279
      %5292 = vst [vmem:[%s538 + $0x20] sm:$0xff] %v5280
      %5293 = vst [vmem:[%s538 + $0x28] sm:$0xff] %v5281
      %5294 = vst [vmem:[%s538 + $0x30] sm:$0xff] %v5282
      %5295 = vst [vmem:[%s538 + $0x38] sm:$0xff] %v5283
      %5296 = vst [vmem:[%s538 + $0x40] sm:$0xff] %v5284
      %5297 = vst [vmem:[%s538 + $0x48] sm:$0xff] %v5285
      %5298 = vst [vmem:[%s538 + $0x50] sm:$0xff] %v5286
      %5299 = vst [vmem:[%s538 + $0x58] sm:$0xff] %v5287
      %p5300 = scmp.lt.s32.totalorder %s26, 1
      %s5301 = scalar_select %p5300, %s26, 1
      %s5302 = smul.addr %s5301, 12
      %s5303 = smul.addr %s5302, 8
      %s5304 = scalar_lea.vmem %s11, %s5303
      // Predicated region
      $region73: #{cnn4d_forward_pallas.1} parent=63 // pred_check
        %p5305 = pneg %p323
      $region74: #{cnn4d_forward_pallas.1} parent=63 // pred_check_branch
        %5307 = sbr.rel (%p5305) target = $region76
      $region75: #{cnn4d_forward_pallas.1} parent=63 // pred_region
        _
      $region76: #{cnn4d_forward_pallas.1} parent=63 // pred_fallthru
        _
    $region64: #{cnn4d_forward_pallas.1} parent=5 // pred_fallthru
      _
    %p5308 = scmp.le.s32.totalorder 2, %s17
    // Predicated region
    $region77: #{cnn4d_forward_pallas.1} parent=5 // pred_check
      %p5309 = pneg %p5308
    $region78: #{cnn4d_forward_pallas.1} parent=5 // pred_check_branch
      %5311 = sbr.rel (%p5309) target = $region80
    $region79: #{cnn4d_forward_pallas.1} parent=5 // pred_region
      %s5312 = ssub.s32 %s17, 2
      // Predicated region
      $region81: #{cnn4d_forward_pallas.1} parent=79 // pred_check
        %p5313 = pneg %p329
      $region82: #{cnn4d_forward_pallas.1} parent=79 // pred_check_branch
        %5315 = sbr.rel (%p5313) target = $region84
      $region83: #{cnn4d_forward_pallas.1} parent=79 // pred_region
        %p5316 = scmp.lt.s32.totalorder %s28, 1
        %s5317 = scalar_select %p5316, %s28, 1
        %s5318 = smul.addr %s5317, 12
        %s5319 = smul.addr %s5318, 8
        %s5320 = scalar_lea.vmem %s11, %s5319
      $region84: #{cnn4d_forward_pallas.1} parent=79 // pred_fallthru
        _
    $region80: #{cnn4d_forward_pallas.1} parent=5 // pred_fallthru
      _
  $region6: #{cnn4d_forward_pallas.1} parent=0 // loop_footer
    %s21 = sadd.s32 1, %s17
  $region7: #{cnn4d_forward_pallas.1} parent=0 // loop_footer_branch
    %16 = sbr.rel target = $region3
  $region8: #{cnn4d_forward_pallas.1} parent=0 // loop_exit
    _

</llo_original>
